<compile_context>
chip_gen: v7x
topology: tpu7x:2x2x1
jax: 0.10.0
libtpu: 0.0.40
codegen_flags: <defaults>
</compile_context>

<pallas_src>
import jax
import jax.numpy as jnp
from jax.experimental import pallas as pl
from jax.experimental.pallas import tpu as pltpu


def _round_up(n, m):
    return ((n + m - 1) // m) * m


def _make_layout(in0, hidden, num_layers):
    """Row offsets of each parameter block inside the packed (rows, 128) buffer."""
    H = hidden
    assert 3 * H <= 128, "packed layout assumes 3*hidden <= 128 lanes"
    layout = {}
    r = 0
    for k in range(num_layers):
        in_k = in0 if k == 0 else H
        in_k_pad = _round_up(in_k, 8)
        layout[f"w_ih{k}"] = r
        r += in_k_pad
        layout[f"w_hh{k}"] = r
        r += _round_up(H, 8)
        layout[f"b{k}"] = r          # row r: folded gi bias (3H); row r+1: b_hn (H)
        r += 8
    layout["fc1_w"] = r
    r += _round_up(H, 8)
    layout["head_b"] = r             # rows: fc1_b, ln_g, ln_b  (64 cols each)
    r += 8
    layout["fc2_w"] = r
    r += 64
    layout["fc2_b"] = r
    r += 8
    layout["_rows"] = _round_up(r, 8)
    return layout


def _make_kernel(S, B, L, H, O, in0, layout):
    in0_pad = _round_up(in0, 8)
    G = 3 * H
    f32 = jnp.float32

    def kernel(noise_ref, cond_ref, p_ref, out_ref, hs_ref):
        # ---- build layer-0 input (batch-major rows b*S + t), zero-padded cols ----
        parts = [noise_ref[...], cond_ref[...]]
        pad = in0_pad - in0
        if pad:
            parts.append(jnp.zeros((B, S, pad), f32))
        x = jnp.concatenate(parts, axis=-1)              # (B, S, in0_pad)
        x_flat = x.reshape(B * S, in0_pad)               # tile-aligned merge, no relayout

        cur = None                                       # time-major (S*B, H) after each layer
        for k in range(L):
            r_ih = layout[f"w_ih{k}"]
            r_hh = layout[f"w_hh{k}"]
            r_b = layout[f"b{k}"]
            n_ih = in0_pad if k == 0 else H
            w_ih = p_ref[r_ih:r_ih + n_ih, 0:G]          # (in_pad, 3H)
            w_hh = p_ref[r_hh:r_hh + H, 0:G]             # (H, 3H)
            b_gi = p_ref[r_b:r_b + 1, 0:G]               # (1, 3H)  = [b_ir+b_hr, b_iz+b_hz, b_in]
            b_hn = p_ref[r_b + 1:r_b + 2, 0:H]           # (1, H)

            # Hoisted input projection for ALL timesteps (off the serial chain).
            if k == 0:
                gi = jnp.dot(x_flat, w_ih, preferred_element_type=f32) + b_gi   # batch-major
            else:
                gi = jnp.dot(cur, w_ih, preferred_element_type=f32) + b_gi      # time-major

            h = None
            for t in range(S):                           # static unroll; only h @ w_hh is serial
                if k == 0:
                    gi_t = jnp.concatenate(
                        [gi[b * S + t:b * S + t + 1, :] for b in range(B)], axis=0)  # (B, 3H)
                else:
                    gi_t = gi[t * B:(t + 1) * B, :]                                   # (B, 3H)

                if t == 0:
                    # h0 == 0 -> skip the hidden matmul entirely.
                    r_g = jax.nn.sigmoid(gi_t[:, :H])
                    z_g = jax.nn.sigmoid(gi_t[:, H:2 * H])
                    n_g = jnp.tanh(gi_t[:, 2 * H:] + r_g * b_hn)
                    h = (1.0 - z_g) * n_g
                else:
                    gh = jnp.dot(h, w_hh, preferred_element_type=f32)                 # (B, 3H)
                    r_g = jax.nn.sigmoid(gi_t[:, :H] + gh[:, :H])
                    z_g = jax.nn.sigmoid(gi_t[:, H:2 * H] + gh[:, H:2 * H])
                    n_g = jnp.tanh(gi_t[:, 2 * H:] + r_g * (gh[:, 2 * H:] + b_hn))
                    h = (1.0 - z_g) * n_g + z_g * h
                hs_ref[t * B:(t + 1) * B, :] = h          # time-major scratch (off chain)
            cur = hs_ref[...]                             # (S*B, H) for next layer / head

        # ---- head: fc1 -> LayerNorm -> relu -> fc2 -> tanh, batched over S*B rows ----
        r_f1 = layout["fc1_w"]
        r_hb = layout["head_b"]
        r_f2 = layout["fc2_w"]
        r_f2b = layout["fc2_b"]
        fc1_w = p_ref[r_f1:r_f1 + H, 0:64]
        fc1_b = p_ref[r_hb:r_hb + 1, 0:64]
        ln_g = p_ref[r_hb + 1:r_hb + 2, 0:64]
        ln_b = p_ref[r_hb + 2:r_hb + 3, 0:64]
        fc2_w = p_ref[r_f2:r_f2 + 64, 0:O]
        fc2_b = p_ref[r_f2b:r_f2b + 1, 0:O]

        y = jnp.dot(cur, fc1_w, preferred_element_type=f32) + fc1_b               # (S*B, 64)
        mu = jnp.mean(y, axis=-1, keepdims=True)
        var = jnp.mean((y - mu) ** 2, axis=-1, keepdims=True)
        y = (y - mu) * jax.lax.rsqrt(var + 1e-5)
        y = y * ln_g + ln_b
        y = jnp.maximum(y, 0.0)
        y = jnp.tanh(jnp.dot(y, fc2_w, preferred_element_type=f32) + fc2_b)       # (S*B, O)

        # time-major rows (t, b) -> (B, S, O) output, no wrapper post-processing.
        # TODO(synk): output_size=3 -> narrow masked stores; pad to 128 lanes if O grows.
        for b in range(B):
            rows = jnp.concatenate(
                [y[t * B + b:t * B + b + 1, :] for t in range(S)], axis=0)         # (S, O)
            out_ref[b] = rows

    return kernel


def generator_forward(noise, condition, packed, num_layers, hidden_size, output_size):
    B, S, nz = noise.shape
    in0 = nz + 1
    layout = _make_layout(in0, hidden_size, num_layers)
    kernel = _make_kernel(S, B, num_layers, hidden_size, output_size, in0, layout)

    def full_spec(shape):
        nd = len(shape)
        return pl.BlockSpec(shape, lambda i, _nd=nd: (0,) * _nd)

    return pl.pallas_call(
        kernel,
        out_shape=jax.ShapeDtypeStruct((B, S, output_size), jnp.float32),
        grid_spec=pltpu.PrefetchScalarGridSpec(
            num_scalar_prefetch=0,
            grid=(1,),
            in_specs=[full_spec(noise.shape),
                      full_spec(condition.shape),
                      full_spec(packed.shape)],
            out_specs=full_spec((B, S, output_size)),
            scratch_shapes=[pltpu.VMEM((S * B, hidden_size), jnp.float32)],
        ),
        compiler_params=pltpu.CompilerParams(
            dimension_semantics=("arbitrary",),
        ),
    )(noise.astype(jnp.float32), condition.astype(jnp.float32), packed)


def init_params(key, noise_size, hidden_size, output_size, num_layers):
    """Torch-like init; also builds the packed (rows, 128) parameter buffer once."""
    H = hidden_size
    assert output_size <= 128
    scale = 1.0 / jnp.sqrt(jnp.float32(H))
    keys = iter(jax.random.split(key, 8 * num_layers + 12))

    def u(shape):
        return jax.random.uniform(next(keys), shape, jnp.float32, -scale, scale)

    gru = []
    for k in range(num_layers):
        in_k = (noise_size + 1) if k == 0 else H
        # stored pre-transposed: (in_features, 3H); biases (1, 3H); gate order r,z,n
        gru.append((u((in_k, 3 * H)), u((H, 3 * H)), u((1, 3 * H)), u((1, 3 * H))))

    params = {
        "gru": gru,
        "fc1_w": u((H, 64)),
        "fc1_b": u((1, 64)),
        "ln_g": jnp.ones((1, 64), jnp.float32),
        "ln_b": jnp.zeros((1, 64), jnp.float32),
        "fc2_w": u((64, output_size)),
        "fc2_b": u((1, output_size)),
    }

    # ---- pack everything into one buffer (done once, not per forward call) ----
    in0 = noise_size + 1
    layout = _make_layout(in0, H, num_layers)
    P = jnp.zeros((layout["_rows"], 128), jnp.float32)
    for k in range(num_layers):
        w_ih, w_hh, b_ih, b_hh = gru[k]
        in_k = w_ih.shape[0]
        P = P.at[layout[f"w_ih{k}"]:layout[f"w_ih{k}"] + in_k, 0:3 * H].set(w_ih)
        P = P.at[layout[f"w_hh{k}"]:layout[f"w_hh{k}"] + H, 0:3 * H].set(w_hh)
        # Fold biases: r/z gates get combined input+hidden bias; n gate keeps
        # b_in (folded into gi) and b_hn (applied inside r * (gh_n + b_hn)).
        b_gi = jnp.concatenate([b_ih[:, :2 * H] + b_hh[:, :2 * H], b_ih[:, 2 * H:]], axis=1)
        r_b = layout[f"b{k}"]
        P = P.at[r_b:r_b + 1, 0:3 * H].set(b_gi)
        P = P.at[r_b + 1:r_b + 2, 0:H].set(b_hh[:, 2 * H:])
    P = P.at[layout["fc1_w"]:layout["fc1_w"] + H, 0:64].set(params["fc1_w"])
    r_hb = layout["head_b"]
    P = P.at[r_hb:r_hb + 1, 0:64].set(params["fc1_b"])
    P = P.at[r_hb + 1:r_hb + 2, 0:64].set(params["ln_g"])
    P = P.at[r_hb + 2:r_hb + 3, 0:64].set(params["ln_b"])
    P = P.at[layout["fc2_w"]:layout["fc2_w"] + 64, 0:output_size].set(params["fc2_w"])
    P = P.at[layout["fc2_b"]:layout["fc2_b"] + 1, 0:output_size].set(params["fc2_b"])
    params["packed"] = P
    return params


def reference_forward(noise, condition, params, num_layers, hidden_size):
    """Pure-JAX reference matching torch GRU/Linear/LayerNorm semantics (eval mode)."""
    H = hidden_size
    x = jnp.concatenate([noise, condition], axis=-1)
    B, S, _ = x.shape
    h = [jnp.zeros((B, H), jnp.float32) for _ in range(num_layers)]
    outs = []
    for t in range(S):
        inp = x[:, t, :]
        for k in range(num_layers):
            w_ih, w_hh, b_ih, b_hh = params["gru"][k]
            gi = inp @ w_ih + b_ih
            gh = h[k] @ w_hh + b_hh
            r = jax.nn.sigmoid(gi[:, :H] + gh[:, :H])
            z = jax.nn.sigmoid(gi[:, H:2 * H] + gh[:, H:2 * H])
            n = jnp.tanh(gi[:, 2 * H:] + r * gh[:, 2 * H:])
            h[k] = (1.0 - z) * n + z * h[k]
            inp = h[k]
        y = inp @ params["fc1_w"] + params["fc1_b"]
        mu = y.mean(-1, keepdims=True)
        var = ((y - mu) ** 2).mean(-1, keepdims=True)
        y = (y - mu) / jnp.sqrt(var + 1e-5) * params["ln_g"] + params["ln_b"]
        y = jnp.maximum(y, 0.0)
        y = jnp.tanh(y @ params["fc2_w"] + params["fc2_b"])
        outs.append(y)
    return jnp.stack(outs, axis=1)


if __name__ == "__main__":
    noise_size, hidden_size, output_size, num_layers = 4, 32, 3, 2
    batch, seq_len = 2, 8

    key = jax.random.PRNGKey(0)
    k_noise, k_cond, k_par = jax.random.split(key, 3)
    noise = jax.random.normal(k_noise, (batch, seq_len, noise_size), jnp.float32)
    condition = jax.random.normal(k_cond, (batch, seq_len, 1), jnp.float32)

    params = init_params(k_par, noise_size, hidden_size, output_size, num_layers)

    out = generator_forward(noise, condition, params["packed"],
                            num_layers, hidden_size, output_size)
    out = jax.block_until_ready(out)

    ref = reference_forward(noise, condition, params, num_layers, hidden_size)
    assert out.shape == (batch, seq_len, output_size)
    assert jnp.allclose(out, ref, atol=1e-4, rtol=1e-4), "mismatch vs pure-JAX reference"

    print("KERNEL_OK")
</pallas_src>

<mosaic_0001>
module attributes {stable_mosaic.version = 11 : i64} {
  func.func @kernel(%arg0: i32, %arg1: memref<2x8x4xf32, #tpu.memory_space<vmem>>, %arg2: memref<2x8x1xf32, #tpu.memory_space<vmem>>, %arg3: memref<232x128xf32, #tpu.memory_space<vmem>>, %arg4: memref<2x8x3xf32, #tpu.memory_space<vmem>>, %arg5: memref<16x32xf32, #tpu.memory_space<vmem>>) attributes {dimension_semantics = [#tpu.dimension_semantics<arbitrary>], iteration_bounds = array<i64: 1>, scalar_prefetch = 0 : i64, scratch_operands = 1 : i64, tpu.core_type = #tpu.core_type<tc>, window_params = [{pipeline_mode = #tpu.pipeline_mode<synchronous>, transform_indices = @transform_0, window_bounds = array<i64: 2, 8, 4>}, {pipeline_mode = #tpu.pipeline_mode<synchronous>, transform_indices = @transform_1, window_bounds = array<i64: 2, 8, 1>}, {pipeline_mode = #tpu.pipeline_mode<synchronous>, transform_indices = @transform_2, window_bounds = array<i64: 232, 128>}, {pipeline_mode = #tpu.pipeline_mode<synchronous>, transform_indices = @transform_3, window_bounds = array<i64: 2, 8, 3>}]} {
    %c0 = arith.constant 0 : index
    %c0_0 = arith.constant 0 : index
    %c0_1 = arith.constant 0 : index
    %0 = vector.load %arg1[%c0, %c0_0, %c0_1] : memref<2x8x4xf32, #tpu.memory_space<vmem>>, vector<2x8x4xf32>
    %c0_2 = arith.constant 0 : index
    %c0_3 = arith.constant 0 : index
    %c0_4 = arith.constant 0 : index
    %1 = vector.load %arg2[%c0_2, %c0_3, %c0_4] : memref<2x8x1xf32, #tpu.memory_space<vmem>>, vector<2x8x1xf32>
    %cst = arith.constant 0.000000e+00 : f32
    %2 = vector.broadcast %cst : f32 to vector<2x8x3xf32>
    %3 = tpu.concatenate %0, %1, %2 in 2 : vector<2x8x4xf32>, vector<2x8x1xf32>, vector<2x8x3xf32> -> vector<2x8x8xf32>
    %4 = vector.shape_cast %3 : vector<2x8x8xf32> to vector<16x8xf32>
    %c0_5 = arith.constant 0 : index
    %c0_6 = arith.constant 0 : index
    %5 = vector.load %arg3[%c0_5, %c0_6] : memref<232x128xf32, #tpu.memory_space<vmem>>, vector<8x96xf32>
    %c8 = arith.constant 8 : index
    %c0_7 = arith.constant 0 : index
    %6 = vector.load %arg3[%c8, %c0_7] : memref<232x128xf32, #tpu.memory_space<vmem>>, vector<32x96xf32>
    %c40 = arith.constant 40 : index
    %c0_8 = arith.constant 0 : index
    %7 = vector.load %arg3[%c40, %c0_8] : memref<232x128xf32, #tpu.memory_space<vmem>>, vector<1x96xf32>
    %c41 = arith.constant 41 : index
    %c0_9 = arith.constant 0 : index
    %8 = vector.load %arg3[%c41, %c0_9] : memref<232x128xf32, #tpu.memory_space<vmem>>, vector<1x32xf32>
    %cst_10 = arith.constant dense<0.000000e+00> : vector<16x96xf32>
    %9 = tpu.matmul %4, %5, %cst_10 {dimension_numbers = #tpu.dot_dimension_numbers<[1], [0], [0], [1], [0, 0, 1, 1], [], []>} : vector<16x8xf32>, vector<8x96xf32>, vector<16x96xf32> -> vector<16x96xf32>
    %10 = vector.broadcast %7 : vector<1x96xf32> to vector<16x96xf32>
    %11 = arith.addf %9, %10 : vector<16x96xf32>
    %12 = vector.extract_strided_slice %11 {offsets = [0, 0], sizes = [1, 96], strides = [1, 1]} : vector<16x96xf32> to vector<1x96xf32>
    %13 = vector.extract_strided_slice %11 {offsets = [8, 0], sizes = [1, 96], strides = [1, 1]} : vector<16x96xf32> to vector<1x96xf32>
    %14 = tpu.concatenate %12, %13 in 0 : vector<1x96xf32>, vector<1x96xf32> -> vector<2x96xf32>
    %15 = vector.extract_strided_slice %14 {offsets = [0, 0], sizes = [2, 32], strides = [1, 1]} : vector<2x96xf32> to vector<2x32xf32>
    %16 = arith.negf %15 : vector<2x32xf32>
    %17 = math.exp %16 : vector<2x32xf32>
    %cst_11 = arith.constant 1.000000e+00 : f32
    %18 = vector.broadcast %cst_11 : f32 to vector<2x32xf32>
    %19 = arith.addf %18, %17 : vector<2x32xf32>
    %20 = arith.divf %18, %19 : vector<2x32xf32>
    %21 = vector.extract_strided_slice %14 {offsets = [0, 32], sizes = [2, 32], strides = [1, 1]} : vector<2x96xf32> to vector<2x32xf32>
    %22 = arith.negf %21 : vector<2x32xf32>
    %23 = math.exp %22 : vector<2x32xf32>
    %cst_12 = arith.constant 1.000000e+00 : f32
    %24 = vector.broadcast %cst_12 : f32 to vector<2x32xf32>
    %25 = arith.addf %24, %23 : vector<2x32xf32>
    %26 = arith.divf %24, %25 : vector<2x32xf32>
    %27 = vector.extract_strided_slice %14 {offsets = [0, 64], sizes = [2, 32], strides = [1, 1]} : vector<2x96xf32> to vector<2x32xf32>
    %28 = vector.broadcast %8 : vector<1x32xf32> to vector<2x32xf32>
    %29 = arith.mulf %20, %28 : vector<2x32xf32>
    %30 = arith.addf %27, %29 : vector<2x32xf32>
    %31 = math.tanh %30 : vector<2x32xf32>
    %cst_13 = arith.constant 1.000000e+00 : f32
    %32 = vector.broadcast %cst_13 : f32 to vector<2x32xf32>
    %33 = arith.subf %32, %26 : vector<2x32xf32>
    %34 = arith.mulf %33, %31 : vector<2x32xf32>
    %c0_14 = arith.constant 0 : index
    %c0_15 = arith.constant 0 : index
    %35 = vector.load %arg5[%c0_14, %c0_15] : memref<16x32xf32, #tpu.memory_space<vmem>>, vector<2x32xf32>
    tpu.vector_store %arg5[%c0_14, %c0_15], %34 {strides = array<i32>} : memref<16x32xf32, #tpu.memory_space<vmem>>, vector<2x32xf32>,
    %36 = vector.extract_strided_slice %11 {offsets = [1, 0], sizes = [1, 96], strides = [1, 1]} : vector<16x96xf32> to vector<1x96xf32>
    %37 = vector.extract_strided_slice %11 {offsets = [9, 0], sizes = [1, 96], strides = [1, 1]} : vector<16x96xf32> to vector<1x96xf32>
    %38 = tpu.concatenate %36, %37 in 0 : vector<1x96xf32>, vector<1x96xf32> -> vector<2x96xf32>
    %cst_16 = arith.constant dense<0.000000e+00> : vector<2x96xf32>
    %39 = tpu.matmul %34, %6, %cst_16 {dimension_numbers = #tpu.dot_dimension_numbers<[1], [0], [0], [1], [0, 0, 1, 1], [], []>} : vector<2x32xf32>, vector<32x96xf32>, vector<2x96xf32> -> vector<2x96xf32>
    %40 = vector.extract_strided_slice %38 {offsets = [0, 0], sizes = [2, 32], strides = [1, 1]} : vector<2x96xf32> to vector<2x32xf32>
    %41 = vector.extract_strided_slice %39 {offsets = [0, 0], sizes = [2, 32], strides = [1, 1]} : vector<2x96xf32> to vector<2x32xf32>
    %42 = arith.addf %40, %41 : vector<2x32xf32>
    %43 = arith.negf %42 : vector<2x32xf32>
    %44 = math.exp %43 : vector<2x32xf32>
    %cst_17 = arith.constant 1.000000e+00 : f32
    %45 = vector.broadcast %cst_17 : f32 to vector<2x32xf32>
    %46 = arith.addf %45, %44 : vector<2x32xf32>
    %47 = arith.divf %45, %46 : vector<2x32xf32>
    %48 = vector.extract_strided_slice %38 {offsets = [0, 32], sizes = [2, 32], strides = [1, 1]} : vector<2x96xf32> to vector<2x32xf32>
    %49 = vector.extract_strided_slice %39 {offsets = [0, 32], sizes = [2, 32], strides = [1, 1]} : vector<2x96xf32> to vector<2x32xf32>
    %50 = arith.addf %48, %49 : vector<2x32xf32>
    %51 = arith.negf %50 : vector<2x32xf32>
    %52 = math.exp %51 : vector<2x32xf32>
    %cst_18 = arith.constant 1.000000e+00 : f32
    %53 = vector.broadcast %cst_18 : f32 to vector<2x32xf32>
    %54 = arith.addf %53, %52 : vector<2x32xf32>
    %55 = arith.divf %53, %54 : vector<2x32xf32>
    %56 = vector.extract_strided_slice %38 {offsets = [0, 64], sizes = [2, 32], strides = [1, 1]} : vector<2x96xf32> to vector<2x32xf32>
    %57 = vector.extract_strided_slice %39 {offsets = [0, 64], sizes = [2, 32], strides = [1, 1]} : vector<2x96xf32> to vector<2x32xf32>
    %58 = vector.broadcast %8 : vector<1x32xf32> to vector<2x32xf32>
    %59 = arith.addf %57, %58 : vector<2x32xf32>
    %60 = arith.mulf %47, %59 : vector<2x32xf32>
    %61 = arith.addf %56, %60 : vector<2x32xf32>
    %62 = math.tanh %61 : vector<2x32xf32>
    %cst_19 = arith.constant 1.000000e+00 : f32
    %63 = vector.broadcast %cst_19 : f32 to vector<2x32xf32>
    %64 = arith.subf %63, %55 : vector<2x32xf32>
    %65 = arith.mulf %64, %62 : vector<2x32xf32>
    %66 = arith.mulf %55, %34 : vector<2x32xf32>
    %67 = arith.addf %65, %66 : vector<2x32xf32>
    %c2 = arith.constant 2 : index
    %c0_20 = arith.constant 0 : index
    %68 = vector.load %arg5[%c2, %c0_20] : memref<16x32xf32, #tpu.memory_space<vmem>>, vector<2x32xf32>
    tpu.vector_store %arg5[%c2, %c0_20], %67 {strides = array<i32>} : memref<16x32xf32, #tpu.memory_space<vmem>>, vector<2x32xf32>,
    %69 = vector.extract_strided_slice %11 {offsets = [2, 0], sizes = [1, 96], strides = [1, 1]} : vector<16x96xf32> to vector<1x96xf32>
    %70 = vector.extract_strided_slice %11 {offsets = [10, 0], sizes = [1, 96], strides = [1, 1]} : vector<16x96xf32> to vector<1x96xf32>
    %71 = tpu.concatenate %69, %70 in 0 : vector<1x96xf32>, vector<1x96xf32> -> vector<2x96xf32>
    %cst_21 = arith.constant dense<0.000000e+00> : vector<2x96xf32>
    %72 = tpu.matmul %67, %6, %cst_21 {dimension_numbers = #tpu.dot_dimension_numbers<[1], [0], [0], [1], [0, 0, 1, 1], [], []>} : vector<2x32xf32>, vector<32x96xf32>, vector<2x96xf32> -> vector<2x96xf32>
    %73 = vector.extract_strided_slice %71 {offsets = [0, 0], sizes = [2, 32], strides = [1, 1]} : vector<2x96xf32> to vector<2x32xf32>
    %74 = vector.extract_strided_slice %72 {offsets = [0, 0], sizes = [2, 32], strides = [1, 1]} : vector<2x96xf32> to vector<2x32xf32>
    %75 = arith.addf %73, %74 : vector<2x32xf32>
    %76 = arith.negf %75 : vector<2x32xf32>
    %77 = math.exp %76 : vector<2x32xf32>
    %cst_22 = arith.constant 1.000000e+00 : f32
    %78 = vector.broadcast %cst_22 : f32 to vector<2x32xf32>
    %79 = arith.addf %78, %77 : vector<2x32xf32>
    %80 = arith.divf %78, %79 : vector<2x32xf32>
    %81 = vector.extract_strided_slice %71 {offsets = [0, 32], sizes = [2, 32], strides = [1, 1]} : vector<2x96xf32> to vector<2x32xf32>
    %82 = vector.extract_strided_slice %72 {offsets = [0, 32], sizes = [2, 32], strides = [1, 1]} : vector<2x96xf32> to vector<2x32xf32>
    %83 = arith.addf %81, %82 : vector<2x32xf32>
    %84 = arith.negf %83 : vector<2x32xf32>
    %85 = math.exp %84 : vector<2x32xf32>
    %cst_23 = arith.constant 1.000000e+00 : f32
    %86 = vector.broadcast %cst_23 : f32 to vector<2x32xf32>
    %87 = arith.addf %86, %85 : vector<2x32xf32>
    %88 = arith.divf %86, %87 : vector<2x32xf32>
    %89 = vector.extract_strided_slice %71 {offsets = [0, 64], sizes = [2, 32], strides = [1, 1]} : vector<2x96xf32> to vector<2x32xf32>
    %90 = vector.extract_strided_slice %72 {offsets = [0, 64], sizes = [2, 32], strides = [1, 1]} : vector<2x96xf32> to vector<2x32xf32>
    %91 = vector.broadcast %8 : vector<1x32xf32> to vector<2x32xf32>
    %92 = arith.addf %90, %91 : vector<2x32xf32>
    %93 = arith.mulf %80, %92 : vector<2x32xf32>
    %94 = arith.addf %89, %93 : vector<2x32xf32>
    %95 = math.tanh %94 : vector<2x32xf32>
    %cst_24 = arith.constant 1.000000e+00 : f32
    %96 = vector.broadcast %cst_24 : f32 to vector<2x32xf32>
    %97 = arith.subf %96, %88 : vector<2x32xf32>
    %98 = arith.mulf %97, %95 : vector<2x32xf32>
    %99 = arith.mulf %88, %67 : vector<2x32xf32>
    %100 = arith.addf %98, %99 : vector<2x32xf32>
    %c4 = arith.constant 4 : index
    %c0_25 = arith.constant 0 : index
    %101 = vector.load %arg5[%c4, %c0_25] : memref<16x32xf32, #tpu.memory_space<vmem>>, vector<2x32xf32>
    tpu.vector_store %arg5[%c4, %c0_25], %100 {strides = array<i32>} : memref<16x32xf32, #tpu.memory_space<vmem>>, vector<2x32xf32>,
    %102 = vector.extract_strided_slice %11 {offsets = [3, 0], sizes = [1, 96], strides = [1, 1]} : vector<16x96xf32> to vector<1x96xf32>
    %103 = vector.extract_strided_slice %11 {offsets = [11, 0], sizes = [1, 96], strides = [1, 1]} : vector<16x96xf32> to vector<1x96xf32>
    %104 = tpu.concatenate %102, %103 in 0 : vector<1x96xf32>, vector<1x96xf32> -> vector<2x96xf32>
    %cst_26 = arith.constant dense<0.000000e+00> : vector<2x96xf32>
    %105 = tpu.matmul %100, %6, %cst_26 {dimension_numbers = #tpu.dot_dimension_numbers<[1], [0], [0], [1], [0, 0, 1, 1], [], []>} : vector<2x32xf32>, vector<32x96xf32>, vector<2x96xf32> -> vector<2x96xf32>
    %106 = vector.extract_strided_slice %104 {offsets = [0, 0], sizes = [2, 32], strides = [1, 1]} : vector<2x96xf32> to vector<2x32xf32>
    %107 = vector.extract_strided_slice %105 {offsets = [0, 0], sizes = [2, 32], strides = [1, 1]} : vector<2x96xf32> to vector<2x32xf32>
    %108 = arith.addf %106, %107 : vector<2x32xf32>
    %109 = arith.negf %108 : vector<2x32xf32>
    %110 = math.exp %109 : vector<2x32xf32>
    %cst_27 = arith.constant 1.000000e+00 : f32
    %111 = vector.broadcast %cst_27 : f32 to vector<2x32xf32>
    %112 = arith.addf %111, %110 : vector<2x32xf32>
    %113 = arith.divf %111, %112 : vector<2x32xf32>
    %114 = vector.extract_strided_slice %104 {offsets = [0, 32], sizes = [2, 32], strides = [1, 1]} : vector<2x96xf32> to vector<2x32xf32>
    %115 = vector.extract_strided_slice %105 {offsets = [0, 32], sizes = [2, 32], strides = [1, 1]} : vector<2x96xf32> to vector<2x32xf32>
    %116 = arith.addf %114, %115 : vector<2x32xf32>
    %117 = arith.negf %116 : vector<2x32xf32>
    %118 = math.exp %117 : vector<2x32xf32>
    %cst_28 = arith.constant 1.000000e+00 : f32
    %119 = vector.broadcast %cst_28 : f32 to vector<2x32xf32>
    %120 = arith.addf %119, %118 : vector<2x32xf32>
    %121 = arith.divf %119, %120 : vector<2x32xf32>
    %122 = vector.extract_strided_slice %104 {offsets = [0, 64], sizes = [2, 32], strides = [1, 1]} : vector<2x96xf32> to vector<2x32xf32>
    %123 = vector.extract_strided_slice %105 {offsets = [0, 64], sizes = [2, 32], strides = [1, 1]} : vector<2x96xf32> to vector<2x32xf32>
    %124 = vector.broadcast %8 : vector<1x32xf32> to vector<2x32xf32>
    %125 = arith.addf %123, %124 : vector<2x32xf32>
    %126 = arith.mulf %113, %125 : vector<2x32xf32>
    %127 = arith.addf %122, %126 : vector<2x32xf32>
    %128 = math.tanh %127 : vector<2x32xf32>
    %cst_29 = arith.constant 1.000000e+00 : f32
    %129 = vector.broadcast %cst_29 : f32 to vector<2x32xf32>
    %130 = arith.subf %129, %121 : vector<2x32xf32>
    %131 = arith.mulf %130, %128 : vector<2x32xf32>
    %132 = arith.mulf %121, %100 : vector<2x32xf32>
    %133 = arith.addf %131, %132 : vector<2x32xf32>
    %c6 = arith.constant 6 : index
    %c0_30 = arith.constant 0 : index
    %134 = vector.load %arg5[%c6, %c0_30] : memref<16x32xf32, #tpu.memory_space<vmem>>, vector<2x32xf32>
    tpu.vector_store %arg5[%c6, %c0_30], %133 {strides = array<i32>} : memref<16x32xf32, #tpu.memory_space<vmem>>, vector<2x32xf32>,
    %135 = vector.extract_strided_slice %11 {offsets = [4, 0], sizes = [1, 96], strides = [1, 1]} : vector<16x96xf32> to vector<1x96xf32>
    %136 = vector.extract_strided_slice %11 {offsets = [12, 0], sizes = [1, 96], strides = [1, 1]} : vector<16x96xf32> to vector<1x96xf32>
    %137 = tpu.concatenate %135, %136 in 0 : vector<1x96xf32>, vector<1x96xf32> -> vector<2x96xf32>
    %cst_31 = arith.constant dense<0.000000e+00> : vector<2x96xf32>
    %138 = tpu.matmul %133, %6, %cst_31 {dimension_numbers = #tpu.dot_dimension_numbers<[1], [0], [0], [1], [0, 0, 1, 1], [], []>} : vector<2x32xf32>, vector<32x96xf32>, vector<2x96xf32> -> vector<2x96xf32>
    %139 = vector.extract_strided_slice %137 {offsets = [0, 0], sizes = [2, 32], strides = [1, 1]} : vector<2x96xf32> to vector<2x32xf32>
    %140 = vector.extract_strided_slice %138 {offsets = [0, 0], sizes = [2, 32], strides = [1, 1]} : vector<2x96xf32> to vector<2x32xf32>
    %141 = arith.addf %139, %140 : vector<2x32xf32>
    %142 = arith.negf %141 : vector<2x32xf32>
    %143 = math.exp %142 : vector<2x32xf32>
    %cst_32 = arith.constant 1.000000e+00 : f32
    %144 = vector.broadcast %cst_32 : f32 to vector<2x32xf32>
    %145 = arith.addf %144, %143 : vector<2x32xf32>
    %146 = arith.divf %144, %145 : vector<2x32xf32>
    %147 = vector.extract_strided_slice %137 {offsets = [0, 32], sizes = [2, 32], strides = [1, 1]} : vector<2x96xf32> to vector<2x32xf32>
    %148 = vector.extract_strided_slice %138 {offsets = [0, 32], sizes = [2, 32], strides = [1, 1]} : vector<2x96xf32> to vector<2x32xf32>
    %149 = arith.addf %147, %148 : vector<2x32xf32>
    %150 = arith.negf %149 : vector<2x32xf32>
    %151 = math.exp %150 : vector<2x32xf32>
    %cst_33 = arith.constant 1.000000e+00 : f32
    %152 = vector.broadcast %cst_33 : f32 to vector<2x32xf32>
    %153 = arith.addf %152, %151 : vector<2x32xf32>
    %154 = arith.divf %152, %153 : vector<2x32xf32>
    %155 = vector.extract_strided_slice %137 {offsets = [0, 64], sizes = [2, 32], strides = [1, 1]} : vector<2x96xf32> to vector<2x32xf32>
    %156 = vector.extract_strided_slice %138 {offsets = [0, 64], sizes = [2, 32], strides = [1, 1]} : vector<2x96xf32> to vector<2x32xf32>
    %157 = vector.broadcast %8 : vector<1x32xf32> to vector<2x32xf32>
    %158 = arith.addf %156, %157 : vector<2x32xf32>
    %159 = arith.mulf %146, %158 : vector<2x32xf32>
    %160 = arith.addf %155, %159 : vector<2x32xf32>
    %161 = math.tanh %160 : vector<2x32xf32>
    %cst_34 = arith.constant 1.000000e+00 : f32
    %162 = vector.broadcast %cst_34 : f32 to vector<2x32xf32>
    %163 = arith.subf %162, %154 : vector<2x32xf32>
    %164 = arith.mulf %163, %161 : vector<2x32xf32>
    %165 = arith.mulf %154, %133 : vector<2x32xf32>
    %166 = arith.addf %164, %165 : vector<2x32xf32>
    %c8_35 = arith.constant 8 : index
    %c0_36 = arith.constant 0 : index
    %167 = vector.load %arg5[%c8_35, %c0_36] : memref<16x32xf32, #tpu.memory_space<vmem>>, vector<2x32xf32>
    tpu.vector_store %arg5[%c8_35, %c0_36], %166 {strides = array<i32>} : memref<16x32xf32, #tpu.memory_space<vmem>>, vector<2x32xf32>,
    %168 = vector.extract_strided_slice %11 {offsets = [5, 0], sizes = [1, 96], strides = [1, 1]} : vector<16x96xf32> to vector<1x96xf32>
    %169 = vector.extract_strided_slice %11 {offsets = [13, 0], sizes = [1, 96], strides = [1, 1]} : vector<16x96xf32> to vector<1x96xf32>
    %170 = tpu.concatenate %168, %169 in 0 : vector<1x96xf32>, vector<1x96xf32> -> vector<2x96xf32>
    %cst_37 = arith.constant dense<0.000000e+00> : vector<2x96xf32>
    %171 = tpu.matmul %166, %6, %cst_37 {dimension_numbers = #tpu.dot_dimension_numbers<[1], [0], [0], [1], [0, 0, 1, 1], [], []>} : vector<2x32xf32>, vector<32x96xf32>, vector<2x96xf32> -> vector<2x96xf32>
    %172 = vector.extract_strided_slice %170 {offsets = [0, 0], sizes = [2, 32], strides = [1, 1]} : vector<2x96xf32> to vector<2x32xf32>
    %173 = vector.extract_strided_slice %171 {offsets = [0, 0], sizes = [2, 32], strides = [1, 1]} : vector<2x96xf32> to vector<2x32xf32>
    %174 = arith.addf %172, %173 : vector<2x32xf32>
    %175 = arith.negf %174 : vector<2x32xf32>
    %176 = math.exp %175 : vector<2x32xf32>
    %cst_38 = arith.constant 1.000000e+00 : f32
    %177 = vector.broadcast %cst_38 : f32 to vector<2x32xf32>
    %178 = arith.addf %177, %176 : vector<2x32xf32>
    %179 = arith.divf %177, %178 : vector<2x32xf32>
    %180 = vector.extract_strided_slice %170 {offsets = [0, 32], sizes = [2, 32], strides = [1, 1]} : vector<2x96xf32> to vector<2x32xf32>
    %181 = vector.extract_strided_slice %171 {offsets = [0, 32], sizes = [2, 32], strides = [1, 1]} : vector<2x96xf32> to vector<2x32xf32>
    %182 = arith.addf %180, %181 : vector<2x32xf32>
    %183 = arith.negf %182 : vector<2x32xf32>
    %184 = math.exp %183 : vector<2x32xf32>
    %cst_39 = arith.constant 1.000000e+00 : f32
    %185 = vector.broadcast %cst_39 : f32 to vector<2x32xf32>
    %186 = arith.addf %185, %184 : vector<2x32xf32>
    %187 = arith.divf %185, %186 : vector<2x32xf32>
    %188 = vector.extract_strided_slice %170 {offsets = [0, 64], sizes = [2, 32], strides = [1, 1]} : vector<2x96xf32> to vector<2x32xf32>
    %189 = vector.extract_strided_slice %171 {offsets = [0, 64], sizes = [2, 32], strides = [1, 1]} : vector<2x96xf32> to vector<2x32xf32>
    %190 = vector.broadcast %8 : vector<1x32xf32> to vector<2x32xf32>
    %191 = arith.addf %189, %190 : vector<2x32xf32>
    %192 = arith.mulf %179, %191 : vector<2x32xf32>
    %193 = arith.addf %188, %192 : vector<2x32xf32>
    %194 = math.tanh %193 : vector<2x32xf32>
    %cst_40 = arith.constant 1.000000e+00 : f32
    %195 = vector.broadcast %cst_40 : f32 to vector<2x32xf32>
    %196 = arith.subf %195, %187 : vector<2x32xf32>
    %197 = arith.mulf %196, %194 : vector<2x32xf32>
    %198 = arith.mulf %187, %166 : vector<2x32xf32>
    %199 = arith.addf %197, %198 : vector<2x32xf32>
    %c10 = arith.constant 10 : index
    %c0_41 = arith.constant 0 : index
    %200 = vector.load %arg5[%c10, %c0_41] : memref<16x32xf32, #tpu.memory_space<vmem>>, vector<2x32xf32>
    tpu.vector_store %arg5[%c10, %c0_41], %199 {strides = array<i32>} : memref<16x32xf32, #tpu.memory_space<vmem>>, vector<2x32xf32>,
    %201 = vector.extract_strided_slice %11 {offsets = [6, 0], sizes = [1, 96], strides = [1, 1]} : vector<16x96xf32> to vector<1x96xf32>
    %202 = vector.extract_strided_slice %11 {offsets = [14, 0], sizes = [1, 96], strides = [1, 1]} : vector<16x96xf32> to vector<1x96xf32>
    %203 = tpu.concatenate %201, %202 in 0 : vector<1x96xf32>, vector<1x96xf32> -> vector<2x96xf32>
    %cst_42 = arith.constant dense<0.000000e+00> : vector<2x96xf32>
    %204 = tpu.matmul %199, %6, %cst_42 {dimension_numbers = #tpu.dot_dimension_numbers<[1], [0], [0], [1], [0, 0, 1, 1], [], []>} : vector<2x32xf32>, vector<32x96xf32>, vector<2x96xf32> -> vector<2x96xf32>
    %205 = vector.extract_strided_slice %203 {offsets = [0, 0], sizes = [2, 32], strides = [1, 1]} : vector<2x96xf32> to vector<2x32xf32>
    %206 = vector.extract_strided_slice %204 {offsets = [0, 0], sizes = [2, 32], strides = [1, 1]} : vector<2x96xf32> to vector<2x32xf32>
    %207 = arith.addf %205, %206 : vector<2x32xf32>
    %208 = arith.negf %207 : vector<2x32xf32>
    %209 = math.exp %208 : vector<2x32xf32>
    %cst_43 = arith.constant 1.000000e+00 : f32
    %210 = vector.broadcast %cst_43 : f32 to vector<2x32xf32>
    %211 = arith.addf %210, %209 : vector<2x32xf32>
    %212 = arith.divf %210, %211 : vector<2x32xf32>
    %213 = vector.extract_strided_slice %203 {offsets = [0, 32], sizes = [2, 32], strides = [1, 1]} : vector<2x96xf32> to vector<2x32xf32>
    %214 = vector.extract_strided_slice %204 {offsets = [0, 32], sizes = [2, 32], strides = [1, 1]} : vector<2x96xf32> to vector<2x32xf32>
    %215 = arith.addf %213, %214 : vector<2x32xf32>
    %216 = arith.negf %215 : vector<2x32xf32>
    %217 = math.exp %216 : vector<2x32xf32>
    %cst_44 = arith.constant 1.000000e+00 : f32
    %218 = vector.broadcast %cst_44 : f32 to vector<2x32xf32>
    %219 = arith.addf %218, %217 : vector<2x32xf32>
    %220 = arith.divf %218, %219 : vector<2x32xf32>
    %221 = vector.extract_strided_slice %203 {offsets = [0, 64], sizes = [2, 32], strides = [1, 1]} : vector<2x96xf32> to vector<2x32xf32>
    %222 = vector.extract_strided_slice %204 {offsets = [0, 64], sizes = [2, 32], strides = [1, 1]} : vector<2x96xf32> to vector<2x32xf32>
    %223 = vector.broadcast %8 : vector<1x32xf32> to vector<2x32xf32>
    %224 = arith.addf %222, %223 : vector<2x32xf32>
    %225 = arith.mulf %212, %224 : vector<2x32xf32>
    %226 = arith.addf %221, %225 : vector<2x32xf32>
    %227 = math.tanh %226 : vector<2x32xf32>
    %cst_45 = arith.constant 1.000000e+00 : f32
    %228 = vector.broadcast %cst_45 : f32 to vector<2x32xf32>
    %229 = arith.subf %228, %220 : vector<2x32xf32>
    %230 = arith.mulf %229, %227 : vector<2x32xf32>
    %231 = arith.mulf %220, %199 : vector<2x32xf32>
    %232 = arith.addf %230, %231 : vector<2x32xf32>
    %c12 = arith.constant 12 : index
    %c0_46 = arith.constant 0 : index
    %233 = vector.load %arg5[%c12, %c0_46] : memref<16x32xf32, #tpu.memory_space<vmem>>, vector<2x32xf32>
    tpu.vector_store %arg5[%c12, %c0_46], %232 {strides = array<i32>} : memref<16x32xf32, #tpu.memory_space<vmem>>, vector<2x32xf32>,
    %234 = vector.extract_strided_slice %11 {offsets = [7, 0], sizes = [1, 96], strides = [1, 1]} : vector<16x96xf32> to vector<1x96xf32>
    %235 = vector.extract_strided_slice %11 {offsets = [15, 0], sizes = [1, 96], strides = [1, 1]} : vector<16x96xf32> to vector<1x96xf32>
    %236 = tpu.concatenate %234, %235 in 0 : vector<1x96xf32>, vector<1x96xf32> -> vector<2x96xf32>
    %cst_47 = arith.constant dense<0.000000e+00> : vector<2x96xf32>
    %237 = tpu.matmul %232, %6, %cst_47 {dimension_numbers = #tpu.dot_dimension_numbers<[1], [0], [0], [1], [0, 0, 1, 1], [], []>} : vector<2x32xf32>, vector<32x96xf32>, vector<2x96xf32> -> vector<2x96xf32>
    %238 = vector.extract_strided_slice %236 {offsets = [0, 0], sizes = [2, 32], strides = [1, 1]} : vector<2x96xf32> to vector<2x32xf32>
    %239 = vector.extract_strided_slice %237 {offsets = [0, 0], sizes = [2, 32], strides = [1, 1]} : vector<2x96xf32> to vector<2x32xf32>
    %240 = arith.addf %238, %239 : vector<2x32xf32>
    %241 = arith.negf %240 : vector<2x32xf32>
    %242 = math.exp %241 : vector<2x32xf32>
    %cst_48 = arith.constant 1.000000e+00 : f32
    %243 = vector.broadcast %cst_48 : f32 to vector<2x32xf32>
    %244 = arith.addf %243, %242 : vector<2x32xf32>
    %245 = arith.divf %243, %244 : vector<2x32xf32>
    %246 = vector.extract_strided_slice %236 {offsets = [0, 32], sizes = [2, 32], strides = [1, 1]} : vector<2x96xf32> to vector<2x32xf32>
    %247 = vector.extract_strided_slice %237 {offsets = [0, 32], sizes = [2, 32], strides = [1, 1]} : vector<2x96xf32> to vector<2x32xf32>
    %248 = arith.addf %246, %247 : vector<2x32xf32>
    %249 = arith.negf %248 : vector<2x32xf32>
    %250 = math.exp %249 : vector<2x32xf32>
    %cst_49 = arith.constant 1.000000e+00 : f32
    %251 = vector.broadcast %cst_49 : f32 to vector<2x32xf32>
    %252 = arith.addf %251, %250 : vector<2x32xf32>
    %253 = arith.divf %251, %252 : vector<2x32xf32>
    %254 = vector.extract_strided_slice %236 {offsets = [0, 64], sizes = [2, 32], strides = [1, 1]} : vector<2x96xf32> to vector<2x32xf32>
    %255 = vector.extract_strided_slice %237 {offsets = [0, 64], sizes = [2, 32], strides = [1, 1]} : vector<2x96xf32> to vector<2x32xf32>
    %256 = vector.broadcast %8 : vector<1x32xf32> to vector<2x32xf32>
    %257 = arith.addf %255, %256 : vector<2x32xf32>
    %258 = arith.mulf %245, %257 : vector<2x32xf32>
    %259 = arith.addf %254, %258 : vector<2x32xf32>
    %260 = math.tanh %259 : vector<2x32xf32>
    %cst_50 = arith.constant 1.000000e+00 : f32
    %261 = vector.broadcast %cst_50 : f32 to vector<2x32xf32>
    %262 = arith.subf %261, %253 : vector<2x32xf32>
    %263 = arith.mulf %262, %260 : vector<2x32xf32>
    %264 = arith.mulf %253, %232 : vector<2x32xf32>
    %265 = arith.addf %263, %264 : vector<2x32xf32>
    %c14 = arith.constant 14 : index
    %c0_51 = arith.constant 0 : index
    %266 = vector.load %arg5[%c14, %c0_51] : memref<16x32xf32, #tpu.memory_space<vmem>>, vector<2x32xf32>
    tpu.vector_store %arg5[%c14, %c0_51], %265 {strides = array<i32>} : memref<16x32xf32, #tpu.memory_space<vmem>>, vector<2x32xf32>,
    %c0_52 = arith.constant 0 : index
    %c0_53 = arith.constant 0 : index
    %267 = vector.load %arg5[%c0_52, %c0_53] : memref<16x32xf32, #tpu.memory_space<vmem>>, vector<16x32xf32>
    %c48 = arith.constant 48 : index
    %c0_54 = arith.constant 0 : index
    %268 = vector.load %arg3[%c48, %c0_54] : memref<232x128xf32, #tpu.memory_space<vmem>>, vector<32x96xf32>
    %c80 = arith.constant 80 : index
    %c0_55 = arith.constant 0 : index
    %269 = vector.load %arg3[%c80, %c0_55] : memref<232x128xf32, #tpu.memory_space<vmem>>, vector<32x96xf32>
    %c112 = arith.constant 112 : index
    %c0_56 = arith.constant 0 : index
    %270 = vector.load %arg3[%c112, %c0_56] : memref<232x128xf32, #tpu.memory_space<vmem>>, vector<1x96xf32>
    %c113 = arith.constant 113 : index
    %c0_57 = arith.constant 0 : index
    %271 = vector.load %arg3[%c113, %c0_57] : memref<232x128xf32, #tpu.memory_space<vmem>>, vector<1x32xf32>
    %cst_58 = arith.constant dense<0.000000e+00> : vector<16x96xf32>
    %272 = tpu.matmul %267, %268, %cst_58 {dimension_numbers = #tpu.dot_dimension_numbers<[1], [0], [0], [1], [0, 0, 1, 1], [], []>} : vector<16x32xf32>, vector<32x96xf32>, vector<16x96xf32> -> vector<16x96xf32>
    %273 = vector.broadcast %270 : vector<1x96xf32> to vector<16x96xf32>
    %274 = arith.addf %272, %273 : vector<16x96xf32>
    %275 = vector.extract_strided_slice %274 {offsets = [0, 0], sizes = [2, 96], strides = [1, 1]} : vector<16x96xf32> to vector<2x96xf32>
    %276 = vector.extract_strided_slice %275 {offsets = [0, 0], sizes = [2, 32], strides = [1, 1]} : vector<2x96xf32> to vector<2x32xf32>
    %277 = arith.negf %276 : vector<2x32xf32>
    %278 = math.exp %277 : vector<2x32xf32>
    %cst_59 = arith.constant 1.000000e+00 : f32
    %279 = vector.broadcast %cst_59 : f32 to vector<2x32xf32>
    %280 = arith.addf %279, %278 : vector<2x32xf32>
    %281 = arith.divf %279, %280 : vector<2x32xf32>
    %282 = vector.extract_strided_slice %275 {offsets = [0, 32], sizes = [2, 32], strides = [1, 1]} : vector<2x96xf32> to vector<2x32xf32>
    %283 = arith.negf %282 : vector<2x32xf32>
    %284 = math.exp %283 : vector<2x32xf32>
    %cst_60 = arith.constant 1.000000e+00 : f32
    %285 = vector.broadcast %cst_60 : f32 to vector<2x32xf32>
    %286 = arith.addf %285, %284 : vector<2x32xf32>
    %287 = arith.divf %285, %286 : vector<2x32xf32>
    %288 = vector.extract_strided_slice %275 {offsets = [0, 64], sizes = [2, 32], strides = [1, 1]} : vector<2x96xf32> to vector<2x32xf32>
    %289 = vector.broadcast %271 : vector<1x32xf32> to vector<2x32xf32>
    %290 = arith.mulf %281, %289 : vector<2x32xf32>
    %291 = arith.addf %288, %290 : vector<2x32xf32>
    %292 = math.tanh %291 : vector<2x32xf32>
    %cst_61 = arith.constant 1.000000e+00 : f32
    %293 = vector.broadcast %cst_61 : f32 to vector<2x32xf32>
    %294 = arith.subf %293, %287 : vector<2x32xf32>
    %295 = arith.mulf %294, %292 : vector<2x32xf32>
    %c0_62 = arith.constant 0 : index
    %c0_63 = arith.constant 0 : index
    %296 = vector.load %arg5[%c0_62, %c0_63] : memref<16x32xf32, #tpu.memory_space<vmem>>, vector<2x32xf32>
    tpu.vector_store %arg5[%c0_62, %c0_63], %295 {strides = array<i32>} : memref<16x32xf32, #tpu.memory_space<vmem>>, vector<2x32xf32>,
    %297 = vector.extract_strided_slice %274 {offsets = [2, 0], sizes = [2, 96], strides = [1, 1]} : vector<16x96xf32> to vector<2x96xf32>
    %cst_64 = arith.constant dense<0.000000e+00> : vector<2x96xf32>
    %298 = tpu.matmul %295, %269, %cst_64 {dimension_numbers = #tpu.dot_dimension_numbers<[1], [0], [0], [1], [0, 0, 1, 1], [], []>} : vector<2x32xf32>, vector<32x96xf32>, vector<2x96xf32> -> vector<2x96xf32>
    %299 = vector.extract_strided_slice %297 {offsets = [0, 0], sizes = [2, 32], strides = [1, 1]} : vector<2x96xf32> to vector<2x32xf32>
    %300 = vector.extract_strided_slice %298 {offsets = [0, 0], sizes = [2, 32], strides = [1, 1]} : vector<2x96xf32> to vector<2x32xf32>
    %301 = arith.addf %299, %300 : vector<2x32xf32>
    %302 = arith.negf %301 : vector<2x32xf32>
    %303 = math.exp %302 : vector<2x32xf32>
    %cst_65 = arith.constant 1.000000e+00 : f32
    %304 = vector.broadcast %cst_65 : f32 to vector<2x32xf32>
    %305 = arith.addf %304, %303 : vector<2x32xf32>
    %306 = arith.divf %304, %305 : vector<2x32xf32>
    %307 = vector.extract_strided_slice %297 {offsets = [0, 32], sizes = [2, 32], strides = [1, 1]} : vector<2x96xf32> to vector<2x32xf32>
    %308 = vector.extract_strided_slice %298 {offsets = [0, 32], sizes = [2, 32], strides = [1, 1]} : vector<2x96xf32> to vector<2x32xf32>
    %309 = arith.addf %307, %308 : vector<2x32xf32>
    %310 = arith.negf %309 : vector<2x32xf32>
    %311 = math.exp %310 : vector<2x32xf32>
    %cst_66 = arith.constant 1.000000e+00 : f32
    %312 = vector.broadcast %cst_66 : f32 to vector<2x32xf32>
    %313 = arith.addf %312, %311 : vector<2x32xf32>
    %314 = arith.divf %312, %313 : vector<2x32xf32>
    %315 = vector.extract_strided_slice %297 {offsets = [0, 64], sizes = [2, 32], strides = [1, 1]} : vector<2x96xf32> to vector<2x32xf32>
    %316 = vector.extract_strided_slice %298 {offsets = [0, 64], sizes = [2, 32], strides = [1, 1]} : vector<2x96xf32> to vector<2x32xf32>
    %317 = vector.broadcast %271 : vector<1x32xf32> to vector<2x32xf32>
    %318 = arith.addf %316, %317 : vector<2x32xf32>
    %319 = arith.mulf %306, %318 : vector<2x32xf32>
    %320 = arith.addf %315, %319 : vector<2x32xf32>
    %321 = math.tanh %320 : vector<2x32xf32>
    %cst_67 = arith.constant 1.000000e+00 : f32
    %322 = vector.broadcast %cst_67 : f32 to vector<2x32xf32>
    %323 = arith.subf %322, %314 : vector<2x32xf32>
    %324 = arith.mulf %323, %321 : vector<2x32xf32>
    %325 = arith.mulf %314, %295 : vector<2x32xf32>
    %326 = arith.addf %324, %325 : vector<2x32xf32>
    %c2_68 = arith.constant 2 : index
    %c0_69 = arith.constant 0 : index
    %327 = vector.load %arg5[%c2_68, %c0_69] : memref<16x32xf32, #tpu.memory_space<vmem>>, vector<2x32xf32>
    tpu.vector_store %arg5[%c2_68, %c0_69], %326 {strides = array<i32>} : memref<16x32xf32, #tpu.memory_space<vmem>>, vector<2x32xf32>,
    %328 = vector.extract_strided_slice %274 {offsets = [4, 0], sizes = [2, 96], strides = [1, 1]} : vector<16x96xf32> to vector<2x96xf32>
    %cst_70 = arith.constant dense<0.000000e+00> : vector<2x96xf32>
    %329 = tpu.matmul %326, %269, %cst_70 {dimension_numbers = #tpu.dot_dimension_numbers<[1], [0], [0], [1], [0, 0, 1, 1], [], []>} : vector<2x32xf32>, vector<32x96xf32>, vector<2x96xf32> -> vector<2x96xf32>
    %330 = vector.extract_strided_slice %328 {offsets = [0, 0], sizes = [2, 32], strides = [1, 1]} : vector<2x96xf32> to vector<2x32xf32>
    %331 = vector.extract_strided_slice %329 {offsets = [0, 0], sizes = [2, 32], strides = [1, 1]} : vector<2x96xf32> to vector<2x32xf32>
    %332 = arith.addf %330, %331 : vector<2x32xf32>
    %333 = arith.negf %332 : vector<2x32xf32>
    %334 = math.exp %333 : vector<2x32xf32>
    %cst_71 = arith.constant 1.000000e+00 : f32
    %335 = vector.broadcast %cst_71 : f32 to vector<2x32xf32>
    %336 = arith.addf %335, %334 : vector<2x32xf32>
    %337 = arith.divf %335, %336 : vector<2x32xf32>
    %338 = vector.extract_strided_slice %328 {offsets = [0, 32], sizes = [2, 32], strides = [1, 1]} : vector<2x96xf32> to vector<2x32xf32>
    %339 = vector.extract_strided_slice %329 {offsets = [0, 32], sizes = [2, 32], strides = [1, 1]} : vector<2x96xf32> to vector<2x32xf32>
    %340 = arith.addf %338, %339 : vector<2x32xf32>
    %341 = arith.negf %340 : vector<2x32xf32>
    %342 = math.exp %341 : vector<2x32xf32>
    %cst_72 = arith.constant 1.000000e+00 : f32
    %343 = vector.broadcast %cst_72 : f32 to vector<2x32xf32>
    %344 = arith.addf %343, %342 : vector<2x32xf32>
    %345 = arith.divf %343, %344 : vector<2x32xf32>
    %346 = vector.extract_strided_slice %328 {offsets = [0, 64], sizes = [2, 32], strides = [1, 1]} : vector<2x96xf32> to vector<2x32xf32>
    %347 = vector.extract_strided_slice %329 {offsets = [0, 64], sizes = [2, 32], strides = [1, 1]} : vector<2x96xf32> to vector<2x32xf32>
    %348 = vector.broadcast %271 : vector<1x32xf32> to vector<2x32xf32>
    %349 = arith.addf %347, %348 : vector<2x32xf32>
    %350 = arith.mulf %337, %349 : vector<2x32xf32>
    %351 = arith.addf %346, %350 : vector<2x32xf32>
    %352 = math.tanh %351 : vector<2x32xf32>
    %cst_73 = arith.constant 1.000000e+00 : f32
    %353 = vector.broadcast %cst_73 : f32 to vector<2x32xf32>
    %354 = arith.subf %353, %345 : vector<2x32xf32>
    %355 = arith.mulf %354, %352 : vector<2x32xf32>
    %356 = arith.mulf %345, %326 : vector<2x32xf32>
    %357 = arith.addf %355, %356 : vector<2x32xf32>
    %c4_74 = arith.constant 4 : index
    %c0_75 = arith.constant 0 : index
    %358 = vector.load %arg5[%c4_74, %c0_75] : memref<16x32xf32, #tpu.memory_space<vmem>>, vector<2x32xf32>
    tpu.vector_store %arg5[%c4_74, %c0_75], %357 {strides = array<i32>} : memref<16x32xf32, #tpu.memory_space<vmem>>, vector<2x32xf32>,
    %359 = vector.extract_strided_slice %274 {offsets = [6, 0], sizes = [2, 96], strides = [1, 1]} : vector<16x96xf32> to vector<2x96xf32>
    %cst_76 = arith.constant dense<0.000000e+00> : vector<2x96xf32>
    %360 = tpu.matmul %357, %269, %cst_76 {dimension_numbers = #tpu.dot_dimension_numbers<[1], [0], [0], [1], [0, 0, 1, 1], [], []>} : vector<2x32xf32>, vector<32x96xf32>, vector<2x96xf32> -> vector<2x96xf32>
    %361 = vector.extract_strided_slice %359 {offsets = [0, 0], sizes = [2, 32], strides = [1, 1]} : vector<2x96xf32> to vector<2x32xf32>
    %362 = vector.extract_strided_slice %360 {offsets = [0, 0], sizes = [2, 32], strides = [1, 1]} : vector<2x96xf32> to vector<2x32xf32>
    %363 = arith.addf %361, %362 : vector<2x32xf32>
    %364 = arith.negf %363 : vector<2x32xf32>
    %365 = math.exp %364 : vector<2x32xf32>
    %cst_77 = arith.constant 1.000000e+00 : f32
    %366 = vector.broadcast %cst_77 : f32 to vector<2x32xf32>
    %367 = arith.addf %366, %365 : vector<2x32xf32>
    %368 = arith.divf %366, %367 : vector<2x32xf32>
    %369 = vector.extract_strided_slice %359 {offsets = [0, 32], sizes = [2, 32], strides = [1, 1]} : vector<2x96xf32> to vector<2x32xf32>
    %370 = vector.extract_strided_slice %360 {offsets = [0, 32], sizes = [2, 32], strides = [1, 1]} : vector<2x96xf32> to vector<2x32xf32>
    %371 = arith.addf %369, %370 : vector<2x32xf32>
    %372 = arith.negf %371 : vector<2x32xf32>
    %373 = math.exp %372 : vector<2x32xf32>
    %cst_78 = arith.constant 1.000000e+00 : f32
    %374 = vector.broadcast %cst_78 : f32 to vector<2x32xf32>
    %375 = arith.addf %374, %373 : vector<2x32xf32>
    %376 = arith.divf %374, %375 : vector<2x32xf32>
    %377 = vector.extract_strided_slice %359 {offsets = [0, 64], sizes = [2, 32], strides = [1, 1]} : vector<2x96xf32> to vector<2x32xf32>
    %378 = vector.extract_strided_slice %360 {offsets = [0, 64], sizes = [2, 32], strides = [1, 1]} : vector<2x96xf32> to vector<2x32xf32>
    %379 = vector.broadcast %271 : vector<1x32xf32> to vector<2x32xf32>
    %380 = arith.addf %378, %379 : vector<2x32xf32>
    %381 = arith.mulf %368, %380 : vector<2x32xf32>
    %382 = arith.addf %377, %381 : vector<2x32xf32>
    %383 = math.tanh %382 : vector<2x32xf32>
    %cst_79 = arith.constant 1.000000e+00 : f32
    %384 = vector.broadcast %cst_79 : f32 to vector<2x32xf32>
    %385 = arith.subf %384, %376 : vector<2x32xf32>
    %386 = arith.mulf %385, %383 : vector<2x32xf32>
    %387 = arith.mulf %376, %357 : vector<2x32xf32>
    %388 = arith.addf %386, %387 : vector<2x32xf32>
    %c6_80 = arith.constant 6 : index
    %c0_81 = arith.constant 0 : index
    %389 = vector.load %arg5[%c6_80, %c0_81] : memref<16x32xf32, #tpu.memory_space<vmem>>, vector<2x32xf32>
    tpu.vector_store %arg5[%c6_80, %c0_81], %388 {strides = array<i32>} : memref<16x32xf32, #tpu.memory_space<vmem>>, vector<2x32xf32>,
    %390 = vector.extract_strided_slice %274 {offsets = [8, 0], sizes = [2, 96], strides = [1, 1]} : vector<16x96xf32> to vector<2x96xf32>
    %cst_82 = arith.constant dense<0.000000e+00> : vector<2x96xf32>
    %391 = tpu.matmul %388, %269, %cst_82 {dimension_numbers = #tpu.dot_dimension_numbers<[1], [0], [0], [1], [0, 0, 1, 1], [], []>} : vector<2x32xf32>, vector<32x96xf32>, vector<2x96xf32> -> vector<2x96xf32>
    %392 = vector.extract_strided_slice %390 {offsets = [0, 0], sizes = [2, 32], strides = [1, 1]} : vector<2x96xf32> to vector<2x32xf32>
    %393 = vector.extract_strided_slice %391 {offsets = [0, 0], sizes = [2, 32], strides = [1, 1]} : vector<2x96xf32> to vector<2x32xf32>
    %394 = arith.addf %392, %393 : vector<2x32xf32>
    %395 = arith.negf %394 : vector<2x32xf32>
    %396 = math.exp %395 : vector<2x32xf32>
    %cst_83 = arith.constant 1.000000e+00 : f32
    %397 = vector.broadcast %cst_83 : f32 to vector<2x32xf32>
    %398 = arith.addf %397, %396 : vector<2x32xf32>
    %399 = arith.divf %397, %398 : vector<2x32xf32>
    %400 = vector.extract_strided_slice %390 {offsets = [0, 32], sizes = [2, 32], strides = [1, 1]} : vector<2x96xf32> to vector<2x32xf32>
    %401 = vector.extract_strided_slice %391 {offsets = [0, 32], sizes = [2, 32], strides = [1, 1]} : vector<2x96xf32> to vector<2x32xf32>
    %402 = arith.addf %400, %401 : vector<2x32xf32>
    %403 = arith.negf %402 : vector<2x32xf32>
    %404 = math.exp %403 : vector<2x32xf32>
    %cst_84 = arith.constant 1.000000e+00 : f32
    %405 = vector.broadcast %cst_84 : f32 to vector<2x32xf32>
    %406 = arith.addf %405, %404 : vector<2x32xf32>
    %407 = arith.divf %405, %406 : vector<2x32xf32>
    %408 = vector.extract_strided_slice %390 {offsets = [0, 64], sizes = [2, 32], strides = [1, 1]} : vector<2x96xf32> to vector<2x32xf32>
    %409 = vector.extract_strided_slice %391 {offsets = [0, 64], sizes = [2, 32], strides = [1, 1]} : vector<2x96xf32> to vector<2x32xf32>
    %410 = vector.broadcast %271 : vector<1x32xf32> to vector<2x32xf32>
    %411 = arith.addf %409, %410 : vector<2x32xf32>
    %412 = arith.mulf %399, %411 : vector<2x32xf32>
    %413 = arith.addf %408, %412 : vector<2x32xf32>
    %414 = math.tanh %413 : vector<2x32xf32>
    %cst_85 = arith.constant 1.000000e+00 : f32
    %415 = vector.broadcast %cst_85 : f32 to vector<2x32xf32>
    %416 = arith.subf %415, %407 : vector<2x32xf32>
    %417 = arith.mulf %416, %414 : vector<2x32xf32>
    %418 = arith.mulf %407, %388 : vector<2x32xf32>
    %419 = arith.addf %417, %418 : vector<2x32xf32>
    %c8_86 = arith.constant 8 : index
    %c0_87 = arith.constant 0 : index
    %420 = vector.load %arg5[%c8_86, %c0_87] : memref<16x32xf32, #tpu.memory_space<vmem>>, vector<2x32xf32>
    tpu.vector_store %arg5[%c8_86, %c0_87], %419 {strides = array<i32>} : memref<16x32xf32, #tpu.memory_space<vmem>>, vector<2x32xf32>,
    %421 = vector.extract_strided_slice %274 {offsets = [10, 0], sizes = [2, 96], strides = [1, 1]} : vector<16x96xf32> to vector<2x96xf32>
    %cst_88 = arith.constant dense<0.000000e+00> : vector<2x96xf32>
    %422 = tpu.matmul %419, %269, %cst_88 {dimension_numbers = #tpu.dot_dimension_numbers<[1], [0], [0], [1], [0, 0, 1, 1], [], []>} : vector<2x32xf32>, vector<32x96xf32>, vector<2x96xf32> -> vector<2x96xf32>
    %423 = vector.extract_strided_slice %421 {offsets = [0, 0], sizes = [2, 32], strides = [1, 1]} : vector<2x96xf32> to vector<2x32xf32>
    %424 = vector.extract_strided_slice %422 {offsets = [0, 0], sizes = [2, 32], strides = [1, 1]} : vector<2x96xf32> to vector<2x32xf32>
    %425 = arith.addf %423, %424 : vector<2x32xf32>
    %426 = arith.negf %425 : vector<2x32xf32>
    %427 = math.exp %426 : vector<2x32xf32>
    %cst_89 = arith.constant 1.000000e+00 : f32
    %428 = vector.broadcast %cst_89 : f32 to vector<2x32xf32>
    %429 = arith.addf %428, %427 : vector<2x32xf32>
    %430 = arith.divf %428, %429 : vector<2x32xf32>
    %431 = vector.extract_strided_slice %421 {offsets = [0, 32], sizes = [2, 32], strides = [1, 1]} : vector<2x96xf32> to vector<2x32xf32>
    %432 = vector.extract_strided_slice %422 {offsets = [0, 32], sizes = [2, 32], strides = [1, 1]} : vector<2x96xf32> to vector<2x32xf32>
    %433 = arith.addf %431, %432 : vector<2x32xf32>
    %434 = arith.negf %433 : vector<2x32xf32>
    %435 = math.exp %434 : vector<2x32xf32>
    %cst_90 = arith.constant 1.000000e+00 : f32
    %436 = vector.broadcast %cst_90 : f32 to vector<2x32xf32>
    %437 = arith.addf %436, %435 : vector<2x32xf32>
    %438 = arith.divf %436, %437 : vector<2x32xf32>
    %439 = vector.extract_strided_slice %421 {offsets = [0, 64], sizes = [2, 32], strides = [1, 1]} : vector<2x96xf32> to vector<2x32xf32>
    %440 = vector.extract_strided_slice %422 {offsets = [0, 64], sizes = [2, 32], strides = [1, 1]} : vector<2x96xf32> to vector<2x32xf32>
    %441 = vector.broadcast %271 : vector<1x32xf32> to vector<2x32xf32>
    %442 = arith.addf %440, %441 : vector<2x32xf32>
    %443 = arith.mulf %430, %442 : vector<2x32xf32>
    %444 = arith.addf %439, %443 : vector<2x32xf32>
    %445 = math.tanh %444 : vector<2x32xf32>
    %cst_91 = arith.constant 1.000000e+00 : f32
    %446 = vector.broadcast %cst_91 : f32 to vector<2x32xf32>
    %447 = arith.subf %446, %438 : vector<2x32xf32>
    %448 = arith.mulf %447, %445 : vector<2x32xf32>
    %449 = arith.mulf %438, %419 : vector<2x32xf32>
    %450 = arith.addf %448, %449 : vector<2x32xf32>
    %c10_92 = arith.constant 10 : index
    %c0_93 = arith.constant 0 : index
    %451 = vector.load %arg5[%c10_92, %c0_93] : memref<16x32xf32, #tpu.memory_space<vmem>>, vector<2x32xf32>
    tpu.vector_store %arg5[%c10_92, %c0_93], %450 {strides = array<i32>} : memref<16x32xf32, #tpu.memory_space<vmem>>, vector<2x32xf32>,
    %452 = vector.extract_strided_slice %274 {offsets = [12, 0], sizes = [2, 96], strides = [1, 1]} : vector<16x96xf32> to vector<2x96xf32>
    %cst_94 = arith.constant dense<0.000000e+00> : vector<2x96xf32>
    %453 = tpu.matmul %450, %269, %cst_94 {dimension_numbers = #tpu.dot_dimension_numbers<[1], [0], [0], [1], [0, 0, 1, 1], [], []>} : vector<2x32xf32>, vector<32x96xf32>, vector<2x96xf32> -> vector<2x96xf32>
    %454 = vector.extract_strided_slice %452 {offsets = [0, 0], sizes = [2, 32], strides = [1, 1]} : vector<2x96xf32> to vector<2x32xf32>
    %455 = vector.extract_strided_slice %453 {offsets = [0, 0], sizes = [2, 32], strides = [1, 1]} : vector<2x96xf32> to vector<2x32xf32>
    %456 = arith.addf %454, %455 : vector<2x32xf32>
    %457 = arith.negf %456 : vector<2x32xf32>
    %458 = math.exp %457 : vector<2x32xf32>
    %cst_95 = arith.constant 1.000000e+00 : f32
    %459 = vector.broadcast %cst_95 : f32 to vector<2x32xf32>
    %460 = arith.addf %459, %458 : vector<2x32xf32>
    %461 = arith.divf %459, %460 : vector<2x32xf32>
    %462 = vector.extract_strided_slice %452 {offsets = [0, 32], sizes = [2, 32], strides = [1, 1]} : vector<2x96xf32> to vector<2x32xf32>
    %463 = vector.extract_strided_slice %453 {offsets = [0, 32], sizes = [2, 32], strides = [1, 1]} : vector<2x96xf32> to vector<2x32xf32>
    %464 = arith.addf %462, %463 : vector<2x32xf32>
    %465 = arith.negf %464 : vector<2x32xf32>
    %466 = math.exp %465 : vector<2x32xf32>
    %cst_96 = arith.constant 1.000000e+00 : f32
    %467 = vector.broadcast %cst_96 : f32 to vector<2x32xf32>
    %468 = arith.addf %467, %466 : vector<2x32xf32>
    %469 = arith.divf %467, %468 : vector<2x32xf32>
    %470 = vector.extract_strided_slice %452 {offsets = [0, 64], sizes = [2, 32], strides = [1, 1]} : vector<2x96xf32> to vector<2x32xf32>
    %471 = vector.extract_strided_slice %453 {offsets = [0, 64], sizes = [2, 32], strides = [1, 1]} : vector<2x96xf32> to vector<2x32xf32>
    %472 = vector.broadcast %271 : vector<1x32xf32> to vector<2x32xf32>
    %473 = arith.addf %471, %472 : vector<2x32xf32>
    %474 = arith.mulf %461, %473 : vector<2x32xf32>
    %475 = arith.addf %470, %474 : vector<2x32xf32>
    %476 = math.tanh %475 : vector<2x32xf32>
    %cst_97 = arith.constant 1.000000e+00 : f32
    %477 = vector.broadcast %cst_97 : f32 to vector<2x32xf32>
    %478 = arith.subf %477, %469 : vector<2x32xf32>
    %479 = arith.mulf %478, %476 : vector<2x32xf32>
    %480 = arith.mulf %469, %450 : vector<2x32xf32>
    %481 = arith.addf %479, %480 : vector<2x32xf32>
    %c12_98 = arith.constant 12 : index
    %c0_99 = arith.constant 0 : index
    %482 = vector.load %arg5[%c12_98, %c0_99] : memref<16x32xf32, #tpu.memory_space<vmem>>, vector<2x32xf32>
    tpu.vector_store %arg5[%c12_98, %c0_99], %481 {strides = array<i32>} : memref<16x32xf32, #tpu.memory_space<vmem>>, vector<2x32xf32>,
    %483 = vector.extract_strided_slice %274 {offsets = [14, 0], sizes = [2, 96], strides = [1, 1]} : vector<16x96xf32> to vector<2x96xf32>
    %cst_100 = arith.constant dense<0.000000e+00> : vector<2x96xf32>
    %484 = tpu.matmul %481, %269, %cst_100 {dimension_numbers = #tpu.dot_dimension_numbers<[1], [0], [0], [1], [0, 0, 1, 1], [], []>} : vector<2x32xf32>, vector<32x96xf32>, vector<2x96xf32> -> vector<2x96xf32>
    %485 = vector.extract_strided_slice %483 {offsets = [0, 0], sizes = [2, 32], strides = [1, 1]} : vector<2x96xf32> to vector<2x32xf32>
    %486 = vector.extract_strided_slice %484 {offsets = [0, 0], sizes = [2, 32], strides = [1, 1]} : vector<2x96xf32> to vector<2x32xf32>
    %487 = arith.addf %485, %486 : vector<2x32xf32>
    %488 = arith.negf %487 : vector<2x32xf32>
    %489 = math.exp %488 : vector<2x32xf32>
    %cst_101 = arith.constant 1.000000e+00 : f32
    %490 = vector.broadcast %cst_101 : f32 to vector<2x32xf32>
    %491 = arith.addf %490, %489 : vector<2x32xf32>
    %492 = arith.divf %490, %491 : vector<2x32xf32>
    %493 = vector.extract_strided_slice %483 {offsets = [0, 32], sizes = [2, 32], strides = [1, 1]} : vector<2x96xf32> to vector<2x32xf32>
    %494 = vector.extract_strided_slice %484 {offsets = [0, 32], sizes = [2, 32], strides = [1, 1]} : vector<2x96xf32> to vector<2x32xf32>
    %495 = arith.addf %493, %494 : vector<2x32xf32>
    %496 = arith.negf %495 : vector<2x32xf32>
    %497 = math.exp %496 : vector<2x32xf32>
    %cst_102 = arith.constant 1.000000e+00 : f32
    %498 = vector.broadcast %cst_102 : f32 to vector<2x32xf32>
    %499 = arith.addf %498, %497 : vector<2x32xf32>
    %500 = arith.divf %498, %499 : vector<2x32xf32>
    %501 = vector.extract_strided_slice %483 {offsets = [0, 64], sizes = [2, 32], strides = [1, 1]} : vector<2x96xf32> to vector<2x32xf32>
    %502 = vector.extract_strided_slice %484 {offsets = [0, 64], sizes = [2, 32], strides = [1, 1]} : vector<2x96xf32> to vector<2x32xf32>
    %503 = vector.broadcast %271 : vector<1x32xf32> to vector<2x32xf32>
    %504 = arith.addf %502, %503 : vector<2x32xf32>
    %505 = arith.mulf %492, %504 : vector<2x32xf32>
    %506 = arith.addf %501, %505 : vector<2x32xf32>
    %507 = math.tanh %506 : vector<2x32xf32>
    %cst_103 = arith.constant 1.000000e+00 : f32
    %508 = vector.broadcast %cst_103 : f32 to vector<2x32xf32>
    %509 = arith.subf %508, %500 : vector<2x32xf32>
    %510 = arith.mulf %509, %507 : vector<2x32xf32>
    %511 = arith.mulf %500, %481 : vector<2x32xf32>
    %512 = arith.addf %510, %511 : vector<2x32xf32>
    %c14_104 = arith.constant 14 : index
    %c0_105 = arith.constant 0 : index
    %513 = vector.load %arg5[%c14_104, %c0_105] : memref<16x32xf32, #tpu.memory_space<vmem>>, vector<2x32xf32>
    tpu.vector_store %arg5[%c14_104, %c0_105], %512 {strides = array<i32>} : memref<16x32xf32, #tpu.memory_space<vmem>>, vector<2x32xf32>,
    %c0_106 = arith.constant 0 : index
    %c0_107 = arith.constant 0 : index
    %514 = vector.load %arg5[%c0_106, %c0_107] : memref<16x32xf32, #tpu.memory_space<vmem>>, vector<16x32xf32>
    %c120 = arith.constant 120 : index
    %c0_108 = arith.constant 0 : index
    %515 = vector.load %arg3[%c120, %c0_108] : memref<232x128xf32, #tpu.memory_space<vmem>>, vector<32x64xf32>
    %c152 = arith.constant 152 : index
    %c0_109 = arith.constant 0 : index
    %516 = vector.load %arg3[%c152, %c0_109] : memref<232x128xf32, #tpu.memory_space<vmem>>, vector<1x64xf32>
    %c153 = arith.constant 153 : index
    %c0_110 = arith.constant 0 : index
    %517 = vector.load %arg3[%c153, %c0_110] : memref<232x128xf32, #tpu.memory_space<vmem>>, vector<1x64xf32>
    %c154 = arith.constant 154 : index
    %c0_111 = arith.constant 0 : index
    %518 = vector.load %arg3[%c154, %c0_111] : memref<232x128xf32, #tpu.memory_space<vmem>>, vector<1x64xf32>
    %c160 = arith.constant 160 : index
    %c0_112 = arith.constant 0 : index
    %519 = vector.load %arg3[%c160, %c0_112] : memref<232x128xf32, #tpu.memory_space<vmem>>, vector<64x3xf32>
    %c224 = arith.constant 224 : index
    %c0_113 = arith.constant 0 : index
    %520 = vector.load %arg3[%c224, %c0_113] : memref<232x128xf32, #tpu.memory_space<vmem>>, vector<1x3xf32>
    %cst_114 = arith.constant dense<0.000000e+00> : vector<16x64xf32>
    %521 = tpu.matmul %514, %515, %cst_114 {dimension_numbers = #tpu.dot_dimension_numbers<[1], [0], [0], [1], [0, 0, 1, 1], [], []>} : vector<16x32xf32>, vector<32x64xf32>, vector<16x64xf32> -> vector<16x64xf32>
    %522 = vector.broadcast %516 : vector<1x64xf32> to vector<16x64xf32>
    %523 = arith.addf %521, %522 : vector<16x64xf32>
    %cst_115 = arith.constant dense<0.000000e+00> : vector<16xf32>
    %524 = vector.multi_reduction <add>, %523, %cst_115 [1] : vector<16x64xf32> to vector<16xf32>
    %525 = vector.shape_cast %524 : vector<16xf32> to vector<16x1xf32>
    %cst_116 = arith.constant 6.400000e+01 : f32
    %526 = vector.broadcast %cst_116 : f32 to vector<16x1xf32>
    %527 = arith.divf %525, %526 : vector<16x1xf32>
    %528 = vector.broadcast %527 : vector<16x1xf32> to vector<16x64xf32>
    %529 = arith.subf %523, %528 : vector<16x64xf32>
    %530 = arith.mulf %529, %529 : vector<16x64xf32>
    %cst_117 = arith.constant dense<0.000000e+00> : vector<16xf32>
    %531 = vector.multi_reduction <add>, %530, %cst_117 [1] : vector<16x64xf32> to vector<16xf32>
    %532 = vector.shape_cast %531 : vector<16xf32> to vector<16x1xf32>
    %cst_118 = arith.constant 6.400000e+01 : f32
    %533 = vector.broadcast %cst_118 : f32 to vector<16x1xf32>
    %534 = arith.divf %532, %533 : vector<16x1xf32>
    %535 = vector.broadcast %527 : vector<16x1xf32> to vector<16x64xf32>
    %536 = arith.subf %523, %535 : vector<16x64xf32>
    %cst_119 = arith.constant 9.99999974E-6 : f32
    %537 = vector.broadcast %cst_119 : f32 to vector<16x1xf32>
    %538 = arith.addf %534, %537 : vector<16x1xf32>
    %539 = math.rsqrt %538 : vector<16x1xf32>
    %540 = vector.broadcast %539 : vector<16x1xf32> to vector<16x64xf32>
    %541 = arith.mulf %536, %540 : vector<16x64xf32>
    %542 = vector.broadcast %517 : vector<1x64xf32> to vector<16x64xf32>
    %543 = arith.mulf %541, %542 : vector<16x64xf32>
    %544 = vector.broadcast %518 : vector<1x64xf32> to vector<16x64xf32>
    %545 = arith.addf %543, %544 : vector<16x64xf32>
    %cst_120 = arith.constant 0.000000e+00 : f32
    %546 = vector.broadcast %cst_120 : f32 to vector<16x64xf32>
    %547 = arith.maximumf %545, %546 : vector<16x64xf32>
    %cst_121 = arith.constant dense<0.000000e+00> : vector<16x3xf32>
    %548 = tpu.matmul %547, %519, %cst_121 {dimension_numbers = #tpu.dot_dimension_numbers<[1], [0], [0], [1], [0, 0, 1, 1], [], []>} : vector<16x64xf32>, vector<64x3xf32>, vector<16x3xf32> -> vector<16x3xf32>
    %549 = vector.broadcast %520 : vector<1x3xf32> to vector<16x3xf32>
    %550 = arith.addf %548, %549 : vector<16x3xf32>
    %551 = math.tanh %550 : vector<16x3xf32>
    %552 = vector.extract_strided_slice %551 {offsets = [0, 0], sizes = [1, 3], strides = [1, 1]} : vector<16x3xf32> to vector<1x3xf32>
    %553 = vector.extract_strided_slice %551 {offsets = [2, 0], sizes = [1, 3], strides = [1, 1]} : vector<16x3xf32> to vector<1x3xf32>
    %554 = vector.extract_strided_slice %551 {offsets = [4, 0], sizes = [1, 3], strides = [1, 1]} : vector<16x3xf32> to vector<1x3xf32>
    %555 = vector.extract_strided_slice %551 {offsets = [6, 0], sizes = [1, 3], strides = [1, 1]} : vector<16x3xf32> to vector<1x3xf32>
    %556 = vector.extract_strided_slice %551 {offsets = [8, 0], sizes = [1, 3], strides = [1, 1]} : vector<16x3xf32> to vector<1x3xf32>
    %557 = vector.extract_strided_slice %551 {offsets = [10, 0], sizes = [1, 3], strides = [1, 1]} : vector<16x3xf32> to vector<1x3xf32>
    %558 = vector.extract_strided_slice %551 {offsets = [12, 0], sizes = [1, 3], strides = [1, 1]} : vector<16x3xf32> to vector<1x3xf32>
    %559 = vector.extract_strided_slice %551 {offsets = [14, 0], sizes = [1, 3], strides = [1, 1]} : vector<16x3xf32> to vector<1x3xf32>
    %560 = tpu.concatenate %552, %553, %554, %555, %556, %557, %558, %559 in 0 : vector<1x3xf32>, vector<1x3xf32>, vector<1x3xf32>, vector<1x3xf32>, vector<1x3xf32>, vector<1x3xf32>, vector<1x3xf32>, vector<1x3xf32> -> vector<8x3xf32>
    %c0_122 = arith.constant 0 : index
    %c0_123 = arith.constant 0 : index
    %c0_124 = arith.constant 0 : index
    %561 = vector.load %arg4[%c0_122, %c0_123, %c0_124] : memref<2x8x3xf32, #tpu.memory_space<vmem>>, vector<1x8x3xf32>
    %562 = vector.shape_cast %561 : vector<1x8x3xf32> to vector<8x3xf32>
    %563 = vector.shape_cast %560 : vector<8x3xf32> to vector<1x8x3xf32>
    tpu.vector_store %arg4[%c0_122, %c0_123, %c0_124], %563 {strides = array<i32>} : memref<2x8x3xf32, #tpu.memory_space<vmem>>, vector<1x8x3xf32>,
    %564 = vector.extract_strided_slice %551 {offsets = [1, 0], sizes = [1, 3], strides = [1, 1]} : vector<16x3xf32> to vector<1x3xf32>
    %565 = vector.extract_strided_slice %551 {offsets = [3, 0], sizes = [1, 3], strides = [1, 1]} : vector<16x3xf32> to vector<1x3xf32>
    %566 = vector.extract_strided_slice %551 {offsets = [5, 0], sizes = [1, 3], strides = [1, 1]} : vector<16x3xf32> to vector<1x3xf32>
    %567 = vector.extract_strided_slice %551 {offsets = [7, 0], sizes = [1, 3], strides = [1, 1]} : vector<16x3xf32> to vector<1x3xf32>
    %568 = vector.extract_strided_slice %551 {offsets = [9, 0], sizes = [1, 3], strides = [1, 1]} : vector<16x3xf32> to vector<1x3xf32>
    %569 = vector.extract_strided_slice %551 {offsets = [11, 0], sizes = [1, 3], strides = [1, 1]} : vector<16x3xf32> to vector<1x3xf32>
    %570 = vector.extract_strided_slice %551 {offsets = [13, 0], sizes = [1, 3], strides = [1, 1]} : vector<16x3xf32> to vector<1x3xf32>
    %571 = vector.extract_strided_slice %551 {offsets = [15, 0], sizes = [1, 3], strides = [1, 1]} : vector<16x3xf32> to vector<1x3xf32>
    %572 = tpu.concatenate %564, %565, %566, %567, %568, %569, %570, %571 in 0 : vector<1x3xf32>, vector<1x3xf32>, vector<1x3xf32>, vector<1x3xf32>, vector<1x3xf32>, vector<1x3xf32>, vector<1x3xf32>, vector<1x3xf32> -> vector<8x3xf32>
    %c1 = arith.constant 1 : index
    %c0_125 = arith.constant 0 : index
    %c0_126 = arith.constant 0 : index
    %573 = vector.load %arg4[%c1, %c0_125, %c0_126] : memref<2x8x3xf32, #tpu.memory_space<vmem>>, vector<1x8x3xf32>
    %574 = vector.shape_cast %573 : vector<1x8x3xf32> to vector<8x3xf32>
    %575 = vector.shape_cast %572 : vector<8x3xf32> to vector<1x8x3xf32>
    tpu.vector_store %arg4[%c1, %c0_125, %c0_126], %575 {strides = array<i32>} : memref<2x8x3xf32, #tpu.memory_space<vmem>>, vector<1x8x3xf32>,
    return
  }
  func.func @transform_0(%arg0: i32) -> (i32, i32, i32) {
    %c0_i32 = arith.constant 0 : i32
    %c0_i32_0 = arith.constant 0 : i32
    %c0_i32_1 = arith.constant 0 : i32
    %c0_i32_2 = arith.constant 0 : i32
    return %c0_i32, %c0_i32_0, %c0_i32_1 : i32, i32, i32
  }
  func.func @transform_1(%arg0: i32) -> (i32, i32, i32) {
    %c0_i32 = arith.constant 0 : i32
    %c0_i32_0 = arith.constant 0 : i32
    %c0_i32_1 = arith.constant 0 : i32
    %c0_i32_2 = arith.constant 0 : i32
    return %c0_i32, %c0_i32_0, %c0_i32_1 : i32, i32, i32
  }
  func.func @transform_2(%arg0: i32) -> (i32, i32) {
    %c0_i32 = arith.constant 0 : i32
    %c0_i32_0 = arith.constant 0 : i32
    %c0_i32_1 = arith.constant 0 : i32
    return %c0_i32, %c0_i32_0 : i32, i32
  }
  func.func @transform_3(%arg0: i32) -> (i32, i32, i32) {
    %c0_i32 = arith.constant 0 : i32
    %c0_i32_0 = arith.constant 0 : i32
    %c0_i32_1 = arith.constant 0 : i32
    %c0_i32_2 = arith.constant 0 : i32
    return %c0_i32, %c0_i32_0, %c0_i32_1 : i32, i32, i32
  }
}

</mosaic_0001>

<llo_original>
// kernel: tpu_custom_call.1
$region0: #{tpu_custom_call.1}
  #allocation0 [shape = 'u32[]', space=smem, size = 0x4, offset = 0x4, fixed_abs, tag = 'smem constant byte address 0x4 - core index']
  #allocation1 [shape = 'u32[144,128]{1,0:T(1,128)}', space=vmem, size = 0x12000, scoped, tag = 'internal scratch']
  #allocation2 [shape = 'f32[16,32]{1,0:T(8,128)}', space=vmem, size = 0x2000, scoped, tag = 'scratch operand']
  %s0 = inlined_call_operand.vmem [shape: f32[2,8,4], index: 0, kind: input, shape index: {}]
  %s1 = inlined_call_operand.vmem [shape: f32[2,8,1], index: 1, kind: input, shape index: {}]
  %s2 = inlined_call_operand.hbm [shape: f32[232,128], index: 2, kind: input, shape index: {}]
  %s3 = inlined_call_operand.vmem [shape: f32[2,8,3], index: 3, kind: output, shape index: {}]
  %s4 = sld [smem:[#allocation0]]
  $region26: #{tpu_custom_call.1} parent=0
    _
  %s6 = ssub.s32 1, %s4
  %s7 = scalar_select 0, %s6, %s4
  $region1: #{tpu_custom_call.1} parent=0
    #allocation3 [shape = 'u8[118784]{0}', space=vmem, size = 0x1d000, scoped, tag = 'input window, operand 2, single buffered']
    #allocation4 [shape = 's32[1]{0}', space=sflag, size = 0x4, scoped, tag = 'scoped memory for tpu_custom_call.1']
    %8 = vsyncpa [#allocation4], 0
    // Predicated region
    $region2: #{tpu_custom_call.1} parent=1 // pred_check
      _
    $region3: #{tpu_custom_call.1} parent=1 // pred_check_branch
      %10 = sbr.rel (0) target = $region5
    $region4: #{tpu_custom_call.1} parent=1 // pred_region
      _
    $region5: #{tpu_custom_call.1} parent=1 // pred_fallthru
      _
    // Predicated region
    $region6: #{tpu_custom_call.1} parent=1 // pred_check
      _
    $region7: #{tpu_custom_call.1} parent=1 // pred_check_branch
      %12 = sbr.rel (0) target = $region9
    $region8: #{tpu_custom_call.1} parent=1 // pred_region
      _
    $region9: #{tpu_custom_call.1} parent=1 // pred_fallthru
      _
    // Predicated region
    $region10: #{tpu_custom_call.1} parent=1 // pred_check
      _
    $region11: #{tpu_custom_call.1} parent=1 // pred_check_branch
      %14 = sbr.rel (0) target = $region13
    $region12: #{tpu_custom_call.1} parent=1 // pred_region
      %s16 = ssub.s32 3712, 3712
      %17 = vsyncadd [#allocation4], %s16
      %s18 = sshll.u32 [#allocation3], 4
      %s19 = int_to_ptr.vmem [resolvable:$true] %s18
      %24 = dma.hbm_to_vmem [thread:$0]  %s2, 3712, %s19, [#allocation4], 128, 128, 8
    $region13: #{tpu_custom_call.1} parent=1 // pred_fallthru
      _
    // Predicated region
    $region14: #{tpu_custom_call.1} parent=1 // pred_check
      _
    $region15: #{tpu_custom_call.1} parent=1 // pred_check_branch
      %26 = sbr.rel (0) target = $region17
    $region16: #{tpu_custom_call.1} parent=1 // pred_region
      %27 = dma.done [#allocation4], 3712
    $region17: #{tpu_custom_call.1} parent=1 // pred_fallthru
      _
    %v28 = vld [vmem:[%s0] sm:$0xff]
    %v29 = vld [vmem:[%s0 + $0x8] sm:$0xff]
    %v30 = vld [vmem:[%s1] sm:$0xff]
    %v31 = vld [vmem:[%s1 + $0x8] sm:$0xff]
    %34 = vrot.lane.b32.xlu0 %v30, 4
    %v35 = vpop.permute.xlu0 %34
    %36 = vrot.lane.b32.xlu0 %v31, 4
    %v37 = vpop.permute.xlu0 %36
    %vm40 = vcmask 31744
    %v41 = vsel %vm40, %v28, %v35
    %v42 = vsel %vm40, %v29, %v37
    %vm43 = vcmask 39936
    %v44 = vsel %vm43, %v41, 0.0
    %v45 = vsel %vm43, %v42, 0.0
    %v46 = vld [vmem:[#allocation3] sm:$0xff]
    %v47 = vld [vmem:[#allocation3 + $0x8] sm:$0xff]
    %v48 = vld [vmem:[#allocation3 + $0x10] sm:$0xff]
    %v49 = vld [vmem:[#allocation3 + $0x18] sm:$0xff]
    %v50 = vld [vmem:[#allocation3 + $0x20] sm:$0xff]
    %v51 = vld [vmem:[#allocation3 + $0x28] sm:$0x1]
    %v52 = vld [vmem:[#allocation3 + $0x29] sm:$0x1]
    %v53 = vlaneseq
    %v54 = vshrl.u32 %v53, 7
    %v55 = vsub.s32 0, %v54
    %v56 = vrot.slane %v51, %v55
    %vm57 = vcmask 64512
    %v59 = vsel %vm57, %v44, 0
    %v62 = vsel %vm57, %v45, 0
    %64 = vmatprep.subr.mxu0 0.0
    %65 = vmatpush1.msra.mxu0 %v46
    %66 = vmatprep.subr.mxu0 0.0
    %67 = vmatpush1.msra.mxu0 0.0
    %68 = vmatprep.subr.mxu0 0.0
    %69 = vmatpush1.msra.mxu0 0.0
    %70 = vmatprep.subr.mxu0 0.0
    %71 = vmatpush1.msra.mxu0 0.0
    %72 = vmatprep.subr.mxu0 0.0
    %73 = vmatpush1.msra.mxu0 0.0
    %74 = vmatprep.subr.mxu0 0.0
    %75 = vmatpush1.msra.mxu0 0.0
    %76 = vmatprep.subr.mxu0 0.0
    %77 = vmatpush1.msra.mxu0 0.0
    %78 = vmatprep.subr.mxu0 0.0
    %79 = vmatpush1.msra.mxu0 0.0
    %80 = vmatprep.subr.mxu0 0.0
    %81 = vmatpush1.msra.mxu0 0.0
    %82 = vmatprep.subr.mxu0 0.0
    %83 = vmatpush1.msra.mxu0 0.0
    %84 = vmatprep.subr.mxu0 0.0
    %85 = vmatpush1.msra.mxu0 0.0
    %86 = vmatprep.subr.mxu0 0.0
    %87 = vmatpush1.msra.mxu0 0.0
    %88 = vmatprep.subr.mxu0 0.0
    %89 = vmatpush1.msra.mxu0 0.0
    %90 = vmatprep.subr.mxu0 0.0
    %91 = vmatpush1.msra.mxu0 0.0
    %92 = vmatprep.subr.mxu0 0.0
    %93 = vmatpush1.msra.mxu0 0.0
    %94 = vmatprep.subr.mxu0 0.0
    %95 = vmatpush1.msra.mxu0 0.0
    %96 = vmatprep.subr.mxu0 0.0
    %97 = vmatpush1.msra.mxu0 0.0
    %98 = vmatprep.subr.mxu0 0.0
    %99 = vmatpush1.msra.mxu0 0.0
    %100 = vmatprep.subr.mxu0 0.0
    %101 = vmatpush1.msra.mxu0 0.0
    %102 = vmatprep.subr.mxu0 0.0
    %103 = vmatpush1.msra.mxu0 0.0
    %104 = vmatprep.subr.mxu0 0.0
    %105 = vmatpush1.msra.mxu0 0.0
    %106 = vmatprep.subr.mxu0 0.0
    %107 = vmatpush1.msra.mxu0 0.0
    %108 = vmatprep.subr.mxu0 0.0
    %109 = vmatpush1.msra.mxu0 0.0
    %110 = vmatprep.subr.mxu0 0.0
    %111 = vmatpush1.msra.mxu0 0.0
    %112 = vmatprep.subr.mxu0 0.0
    %113 = vmatpush1.msra.mxu0 0.0
    %114 = vmatprep.subr.mxu0 0.0
    %115 = vmatpush1.msra.mxu0 0.0
    %116 = vmatprep.subr.mxu0 0.0
    %117 = vmatpush1.msra.mxu0 0.0
    %118 = vmatprep.subr.mxu0 0.0
    %119 = vmatpush1.msra.mxu0 0.0
    %120 = vmatprep.subr.mxu0 0.0
    %121 = vmatpush1.msra.mxu0 0.0
    %122 = vmatprep.subr.mxu0 0.0
    %123 = vmatpush1.msra.mxu0 0.0
    %124 = vmatprep.subr.mxu0 0.0
    %125 = vmatpush1.msra.mxu0 0.0
    %126 = vmatprep.subr.mxu0 0.0
    %127 = vmatpush1.msra.mxu0 0.0
    %128 = vmatprep.mubr.f32.mxu0 0.0
    %129 = vmatmul.mubr.f32.gmra.mrb[0].mxu0 %v59
    %v130 = vpop.f32.mrb[0].mxu0
    %v131 = vadd.f32 %v56, %v130
    %v132 = vpop.f32.mrb[0].mxu0
    %133 = vmatprep.mubr.f32.mxu0 0.0
    %134 = vmatmul.mubr.f32.gmra.mrb[0].mxu0 %v62
    %v135 = vpop.f32.mrb[0].mxu0
    %v136 = vadd.f32 %v56, %v135
    %v137 = vpop.f32.mrb[0].mxu0
    %138 = vdwg.mxu0
    %v140 = vrot.slane %v136, 7
    %vm142 = vcmask 1040384
    %v143 = vsel %vm142, %v131, %v140
    %v144 = vxor.u32 %v143, 2147483648
    %v145 = vmul.f32 %v144, 1.442695
    %v146 = vpow.pop %v145
    %v147 = vadd.f32 %v146, 1.0
    %v148 = vrcp.pop %v147
    %v149 = vmul.f32 1.0, %v148
    %v150 = vlaneseq
    %v151 = vshrl.u32 %v150, 7
    %v152 = vsub.s32 0, %v151
    %v153 = vrot.slane %v52, %v152
    %v154 = vmul.f32 %v149, %v153
    %156 = vrot.lane.b32.xlu0 %v154, 64
    %v157 = vpop.permute.xlu0 %156
    %v159 = vadd.f32 %v143, %v157
    %v160 = vtanh.pop %v159
    %v161 = vsub.f32 1.0, %v149
    %163 = vrot.lane.b32.xlu0 %v160, 96
    %v164 = vpop.permute.xlu0 %163
    %v166 = vmul.f32 %v161, %v164
    %168 = vrot.lane.b32.xlu0 %v166, 96
    %v169 = vpop.permute.xlu0 %168
    %vm171 = vcmask 254976
    %172 = vst.msk [vmem:[#allocation2] sm:$0x3] %vm171, %v169
    %v174 = vrot.slane %v131, 1
    %v176 = vsel %vm142, %v174, %v136
    %vm177 = vcmask 261120
    %v178 = vsel %vm177, %v169, 0
    %180 = vmatprep.subr.mxu0 0.0
    %181 = vmatpush1.msra.mxu0 %v47
    %182 = vmatprep.subr.mxu0 0.0
    %183 = vmatpush1.msra.mxu0 %v48
    %184 = vmatprep.subr.mxu0 0.0
    %185 = vmatpush1.msra.mxu0 %v49
    %186 = vmatprep.subr.mxu0 0.0
    %187 = vmatpush1.msra.mxu0 %v50
    %188 = vmatprep.subr.mxu0 0.0
    %189 = vmatpush1.msra.mxu0 0.0
    %190 = vmatprep.subr.mxu0 0.0
    %191 = vmatpush1.msra.mxu0 0.0
    %192 = vmatprep.subr.mxu0 0.0
    %193 = vmatpush1.msra.mxu0 0.0
    %194 = vmatprep.subr.mxu0 0.0
    %195 = vmatpush1.msra.mxu0 0.0
    %196 = vmatprep.subr.mxu0 0.0
    %197 = vmatpush1.msra.mxu0 0.0
    %198 = vmatprep.subr.mxu0 0.0
    %199 = vmatpush1.msra.mxu0 0.0
    %200 = vmatprep.subr.mxu0 0.0
    %201 = vmatpush1.msra.mxu0 0.0
    %202 = vmatprep.subr.mxu0 0.0
    %203 = vmatpush1.msra.mxu0 0.0
    %204 = vmatprep.subr.mxu0 0.0
    %205 = vmatpush1.msra.mxu0 0.0
    %206 = vmatprep.subr.mxu0 0.0
    %207 = vmatpush1.msra.mxu0 0.0
    %208 = vmatprep.subr.mxu0 0.0
    %209 = vmatpush1.msra.mxu0 0.0
    %210 = vmatprep.subr.mxu0 0.0
    %211 = vmatpush1.msra.mxu0 0.0
    %212 = vmatprep.subr.mxu0 0.0
    %213 = vmatpush1.msra.mxu0 0.0
    %214 = vmatprep.subr.mxu0 0.0
    %215 = vmatpush1.msra.mxu0 0.0
    %216 = vmatprep.subr.mxu0 0.0
    %217 = vmatpush1.msra.mxu0 0.0
    %218 = vmatprep.subr.mxu0 0.0
    %219 = vmatpush1.msra.mxu0 0.0
    %220 = vmatprep.subr.mxu0 0.0
    %221 = vmatpush1.msra.mxu0 0.0
    %222 = vmatprep.subr.mxu0 0.0
    %223 = vmatpush1.msra.mxu0 0.0
    %224 = vmatprep.subr.mxu0 0.0
    %225 = vmatpush1.msra.mxu0 0.0
    %226 = vmatprep.subr.mxu0 0.0
    %227 = vmatpush1.msra.mxu0 0.0
    %228 = vmatprep.subr.mxu0 0.0
    %229 = vmatpush1.msra.mxu0 0.0
    %230 = vmatprep.subr.mxu0 0.0
    %231 = vmatpush1.msra.mxu0 0.0
    %232 = vmatprep.subr.mxu0 0.0
    %233 = vmatpush1.msra.mxu0 0.0
    %234 = vmatprep.subr.mxu0 0.0
    %235 = vmatpush1.msra.mxu0 0.0
    %236 = vmatprep.subr.mxu0 0.0
    %237 = vmatpush1.msra.mxu0 0.0
    %238 = vmatprep.subr.mxu0 0.0
    %239 = vmatpush1.msra.mxu0 0.0
    %240 = vmatprep.subr.mxu0 0.0
    %241 = vmatpush1.msra.mxu0 0.0
    %242 = vmatprep.subr.mxu0 0.0
    %243 = vmatpush1.msra.mxu0 0.0
    %244 = vmatprep.mubr.f32.mxu0 0.0
    %245 = vmatmul.mubr.f32.gmra.mrb[0].mxu0 %v178
    %v246 = vpop.f32.mrb[0].mxu0
    %v247 = vadd.f32 0.0, %v246
    %v248 = vpop.f32.mrb[0].mxu0
    %249 = vdwg.mxu0
    %v250 = vadd.f32 %v176, %v247
    %v251 = vxor.u32 %v250, 2147483648
    %v252 = vmul.f32 %v251, 1.442695
    %v253 = vpow.pop %v252
    %v254 = vadd.f32 %v253, 1.0
    %v255 = vrcp.pop %v254
    %v256 = vmul.f32 1.0, %v255
    %258 = vrot.lane.b32.xlu0 %v153, 64
    %v259 = vpop.permute.xlu0 %258
    %v261 = vadd.f32 %v247, %v259
    %263 = vrot.lane.b32.xlu0 %v261, 64
    %v264 = vpop.permute.xlu0 %263
    %v266 = vmul.f32 %v256, %v264
    %268 = vrot.lane.b32.xlu0 %v266, 64
    %v269 = vpop.permute.xlu0 %268
    %v271 = vadd.f32 %v176, %v269
    %v272 = vtanh.pop %v271
    %v273 = vsub.f32 1.0, %v256
    %275 = vrot.lane.b32.xlu0 %v272, 96
    %v276 = vpop.permute.xlu0 %275
    %v278 = vmul.f32 %v273, %v276
    %v279 = vmul.f32 %v256, %v166
    %v280 = vadd.f32 %v278, %v279
    %282 = vrot.lane.b32.xlu0 %v280, 96
    %v283 = vpop.permute.xlu0 %282
    %285 = vst.msk [vmem:[#allocation2 + $0x2] sm:$0x3] %vm171, %v283
    %v286 = vrot.slane %v131, 2
    %v288 = vrot.slane %v136, 1
    %v290 = vsel %vm142, %v286, %v288
    %v291 = vsel %vm177, %v283, 0
    %293 = vmatprep.subr.mxu0 0.0
    %294 = vmatpush1.msra.mxu0 %v47
    %295 = vmatprep.subr.mxu0 0.0
    %296 = vmatpush1.msra.mxu0 %v48
    %297 = vmatprep.subr.mxu0 0.0
    %298 = vmatpush1.msra.mxu0 %v49
    %299 = vmatprep.subr.mxu0 0.0
    %300 = vmatpush1.msra.mxu0 %v50
    %301 = vmatprep.subr.mxu0 0.0
    %302 = vmatpush1.msra.mxu0 0.0
    %303 = vmatprep.subr.mxu0 0.0
    %304 = vmatpush1.msra.mxu0 0.0
    %305 = vmatprep.subr.mxu0 0.0
    %306 = vmatpush1.msra.mxu0 0.0
    %307 = vmatprep.subr.mxu0 0.0
    %308 = vmatpush1.msra.mxu0 0.0
    %309 = vmatprep.subr.mxu0 0.0
    %310 = vmatpush1.msra.mxu0 0.0
    %311 = vmatprep.subr.mxu0 0.0
    %312 = vmatpush1.msra.mxu0 0.0
    %313 = vmatprep.subr.mxu0 0.0
    %314 = vmatpush1.msra.mxu0 0.0
    %315 = vmatprep.subr.mxu0 0.0
    %316 = vmatpush1.msra.mxu0 0.0
    %317 = vmatprep.subr.mxu0 0.0
    %318 = vmatpush1.msra.mxu0 0.0
    %319 = vmatprep.subr.mxu0 0.0
    %320 = vmatpush1.msra.mxu0 0.0
    %321 = vmatprep.subr.mxu0 0.0
    %322 = vmatpush1.msra.mxu0 0.0
    %323 = vmatprep.subr.mxu0 0.0
    %324 = vmatpush1.msra.mxu0 0.0
    %325 = vmatprep.subr.mxu0 0.0
    %326 = vmatpush1.msra.mxu0 0.0
    %327 = vmatprep.subr.mxu0 0.0
    %328 = vmatpush1.msra.mxu0 0.0
    %329 = vmatprep.subr.mxu0 0.0
    %330 = vmatpush1.msra.mxu0 0.0
    %331 = vmatprep.subr.mxu0 0.0
    %332 = vmatpush1.msra.mxu0 0.0
    %333 = vmatprep.subr.mxu0 0.0
    %334 = vmatpush1.msra.mxu0 0.0
    %335 = vmatprep.subr.mxu0 0.0
    %336 = vmatpush1.msra.mxu0 0.0
    %337 = vmatprep.subr.mxu0 0.0
    %338 = vmatpush1.msra.mxu0 0.0
    %339 = vmatprep.subr.mxu0 0.0
    %340 = vmatpush1.msra.mxu0 0.0
    %341 = vmatprep.subr.mxu0 0.0
    %342 = vmatpush1.msra.mxu0 0.0
    %343 = vmatprep.subr.mxu0 0.0
    %344 = vmatpush1.msra.mxu0 0.0
    %345 = vmatprep.subr.mxu0 0.0
    %346 = vmatpush1.msra.mxu0 0.0
    %347 = vmatprep.subr.mxu0 0.0
    %348 = vmatpush1.msra.mxu0 0.0
    %349 = vmatprep.subr.mxu0 0.0
    %350 = vmatpush1.msra.mxu0 0.0
    %351 = vmatprep.subr.mxu0 0.0
    %352 = vmatpush1.msra.mxu0 0.0
    %353 = vmatprep.subr.mxu0 0.0
    %354 = vmatpush1.msra.mxu0 0.0
    %355 = vmatprep.subr.mxu0 0.0
    %356 = vmatpush1.msra.mxu0 0.0
    %357 = vmatprep.mubr.f32.mxu0 0.0
    %358 = vmatmul.mubr.f32.gmra.mrb[0].mxu0 %v291
    %v359 = vpop.f32.mrb[0].mxu0
    %v360 = vadd.f32 0.0, %v359
    %v361 = vpop.f32.mrb[0].mxu0
    %362 = vdwg.mxu0
    %v363 = vadd.f32 %v290, %v360
    %v364 = vxor.u32 %v363, 2147483648
    %v365 = vmul.f32 %v364, 1.442695
    %v366 = vpow.pop %v365
    %v367 = vadd.f32 %v366, 1.0
    %v368 = vrcp.pop %v367
    %v369 = vmul.f32 1.0, %v368
    %v370 = vadd.f32 %v360, %v259
    %372 = vrot.lane.b32.xlu0 %v370, 64
    %v373 = vpop.permute.xlu0 %372
    %v375 = vmul.f32 %v369, %v373
    %377 = vrot.lane.b32.xlu0 %v375, 64
    %v378 = vpop.permute.xlu0 %377
    %v380 = vadd.f32 %v290, %v378
    %v381 = vtanh.pop %v380
    %v382 = vsub.f32 1.0, %v369
    %384 = vrot.lane.b32.xlu0 %v381, 96
    %v385 = vpop.permute.xlu0 %384
    %v387 = vmul.f32 %v382, %v385
    %v388 = vmul.f32 %v369, %v280
    %v389 = vadd.f32 %v387, %v388
    %391 = vrot.lane.b32.xlu0 %v389, 96
    %v392 = vpop.permute.xlu0 %391
    %394 = vst.msk [vmem:[#allocation2 + $0x4] sm:$0x3] %vm171, %v392
    %v395 = vrot.slane %v131, 3
    %v397 = vrot.slane %v136, 2
    %v399 = vsel %vm142, %v395, %v397
    %v400 = vsel %vm177, %v392, 0
    %402 = vmatprep.subr.mxu0 0.0
    %403 = vmatpush1.msra.mxu0 %v47
    %404 = vmatprep.subr.mxu0 0.0
    %405 = vmatpush1.msra.mxu0 %v48
    %406 = vmatprep.subr.mxu0 0.0
    %407 = vmatpush1.msra.mxu0 %v49
    %408 = vmatprep.subr.mxu0 0.0
    %409 = vmatpush1.msra.mxu0 %v50
    %410 = vmatprep.subr.mxu0 0.0
    %411 = vmatpush1.msra.mxu0 0.0
    %412 = vmatprep.subr.mxu0 0.0
    %413 = vmatpush1.msra.mxu0 0.0
    %414 = vmatprep.subr.mxu0 0.0
    %415 = vmatpush1.msra.mxu0 0.0
    %416 = vmatprep.subr.mxu0 0.0
    %417 = vmatpush1.msra.mxu0 0.0
    %418 = vmatprep.subr.mxu0 0.0
    %419 = vmatpush1.msra.mxu0 0.0
    %420 = vmatprep.subr.mxu0 0.0
    %421 = vmatpush1.msra.mxu0 0.0
    %422 = vmatprep.subr.mxu0 0.0
    %423 = vmatpush1.msra.mxu0 0.0
    %424 = vmatprep.subr.mxu0 0.0
    %425 = vmatpush1.msra.mxu0 0.0
    %426 = vmatprep.subr.mxu0 0.0
    %427 = vmatpush1.msra.mxu0 0.0
    %428 = vmatprep.subr.mxu0 0.0
    %429 = vmatpush1.msra.mxu0 0.0
    %430 = vmatprep.subr.mxu0 0.0
    %431 = vmatpush1.msra.mxu0 0.0
    %432 = vmatprep.subr.mxu0 0.0
    %433 = vmatpush1.msra.mxu0 0.0
    %434 = vmatprep.subr.mxu0 0.0
    %435 = vmatpush1.msra.mxu0 0.0
    %436 = vmatprep.subr.mxu0 0.0
    %437 = vmatpush1.msra.mxu0 0.0
    %438 = vmatprep.subr.mxu0 0.0
    %439 = vmatpush1.msra.mxu0 0.0
    %440 = vmatprep.subr.mxu0 0.0
    %441 = vmatpush1.msra.mxu0 0.0
    %442 = vmatprep.subr.mxu0 0.0
    %443 = vmatpush1.msra.mxu0 0.0
    %444 = vmatprep.subr.mxu0 0.0
    %445 = vmatpush1.msra.mxu0 0.0
    %446 = vmatprep.subr.mxu0 0.0
    %447 = vmatpush1.msra.mxu0 0.0
    %448 = vmatprep.subr.mxu0 0.0
    %449 = vmatpush1.msra.mxu0 0.0
    %450 = vmatprep.subr.mxu0 0.0
    %451 = vmatpush1.msra.mxu0 0.0
    %452 = vmatprep.subr.mxu0 0.0
    %453 = vmatpush1.msra.mxu0 0.0
    %454 = vmatprep.subr.mxu0 0.0
    %455 = vmatpush1.msra.mxu0 0.0
    %456 = vmatprep.subr.mxu0 0.0
    %457 = vmatpush1.msra.mxu0 0.0
    %458 = vmatprep.subr.mxu0 0.0
    %459 = vmatpush1.msra.mxu0 0.0
    %460 = vmatprep.subr.mxu0 0.0
    %461 = vmatpush1.msra.mxu0 0.0
    %462 = vmatprep.subr.mxu0 0.0
    %463 = vmatpush1.msra.mxu0 0.0
    %464 = vmatprep.subr.mxu0 0.0
    %465 = vmatpush1.msra.mxu0 0.0
    %466 = vmatprep.mubr.f32.mxu0 0.0
    %467 = vmatmul.mubr.f32.gmra.mrb[0].mxu0 %v400
    %v468 = vpop.f32.mrb[0].mxu0
    %v469 = vadd.f32 0.0, %v468
    %v470 = vpop.f32.mrb[0].mxu0
    %471 = vdwg.mxu0
    %v472 = vadd.f32 %v399, %v469
    %v473 = vxor.u32 %v472, 2147483648
    %v474 = vmul.f32 %v473, 1.442695
    %v475 = vpow.pop %v474
    %v476 = vadd.f32 %v475, 1.0
    %v477 = vrcp.pop %v476
    %v478 = vmul.f32 1.0, %v477
    %v479 = vadd.f32 %v469, %v259
    %481 = vrot.lane.b32.xlu0 %v479, 64
    %v482 = vpop.permute.xlu0 %481
    %v484 = vmul.f32 %v478, %v482
    %486 = vrot.lane.b32.xlu0 %v484, 64
    %v487 = vpop.permute.xlu0 %486
    %v489 = vadd.f32 %v399, %v487
    %v490 = vtanh.pop %v489
    %v491 = vsub.f32 1.0, %v478
    %493 = vrot.lane.b32.xlu0 %v490, 96
    %v494 = vpop.permute.xlu0 %493
    %v496 = vmul.f32 %v491, %v494
    %v497 = vmul.f32 %v478, %v389
    %v498 = vadd.f32 %v496, %v497
    %500 = vrot.lane.b32.xlu0 %v498, 96
    %v501 = vpop.permute.xlu0 %500
    %503 = vst.msk [vmem:[#allocation2 + $0x6] sm:$0x3] %vm171, %v501
    %v504 = vrot.slane %v131, 4
    %v506 = vrot.slane %v136, 3
    %v508 = vsel %vm142, %v504, %v506
    %v509 = vsel %vm177, %v501, 0
    %511 = vmatprep.subr.mxu0 0.0
    %512 = vmatpush1.msra.mxu0 %v47
    %513 = vmatprep.subr.mxu0 0.0
    %514 = vmatpush1.msra.mxu0 %v48
    %515 = vmatprep.subr.mxu0 0.0
    %516 = vmatpush1.msra.mxu0 %v49
    %517 = vmatprep.subr.mxu0 0.0
    %518 = vmatpush1.msra.mxu0 %v50
    %519 = vmatprep.subr.mxu0 0.0
    %520 = vmatpush1.msra.mxu0 0.0
    %521 = vmatprep.subr.mxu0 0.0
    %522 = vmatpush1.msra.mxu0 0.0
    %523 = vmatprep.subr.mxu0 0.0
    %524 = vmatpush1.msra.mxu0 0.0
    %525 = vmatprep.subr.mxu0 0.0
    %526 = vmatpush1.msra.mxu0 0.0
    %527 = vmatprep.subr.mxu0 0.0
    %528 = vmatpush1.msra.mxu0 0.0
    %529 = vmatprep.subr.mxu0 0.0
    %530 = vmatpush1.msra.mxu0 0.0
    %531 = vmatprep.subr.mxu0 0.0
    %532 = vmatpush1.msra.mxu0 0.0
    %533 = vmatprep.subr.mxu0 0.0
    %534 = vmatpush1.msra.mxu0 0.0
    %535 = vmatprep.subr.mxu0 0.0
    %536 = vmatpush1.msra.mxu0 0.0
    %537 = vmatprep.subr.mxu0 0.0
    %538 = vmatpush1.msra.mxu0 0.0
    %539 = vmatprep.subr.mxu0 0.0
    %540 = vmatpush1.msra.mxu0 0.0
    %541 = vmatprep.subr.mxu0 0.0
    %542 = vmatpush1.msra.mxu0 0.0
    %543 = vmatprep.subr.mxu0 0.0
    %544 = vmatpush1.msra.mxu0 0.0
    %545 = vmatprep.subr.mxu0 0.0
    %546 = vmatpush1.msra.mxu0 0.0
    %547 = vmatprep.subr.mxu0 0.0
    %548 = vmatpush1.msra.mxu0 0.0
    %549 = vmatprep.subr.mxu0 0.0
    %550 = vmatpush1.msra.mxu0 0.0
    %551 = vmatprep.subr.mxu0 0.0
    %552 = vmatpush1.msra.mxu0 0.0
    %553 = vmatprep.subr.mxu0 0.0
    %554 = vmatpush1.msra.mxu0 0.0
    %555 = vmatprep.subr.mxu0 0.0
    %556 = vmatpush1.msra.mxu0 0.0
    %557 = vmatprep.subr.mxu0 0.0
    %558 = vmatpush1.msra.mxu0 0.0
    %559 = vmatprep.subr.mxu0 0.0
    %560 = vmatpush1.msra.mxu0 0.0
    %561 = vmatprep.subr.mxu0 0.0
    %562 = vmatpush1.msra.mxu0 0.0
    %563 = vmatprep.subr.mxu0 0.0
    %564 = vmatpush1.msra.mxu0 0.0
    %565 = vmatprep.subr.mxu0 0.0
    %566 = vmatpush1.msra.mxu0 0.0
    %567 = vmatprep.subr.mxu0 0.0
    %568 = vmatpush1.msra.mxu0 0.0
    %569 = vmatprep.subr.mxu0 0.0
    %570 = vmatpush1.msra.mxu0 0.0
    %571 = vmatprep.subr.mxu0 0.0
    %572 = vmatpush1.msra.mxu0 0.0
    %573 = vmatprep.subr.mxu0 0.0
    %574 = vmatpush1.msra.mxu0 0.0
    %575 = vmatprep.mubr.f32.mxu0 0.0
    %576 = vmatmul.mubr.f32.gmra.mrb[0].mxu0 %v509
    %v577 = vpop.f32.mrb[0].mxu0
    %v578 = vadd.f32 0.0, %v577
    %v579 = vpop.f32.mrb[0].mxu0
    %580 = vdwg.mxu0
    %v581 = vadd.f32 %v508, %v578
    %v582 = vxor.u32 %v581, 2147483648
    %v583 = vmul.f32 %v582, 1.442695
    %v584 = vpow.pop %v583
    %v585 = vadd.f32 %v584, 1.0
    %v586 = vrcp.pop %v585
    %v587 = vmul.f32 1.0, %v586
    %v588 = vadd.f32 %v578, %v259
    %590 = vrot.lane.b32.xlu0 %v588, 64
    %v591 = vpop.permute.xlu0 %590
    %v593 = vmul.f32 %v587, %v591
    %595 = vrot.lane.b32.xlu0 %v593, 64
    %v596 = vpop.permute.xlu0 %595
    %v598 = vadd.f32 %v508, %v596
    %v599 = vtanh.pop %v598
    %v600 = vsub.f32 1.0, %v587
    %602 = vrot.lane.b32.xlu0 %v599, 96
    %v603 = vpop.permute.xlu0 %602
    %v605 = vmul.f32 %v600, %v603
    %v606 = vmul.f32 %v587, %v498
    %v607 = vadd.f32 %v605, %v606
    %609 = vrot.lane.b32.xlu0 %v607, 96
    %v610 = vpop.permute.xlu0 %609
    %612 = vst.msk [vmem:[#allocation2 + $0x8] sm:$0x3] %vm171, %v610
    %v613 = vrot.slane %v131, 5
    %v615 = vrot.slane %v136, 4
    %v617 = vsel %vm142, %v613, %v615
    %v618 = vsel %vm177, %v610, 0
    %620 = vmatprep.subr.mxu0 0.0
    %621 = vmatpush1.msra.mxu0 %v47
    %622 = vmatprep.subr.mxu0 0.0
    %623 = vmatpush1.msra.mxu0 %v48
    %624 = vmatprep.subr.mxu0 0.0
    %625 = vmatpush1.msra.mxu0 %v49
    %626 = vmatprep.subr.mxu0 0.0
    %627 = vmatpush1.msra.mxu0 %v50
    %628 = vmatprep.subr.mxu0 0.0
    %629 = vmatpush1.msra.mxu0 0.0
    %630 = vmatprep.subr.mxu0 0.0
    %631 = vmatpush1.msra.mxu0 0.0
    %632 = vmatprep.subr.mxu0 0.0
    %633 = vmatpush1.msra.mxu0 0.0
    %634 = vmatprep.subr.mxu0 0.0
    %635 = vmatpush1.msra.mxu0 0.0
    %636 = vmatprep.subr.mxu0 0.0
    %637 = vmatpush1.msra.mxu0 0.0
    %638 = vmatprep.subr.mxu0 0.0
    %639 = vmatpush1.msra.mxu0 0.0
    %640 = vmatprep.subr.mxu0 0.0
    %641 = vmatpush1.msra.mxu0 0.0
    %642 = vmatprep.subr.mxu0 0.0
    %643 = vmatpush1.msra.mxu0 0.0
    %644 = vmatprep.subr.mxu0 0.0
    %645 = vmatpush1.msra.mxu0 0.0
    %646 = vmatprep.subr.mxu0 0.0
    %647 = vmatpush1.msra.mxu0 0.0
    %648 = vmatprep.subr.mxu0 0.0
    %649 = vmatpush1.msra.mxu0 0.0
    %650 = vmatprep.subr.mxu0 0.0
    %651 = vmatpush1.msra.mxu0 0.0
    %652 = vmatprep.subr.mxu0 0.0
    %653 = vmatpush1.msra.mxu0 0.0
    %654 = vmatprep.subr.mxu0 0.0
    %655 = vmatpush1.msra.mxu0 0.0
    %656 = vmatprep.subr.mxu0 0.0
    %657 = vmatpush1.msra.mxu0 0.0
    %658 = vmatprep.subr.mxu0 0.0
    %659 = vmatpush1.msra.mxu0 0.0
    %660 = vmatprep.subr.mxu0 0.0
    %661 = vmatpush1.msra.mxu0 0.0
    %662 = vmatprep.subr.mxu0 0.0
    %663 = vmatpush1.msra.mxu0 0.0
    %664 = vmatprep.subr.mxu0 0.0
    %665 = vmatpush1.msra.mxu0 0.0
    %666 = vmatprep.subr.mxu0 0.0
    %667 = vmatpush1.msra.mxu0 0.0
    %668 = vmatprep.subr.mxu0 0.0
    %669 = vmatpush1.msra.mxu0 0.0
    %670 = vmatprep.subr.mxu0 0.0
    %671 = vmatpush1.msra.mxu0 0.0
    %672 = vmatprep.subr.mxu0 0.0
    %673 = vmatpush1.msra.mxu0 0.0
    %674 = vmatprep.subr.mxu0 0.0
    %675 = vmatpush1.msra.mxu0 0.0
    %676 = vmatprep.subr.mxu0 0.0
    %677 = vmatpush1.msra.mxu0 0.0
    %678 = vmatprep.subr.mxu0 0.0
    %679 = vmatpush1.msra.mxu0 0.0
    %680 = vmatprep.subr.mxu0 0.0
    %681 = vmatpush1.msra.mxu0 0.0
    %682 = vmatprep.subr.mxu0 0.0
    %683 = vmatpush1.msra.mxu0 0.0
    %684 = vmatprep.mubr.f32.mxu0 0.0
    %685 = vmatmul.mubr.f32.gmra.mrb[0].mxu0 %v618
    %v686 = vpop.f32.mrb[0].mxu0
    %v687 = vadd.f32 0.0, %v686
    %v688 = vpop.f32.mrb[0].mxu0
    %689 = vdwg.mxu0
    %v690 = vadd.f32 %v617, %v687
    %v691 = vxor.u32 %v690, 2147483648
    %v692 = vmul.f32 %v691, 1.442695
    %v693 = vpow.pop %v692
    %v694 = vadd.f32 %v693, 1.0
    %v695 = vrcp.pop %v694
    %v696 = vmul.f32 1.0, %v695
    %v697 = vadd.f32 %v687, %v259
    %699 = vrot.lane.b32.xlu0 %v697, 64
    %v700 = vpop.permute.xlu0 %699
    %v702 = vmul.f32 %v696, %v700
    %704 = vrot.lane.b32.xlu0 %v702, 64
    %v705 = vpop.permute.xlu0 %704
    %v707 = vadd.f32 %v617, %v705
    %v708 = vtanh.pop %v707
    %v709 = vsub.f32 1.0, %v696
    %711 = vrot.lane.b32.xlu0 %v708, 96
    %v712 = vpop.permute.xlu0 %711
    %v714 = vmul.f32 %v709, %v712
    %v715 = vmul.f32 %v696, %v607
    %v716 = vadd.f32 %v714, %v715
    %718 = vrot.lane.b32.xlu0 %v716, 96
    %v719 = vpop.permute.xlu0 %718
    %721 = vst.msk [vmem:[#allocation2 + $0xa] sm:$0x3] %vm171, %v719
    %v722 = vrot.slane %v131, 6
    %v724 = vrot.slane %v136, 5
    %v726 = vsel %vm142, %v722, %v724
    %v727 = vsel %vm177, %v719, 0
    %729 = vmatprep.subr.mxu0 0.0
    %730 = vmatpush1.msra.mxu0 %v47
    %731 = vmatprep.subr.mxu0 0.0
    %732 = vmatpush1.msra.mxu0 %v48
    %733 = vmatprep.subr.mxu0 0.0
    %734 = vmatpush1.msra.mxu0 %v49
    %735 = vmatprep.subr.mxu0 0.0
    %736 = vmatpush1.msra.mxu0 %v50
    %737 = vmatprep.subr.mxu0 0.0
    %738 = vmatpush1.msra.mxu0 0.0
    %739 = vmatprep.subr.mxu0 0.0
    %740 = vmatpush1.msra.mxu0 0.0
    %741 = vmatprep.subr.mxu0 0.0
    %742 = vmatpush1.msra.mxu0 0.0
    %743 = vmatprep.subr.mxu0 0.0
    %744 = vmatpush1.msra.mxu0 0.0
    %745 = vmatprep.subr.mxu0 0.0
    %746 = vmatpush1.msra.mxu0 0.0
    %747 = vmatprep.subr.mxu0 0.0
    %748 = vmatpush1.msra.mxu0 0.0
    %749 = vmatprep.subr.mxu0 0.0
    %750 = vmatpush1.msra.mxu0 0.0
    %751 = vmatprep.subr.mxu0 0.0
    %752 = vmatpush1.msra.mxu0 0.0
    %753 = vmatprep.subr.mxu0 0.0
    %754 = vmatpush1.msra.mxu0 0.0
    %755 = vmatprep.subr.mxu0 0.0
    %756 = vmatpush1.msra.mxu0 0.0
    %757 = vmatprep.subr.mxu0 0.0
    %758 = vmatpush1.msra.mxu0 0.0
    %759 = vmatprep.subr.mxu0 0.0
    %760 = vmatpush1.msra.mxu0 0.0
    %761 = vmatprep.subr.mxu0 0.0
    %762 = vmatpush1.msra.mxu0 0.0
    %763 = vmatprep.subr.mxu0 0.0
    %764 = vmatpush1.msra.mxu0 0.0
    %765 = vmatprep.subr.mxu0 0.0
    %766 = vmatpush1.msra.mxu0 0.0
    %767 = vmatprep.subr.mxu0 0.0
    %768 = vmatpush1.msra.mxu0 0.0
    %769 = vmatprep.subr.mxu0 0.0
    %770 = vmatpush1.msra.mxu0 0.0
    %771 = vmatprep.subr.mxu0 0.0
    %772 = vmatpush1.msra.mxu0 0.0
    %773 = vmatprep.subr.mxu0 0.0
    %774 = vmatpush1.msra.mxu0 0.0
    %775 = vmatprep.subr.mxu0 0.0
    %776 = vmatpush1.msra.mxu0 0.0
    %777 = vmatprep.subr.mxu0 0.0
    %778 = vmatpush1.msra.mxu0 0.0
    %779 = vmatprep.subr.mxu0 0.0
    %780 = vmatpush1.msra.mxu0 0.0
    %781 = vmatprep.subr.mxu0 0.0
    %782 = vmatpush1.msra.mxu0 0.0
    %783 = vmatprep.subr.mxu0 0.0
    %784 = vmatpush1.msra.mxu0 0.0
    %785 = vmatprep.subr.mxu0 0.0
    %786 = vmatpush1.msra.mxu0 0.0
    %787 = vmatprep.subr.mxu0 0.0
    %788 = vmatpush1.msra.mxu0 0.0
    %789 = vmatprep.subr.mxu0 0.0
    %790 = vmatpush1.msra.mxu0 0.0
    %791 = vmatprep.subr.mxu0 0.0
    %792 = vmatpush1.msra.mxu0 0.0
    %793 = vmatprep.mubr.f32.mxu0 0.0
    %794 = vmatmul.mubr.f32.gmra.mrb[0].mxu0 %v727
    %v795 = vpop.f32.mrb[0].mxu0
    %v796 = vadd.f32 0.0, %v795
    %v797 = vpop.f32.mrb[0].mxu0
    %798 = vdwg.mxu0
    %v799 = vadd.f32 %v726, %v796
    %v800 = vxor.u32 %v799, 2147483648
    %v801 = vmul.f32 %v800, 1.442695
    %v802 = vpow.pop %v801
    %v803 = vadd.f32 %v802, 1.0
    %v804 = vrcp.pop %v803
    %v805 = vmul.f32 1.0, %v804
    %v806 = vadd.f32 %v796, %v259
    %808 = vrot.lane.b32.xlu0 %v806, 64
    %v809 = vpop.permute.xlu0 %808
    %v811 = vmul.f32 %v805, %v809
    %813 = vrot.lane.b32.xlu0 %v811, 64
    %v814 = vpop.permute.xlu0 %813
    %v816 = vadd.f32 %v726, %v814
    %v817 = vtanh.pop %v816
    %v818 = vsub.f32 1.0, %v805
    %820 = vrot.lane.b32.xlu0 %v817, 96
    %v821 = vpop.permute.xlu0 %820
    %v823 = vmul.f32 %v818, %v821
    %v824 = vmul.f32 %v805, %v716
    %v825 = vadd.f32 %v823, %v824
    %827 = vrot.lane.b32.xlu0 %v825, 96
    %v828 = vpop.permute.xlu0 %827
    %830 = vst.msk [vmem:[#allocation2 + $0xc] sm:$0x3] %vm171, %v828
    %v831 = vrot.slane %v131, 7
    %v833 = vrot.slane %v136, 6
    %v835 = vsel %vm142, %v831, %v833
    %v836 = vsel %vm177, %v828, 0
    %838 = vmatprep.subr.mxu0 0.0
    %839 = vmatpush1.msra.mxu0 %v47
    %840 = vmatprep.subr.mxu0 0.0
    %841 = vmatpush1.msra.mxu0 %v48
    %842 = vmatprep.subr.mxu0 0.0
    %843 = vmatpush1.msra.mxu0 %v49
    %844 = vmatprep.subr.mxu0 0.0
    %845 = vmatpush1.msra.mxu0 %v50
    %846 = vmatprep.subr.mxu0 0.0
    %847 = vmatpush1.msra.mxu0 0.0
    %848 = vmatprep.subr.mxu0 0.0
    %849 = vmatpush1.msra.mxu0 0.0
    %850 = vmatprep.subr.mxu0 0.0
    %851 = vmatpush1.msra.mxu0 0.0
    %852 = vmatprep.subr.mxu0 0.0
    %853 = vmatpush1.msra.mxu0 0.0
    %854 = vmatprep.subr.mxu0 0.0
    %855 = vmatpush1.msra.mxu0 0.0
    %856 = vmatprep.subr.mxu0 0.0
    %857 = vmatpush1.msra.mxu0 0.0
    %858 = vmatprep.subr.mxu0 0.0
    %859 = vmatpush1.msra.mxu0 0.0
    %860 = vmatprep.subr.mxu0 0.0
    %861 = vmatpush1.msra.mxu0 0.0
    %862 = vmatprep.subr.mxu0 0.0
    %863 = vmatpush1.msra.mxu0 0.0
    %864 = vmatprep.subr.mxu0 0.0
    %865 = vmatpush1.msra.mxu0 0.0
    %866 = vmatprep.subr.mxu0 0.0
    %867 = vmatpush1.msra.mxu0 0.0
    %868 = vmatprep.subr.mxu0 0.0
    %869 = vmatpush1.msra.mxu0 0.0
    %870 = vmatprep.subr.mxu0 0.0
    %871 = vmatpush1.msra.mxu0 0.0
    %872 = vmatprep.subr.mxu0 0.0
    %873 = vmatpush1.msra.mxu0 0.0
    %874 = vmatprep.subr.mxu0 0.0
    %875 = vmatpush1.msra.mxu0 0.0
    %876 = vmatprep.subr.mxu0 0.0
    %877 = vmatpush1.msra.mxu0 0.0
    %878 = vmatprep.subr.mxu0 0.0
    %879 = vmatpush1.msra.mxu0 0.0
    %880 = vmatprep.subr.mxu0 0.0
    %881 = vmatpush1.msra.mxu0 0.0
    %882 = vmatprep.subr.mxu0 0.0
    %883 = vmatpush1.msra.mxu0 0.0
    %884 = vmatprep.subr.mxu0 0.0
    %885 = vmatpush1.msra.mxu0 0.0
    %886 = vmatprep.subr.mxu0 0.0
    %887 = vmatpush1.msra.mxu0 0.0
    %888 = vmatprep.subr.mxu0 0.0
    %889 = vmatpush1.msra.mxu0 0.0
    %890 = vmatprep.subr.mxu0 0.0
    %891 = vmatpush1.msra.mxu0 0.0
    %892 = vmatprep.subr.mxu0 0.0
    %893 = vmatpush1.msra.mxu0 0.0
    %894 = vmatprep.subr.mxu0 0.0
    %895 = vmatpush1.msra.mxu0 0.0
    %896 = vmatprep.subr.mxu0 0.0
    %897 = vmatpush1.msra.mxu0 0.0
    %898 = vmatprep.subr.mxu0 0.0
    %899 = vmatpush1.msra.mxu0 0.0
    %900 = vmatprep.subr.mxu0 0.0
    %901 = vmatpush1.msra.mxu0 0.0
    %902 = vmatprep.mubr.f32.mxu0 0.0
    %903 = vmatmul.mubr.f32.gmra.mrb[0].mxu0 %v836
    %v904 = vpop.f32.mrb[0].mxu0
    %v905 = vadd.f32 0.0, %v904
    %v906 = vpop.f32.mrb[0].mxu0
    %907 = vdwg.mxu0
    %v908 = vadd.f32 %v835, %v905
    %v909 = vxor.u32 %v908, 2147483648
    %v910 = vmul.f32 %v909, 1.442695
    %v911 = vpow.pop %v910
    %v912 = vadd.f32 %v911, 1.0
    %v913 = vrcp.pop %v912
    %v914 = vmul.f32 1.0, %v913
    %v915 = vadd.f32 %v905, %v259
    %917 = vrot.lane.b32.xlu0 %v915, 64
    %v918 = vpop.permute.xlu0 %917
    %v920 = vmul.f32 %v914, %v918
    %922 = vrot.lane.b32.xlu0 %v920, 64
    %v923 = vpop.permute.xlu0 %922
    %v925 = vadd.f32 %v835, %v923
    %v926 = vtanh.pop %v925
    %v927 = vsub.f32 1.0, %v914
    %929 = vrot.lane.b32.xlu0 %v926, 96
    %v930 = vpop.permute.xlu0 %929
    %v932 = vmul.f32 %v927, %v930
    %v933 = vmul.f32 %v914, %v825
    %v934 = vadd.f32 %v932, %v933
    %936 = vrot.lane.b32.xlu0 %v934, 96
    %v937 = vpop.permute.xlu0 %936
    %939 = vst.msk [vmem:[#allocation2 + $0xe] sm:$0x3] %vm171, %v937
    %v940 = vld [vmem:[#allocation2] sm:$0xff]
    %v941 = vld [vmem:[#allocation2 + $0x8] sm:$0xff]
    %v942 = vld [vmem:[#allocation3 + $0x30] sm:$0xff]
    %v943 = vld [vmem:[#allocation3 + $0x38] sm:$0xff]
    %v944 = vld [vmem:[#allocation3 + $0x40] sm:$0xff]
    %v945 = vld [vmem:[#allocation3 + $0x48] sm:$0xff]
    %v946 = vld [vmem:[#allocation3 + $0x50] sm:$0xff]
    %v947 = vld [vmem:[#allocation3 + $0x58] sm:$0xff]
    %v948 = vld [vmem:[#allocation3 + $0x60] sm:$0xff]
    %v949 = vld [vmem:[#allocation3 + $0x68] sm:$0xff]
    %v950 = vld [vmem:[#allocation3 + $0x70] sm:$0x1]
    %v951 = vld [vmem:[#allocation3 + $0x71] sm:$0x1]
    %v952 = vlaneseq
    %v953 = vshrl.u32 %v952, 7
    %v954 = vsub.s32 0, %v953
    %v955 = vrot.slane %v950, %v954
    %v957 = vsel %vm177, %v940, 0
    %v960 = vsel %vm177, %v941, 0
    %962 = vmatprep.subr.mxu0 0.0
    %963 = vmatpush1.msra.mxu0 %v942
    %964 = vmatprep.subr.mxu0 0.0
    %965 = vmatpush1.msra.mxu0 %v943
    %966 = vmatprep.subr.mxu0 0.0
    %967 = vmatpush1.msra.mxu0 %v944
    %968 = vmatprep.subr.mxu0 0.0
    %969 = vmatpush1.msra.mxu0 %v945
    %970 = vmatprep.subr.mxu0 0.0
    %971 = vmatpush1.msra.mxu0 0.0
    %972 = vmatprep.subr.mxu0 0.0
    %973 = vmatpush1.msra.mxu0 0.0
    %974 = vmatprep.subr.mxu0 0.0
    %975 = vmatpush1.msra.mxu0 0.0
    %976 = vmatprep.subr.mxu0 0.0
    %977 = vmatpush1.msra.mxu0 0.0
    %978 = vmatprep.subr.mxu0 0.0
    %979 = vmatpush1.msra.mxu0 0.0
    %980 = vmatprep.subr.mxu0 0.0
    %981 = vmatpush1.msra.mxu0 0.0
    %982 = vmatprep.subr.mxu0 0.0
    %983 = vmatpush1.msra.mxu0 0.0
    %984 = vmatprep.subr.mxu0 0.0
    %985 = vmatpush1.msra.mxu0 0.0
    %986 = vmatprep.subr.mxu0 0.0
    %987 = vmatpush1.msra.mxu0 0.0
    %988 = vmatprep.subr.mxu0 0.0
    %989 = vmatpush1.msra.mxu0 0.0
    %990 = vmatprep.subr.mxu0 0.0
    %991 = vmatpush1.msra.mxu0 0.0
    %992 = vmatprep.subr.mxu0 0.0
    %993 = vmatpush1.msra.mxu0 0.0
    %994 = vmatprep.subr.mxu0 0.0
    %995 = vmatpush1.msra.mxu0 0.0
    %996 = vmatprep.subr.mxu0 0.0
    %997 = vmatpush1.msra.mxu0 0.0
    %998 = vmatprep.subr.mxu0 0.0
    %999 = vmatpush1.msra.mxu0 0.0
    %1000 = vmatprep.subr.mxu0 0.0
    %1001 = vmatpush1.msra.mxu0 0.0
    %1002 = vmatprep.subr.mxu0 0.0
    %1003 = vmatpush1.msra.mxu0 0.0
    %1004 = vmatprep.subr.mxu0 0.0
    %1005 = vmatpush1.msra.mxu0 0.0
    %1006 = vmatprep.subr.mxu0 0.0
    %1007 = vmatpush1.msra.mxu0 0.0
    %1008 = vmatprep.subr.mxu0 0.0
    %1009 = vmatpush1.msra.mxu0 0.0
    %1010 = vmatprep.subr.mxu0 0.0
    %1011 = vmatpush1.msra.mxu0 0.0
    %1012 = vmatprep.subr.mxu0 0.0
    %1013 = vmatpush1.msra.mxu0 0.0
    %1014 = vmatprep.subr.mxu0 0.0
    %1015 = vmatpush1.msra.mxu0 0.0
    %1016 = vmatprep.subr.mxu0 0.0
    %1017 = vmatpush1.msra.mxu0 0.0
    %1018 = vmatprep.subr.mxu0 0.0
    %1019 = vmatpush1.msra.mxu0 0.0
    %1020 = vmatprep.subr.mxu0 0.0
    %1021 = vmatpush1.msra.mxu0 0.0
    %1022 = vmatprep.subr.mxu0 0.0
    %1023 = vmatpush1.msra.mxu0 0.0
    %1024 = vmatprep.subr.mxu0 0.0
    %1025 = vmatpush1.msra.mxu0 0.0
    %1026 = vmatprep.mubr.f32.mxu0 0.0
    %1027 = vmatmul.mubr.f32.gmra.mrb[0].mxu0 %v957
    %v1028 = vpop.f32.mrb[0].mxu0
    %v1029 = vadd.f32 %v955, %v1028
    %v1030 = vpop.f32.mrb[0].mxu0
    %1031 = vmatprep.mubr.f32.mxu0 0.0
    %1032 = vmatmul.mubr.f32.gmra.mrb[0].mxu0 %v960
    %v1033 = vpop.f32.mrb[0].mxu0
    %v1034 = vadd.f32 %v955, %v1033
    %v1035 = vpop.f32.mrb[0].mxu0
    %1036 = vdwg.mxu0
    %v1037 = vxor.u32 %v1029, 2147483648
    %v1038 = vmul.f32 %v1037, 1.442695
    %v1039 = vpow.pop %v1038
    %v1040 = vadd.f32 %v1039, 1.0
    %v1041 = vrcp.pop %v1040
    %v1042 = vmul.f32 1.0, %v1041
    %v1043 = vlaneseq
    %v1044 = vshrl.u32 %v1043, 7
    %v1045 = vsub.s32 0, %v1044
    %v1046 = vrot.slane %v951, %v1045
    %v1047 = vmul.f32 %v1042, %v1046
    %1049 = vrot.lane.b32.xlu0 %v1047, 64
    %v1050 = vpop.permute.xlu0 %1049
    %v1052 = vadd.f32 %v1029, %v1050
    %v1053 = vtanh.pop %v1052
    %v1054 = vsub.f32 1.0, %v1042
    %1056 = vrot.lane.b32.xlu0 %v1053, 96
    %v1057 = vpop.permute.xlu0 %1056
    %v1059 = vmul.f32 %v1054, %v1057
    %1061 = vrot.lane.b32.xlu0 %v1059, 96
    %v1062 = vpop.permute.xlu0 %1061
    %1064 = vst.msk [vmem:[#allocation2] sm:$0x3] %vm171, %v1062
    %v1065 = vsel %vm177, %v1062, 0
    %1067 = vmatprep.subr.mxu0 0.0
    %1068 = vmatpush1.msra.mxu0 %v946
    %1069 = vmatprep.subr.mxu0 0.0
    %1070 = vmatpush1.msra.mxu0 %v947
    %1071 = vmatprep.subr.mxu0 0.0
    %1072 = vmatpush1.msra.mxu0 %v948
    %1073 = vmatprep.subr.mxu0 0.0
    %1074 = vmatpush1.msra.mxu0 %v949
    %1075 = vmatprep.subr.mxu0 0.0
    %1076 = vmatpush1.msra.mxu0 0.0
    %1077 = vmatprep.subr.mxu0 0.0
    %1078 = vmatpush1.msra.mxu0 0.0
    %1079 = vmatprep.subr.mxu0 0.0
    %1080 = vmatpush1.msra.mxu0 0.0
    %1081 = vmatprep.subr.mxu0 0.0
    %1082 = vmatpush1.msra.mxu0 0.0
    %1083 = vmatprep.subr.mxu0 0.0
    %1084 = vmatpush1.msra.mxu0 0.0
    %1085 = vmatprep.subr.mxu0 0.0
    %1086 = vmatpush1.msra.mxu0 0.0
    %1087 = vmatprep.subr.mxu0 0.0
    %1088 = vmatpush1.msra.mxu0 0.0
    %1089 = vmatprep.subr.mxu0 0.0
    %1090 = vmatpush1.msra.mxu0 0.0
    %1091 = vmatprep.subr.mxu0 0.0
    %1092 = vmatpush1.msra.mxu0 0.0
    %1093 = vmatprep.subr.mxu0 0.0
    %1094 = vmatpush1.msra.mxu0 0.0
    %1095 = vmatprep.subr.mxu0 0.0
    %1096 = vmatpush1.msra.mxu0 0.0
    %1097 = vmatprep.subr.mxu0 0.0
    %1098 = vmatpush1.msra.mxu0 0.0
    %1099 = vmatprep.subr.mxu0 0.0
    %1100 = vmatpush1.msra.mxu0 0.0
    %1101 = vmatprep.subr.mxu0 0.0
    %1102 = vmatpush1.msra.mxu0 0.0
    %1103 = vmatprep.subr.mxu0 0.0
    %1104 = vmatpush1.msra.mxu0 0.0
    %1105 = vmatprep.subr.mxu0 0.0
    %1106 = vmatpush1.msra.mxu0 0.0
    %1107 = vmatprep.subr.mxu0 0.0
    %1108 = vmatpush1.msra.mxu0 0.0
    %1109 = vmatprep.subr.mxu0 0.0
    %1110 = vmatpush1.msra.mxu0 0.0
    %1111 = vmatprep.subr.mxu0 0.0
    %1112 = vmatpush1.msra.mxu0 0.0
    %1113 = vmatprep.subr.mxu0 0.0
    %1114 = vmatpush1.msra.mxu0 0.0
    %1115 = vmatprep.subr.mxu0 0.0
    %1116 = vmatpush1.msra.mxu0 0.0
    %1117 = vmatprep.subr.mxu0 0.0
    %1118 = vmatpush1.msra.mxu0 0.0
    %1119 = vmatprep.subr.mxu0 0.0
    %1120 = vmatpush1.msra.mxu0 0.0
    %1121 = vmatprep.subr.mxu0 0.0
    %1122 = vmatpush1.msra.mxu0 0.0
    %1123 = vmatprep.subr.mxu0 0.0
    %1124 = vmatpush1.msra.mxu0 0.0
    %1125 = vmatprep.subr.mxu0 0.0
    %1126 = vmatpush1.msra.mxu0 0.0
    %1127 = vmatprep.subr.mxu0 0.0
    %1128 = vmatpush1.msra.mxu0 0.0
    %1129 = vmatprep.subr.mxu0 0.0
    %1130 = vmatpush1.msra.mxu0 0.0
    %1131 = vmatprep.mubr.f32.mxu0 0.0
    %1132 = vmatmul.mubr.f32.gmra.mrb[0].mxu0 %v1065
    %v1133 = vpop.f32.mrb[0].mxu0
    %v1134 = vadd.f32 0.0, %v1133
    %v1135 = vpop.f32.mrb[0].mxu0
    %1136 = vdwg.mxu0
    %v1138 = vrot.slane %v1134, 6
    %v1140 = vadd.f32 %v1029, %v1138
    %v1141 = vxor.u32 %v1140, 2147483648
    %v1142 = vmul.f32 %v1141, 1.442695
    %v1143 = vpow.pop %v1142
    %v1144 = vadd.f32 %v1143, 1.0
    %v1145 = vrcp.pop %v1144
    %v1146 = vmul.f32 1.0, %v1145
    %1148 = vrot.lane.b32.xlu0 %v1046, 64
    %v1149 = vpop.permute.xlu0 %1148
    %v1151 = vadd.f32 %v1134, %v1149
    %v1153 = vrot.slane %v1151, 6
    %1154 = vrot.lane.b32.xlu0 %v1153, 64
    %v1155 = vpop.permute.xlu0 %1154
    %v1157 = vmul.f32 %v1146, %v1155
    %1159 = vrot.lane.b32.xlu0 %v1157, 64
    %v1160 = vpop.permute.xlu0 %1159
    %v1162 = vadd.f32 %v1029, %v1160
    %v1163 = vtanh.pop %v1162
    %v1164 = vsub.f32 1.0, %v1146
    %1166 = vrot.lane.b32.xlu0 %v1163, 96
    %v1167 = vpop.permute.xlu0 %1166
    %v1169 = vmul.f32 %v1164, %v1167
    %v1170 = vrot.slane %v1059, 6
    %v1172 = vmul.f32 %v1146, %v1170
    %v1173 = vadd.f32 %v1169, %v1172
    %1175 = vrot.lane.b32.xlu0 %v1173, 96
    %v1176 = vpop.permute.xlu0 %1175
    %vm1178 = vcmask 257026
    %1179 = vst.msk [vmem:[#allocation2] sm:$0xc] %vm1178, %v1176
    %v1180 = vrot.slane %v1173, 2
    %1181 = vrot.lane.b32.xlu0 %v1180, 96
    %v1182 = vpop.permute.xlu0 %1181
    %v1183 = vsel %vm177, %v1182, 0
    %1185 = vmatprep.subr.mxu0 0.0
    %1186 = vmatpush1.msra.mxu0 %v946
    %1187 = vmatprep.subr.mxu0 0.0
    %1188 = vmatpush1.msra.mxu0 %v947
    %1189 = vmatprep.subr.mxu0 0.0
    %1190 = vmatpush1.msra.mxu0 %v948
    %1191 = vmatprep.subr.mxu0 0.0
    %1192 = vmatpush1.msra.mxu0 %v949
    %1193 = vmatprep.subr.mxu0 0.0
    %1194 = vmatpush1.msra.mxu0 0.0
    %1195 = vmatprep.subr.mxu0 0.0
    %1196 = vmatpush1.msra.mxu0 0.0
    %1197 = vmatprep.subr.mxu0 0.0
    %1198 = vmatpush1.msra.mxu0 0.0
    %1199 = vmatprep.subr.mxu0 0.0
    %1200 = vmatpush1.msra.mxu0 0.0
    %1201 = vmatprep.subr.mxu0 0.0
    %1202 = vmatpush1.msra.mxu0 0.0
    %1203 = vmatprep.subr.mxu0 0.0
    %1204 = vmatpush1.msra.mxu0 0.0
    %1205 = vmatprep.subr.mxu0 0.0
    %1206 = vmatpush1.msra.mxu0 0.0
    %1207 = vmatprep.subr.mxu0 0.0
    %1208 = vmatpush1.msra.mxu0 0.0
    %1209 = vmatprep.subr.mxu0 0.0
    %1210 = vmatpush1.msra.mxu0 0.0
    %1211 = vmatprep.subr.mxu0 0.0
    %1212 = vmatpush1.msra.mxu0 0.0
    %1213 = vmatprep.subr.mxu0 0.0
    %1214 = vmatpush1.msra.mxu0 0.0
    %1215 = vmatprep.subr.mxu0 0.0
    %1216 = vmatpush1.msra.mxu0 0.0
    %1217 = vmatprep.subr.mxu0 0.0
    %1218 = vmatpush1.msra.mxu0 0.0
    %1219 = vmatprep.subr.mxu0 0.0
    %1220 = vmatpush1.msra.mxu0 0.0
    %1221 = vmatprep.subr.mxu0 0.0
    %1222 = vmatpush1.msra.mxu0 0.0
    %1223 = vmatprep.subr.mxu0 0.0
    %1224 = vmatpush1.msra.mxu0 0.0
    %1225 = vmatprep.subr.mxu0 0.0
    %1226 = vmatpush1.msra.mxu0 0.0
    %1227 = vmatprep.subr.mxu0 0.0
    %1228 = vmatpush1.msra.mxu0 0.0
    %1229 = vmatprep.subr.mxu0 0.0
    %1230 = vmatpush1.msra.mxu0 0.0
    %1231 = vmatprep.subr.mxu0 0.0
    %1232 = vmatpush1.msra.mxu0 0.0
    %1233 = vmatprep.subr.mxu0 0.0
    %1234 = vmatpush1.msra.mxu0 0.0
    %1235 = vmatprep.subr.mxu0 0.0
    %1236 = vmatpush1.msra.mxu0 0.0
    %1237 = vmatprep.subr.mxu0 0.0
    %1238 = vmatpush1.msra.mxu0 0.0
    %1239 = vmatprep.subr.mxu0 0.0
    %1240 = vmatpush1.msra.mxu0 0.0
    %1241 = vmatprep.subr.mxu0 0.0
    %1242 = vmatpush1.msra.mxu0 0.0
    %1243 = vmatprep.subr.mxu0 0.0
    %1244 = vmatpush1.msra.mxu0 0.0
    %1245 = vmatprep.subr.mxu0 0.0
    %1246 = vmatpush1.msra.mxu0 0.0
    %1247 = vmatprep.subr.mxu0 0.0
    %1248 = vmatpush1.msra.mxu0 0.0
    %1249 = vmatprep.mubr.f32.mxu0 0.0
    %1250 = vmatmul.mubr.f32.gmra.mrb[0].mxu0 %v1183
    %v1251 = vpop.f32.mrb[0].mxu0
    %v1252 = vadd.f32 0.0, %v1251
    %v1253 = vpop.f32.mrb[0].mxu0
    %1254 = vdwg.mxu0
    %v1256 = vrot.slane %v1252, 4
    %v1258 = vadd.f32 %v1029, %v1256
    %v1259 = vxor.u32 %v1258, 2147483648
    %v1260 = vmul.f32 %v1259, 1.442695
    %v1261 = vpow.pop %v1260
    %v1262 = vadd.f32 %v1261, 1.0
    %v1263 = vrcp.pop %v1262
    %v1264 = vmul.f32 1.0, %v1263
    %v1265 = vadd.f32 %v1252, %v1149
    %v1267 = vrot.slane %v1265, 4
    %1268 = vrot.lane.b32.xlu0 %v1267, 64
    %v1269 = vpop.permute.xlu0 %1268
    %v1271 = vmul.f32 %v1264, %v1269
    %1273 = vrot.lane.b32.xlu0 %v1271, 64
    %v1274 = vpop.permute.xlu0 %1273
    %v1276 = vadd.f32 %v1029, %v1274
    %v1277 = vtanh.pop %v1276
    %v1278 = vsub.f32 1.0, %v1264
    %1280 = vrot.lane.b32.xlu0 %v1277, 96
    %v1281 = vpop.permute.xlu0 %1280
    %v1283 = vmul.f32 %v1278, %v1281
    %v1284 = vrot.slane %v1173, 6
    %v1286 = vmul.f32 %v1264, %v1284
    %v1287 = vadd.f32 %v1283, %v1286
    %1289 = vrot.lane.b32.xlu0 %v1287, 96
    %v1290 = vpop.permute.xlu0 %1289
    %vm1292 = vcmask 259076
    %1293 = vst.msk [vmem:[#allocation2] sm:$0x30] %vm1292, %v1290
    %v1294 = vrot.slane %v1287, 4
    %1295 = vrot.lane.b32.xlu0 %v1294, 96
    %v1296 = vpop.permute.xlu0 %1295
    %v1297 = vsel %vm177, %v1296, 0
    %1299 = vmatprep.subr.mxu0 0.0
    %1300 = vmatpush1.msra.mxu0 %v946
    %1301 = vmatprep.subr.mxu0 0.0
    %1302 = vmatpush1.msra.mxu0 %v947
    %1303 = vmatprep.subr.mxu0 0.0
    %1304 = vmatpush1.msra.mxu0 %v948
    %1305 = vmatprep.subr.mxu0 0.0
    %1306 = vmatpush1.msra.mxu0 %v949
    %1307 = vmatprep.subr.mxu0 0.0
    %1308 = vmatpush1.msra.mxu0 0.0
    %1309 = vmatprep.subr.mxu0 0.0
    %1310 = vmatpush1.msra.mxu0 0.0
    %1311 = vmatprep.subr.mxu0 0.0
    %1312 = vmatpush1.msra.mxu0 0.0
    %1313 = vmatprep.subr.mxu0 0.0
    %1314 = vmatpush1.msra.mxu0 0.0
    %1315 = vmatprep.subr.mxu0 0.0
    %1316 = vmatpush1.msra.mxu0 0.0
    %1317 = vmatprep.subr.mxu0 0.0
    %1318 = vmatpush1.msra.mxu0 0.0
    %1319 = vmatprep.subr.mxu0 0.0
    %1320 = vmatpush1.msra.mxu0 0.0
    %1321 = vmatprep.subr.mxu0 0.0
    %1322 = vmatpush1.msra.mxu0 0.0
    %1323 = vmatprep.subr.mxu0 0.0
    %1324 = vmatpush1.msra.mxu0 0.0
    %1325 = vmatprep.subr.mxu0 0.0
    %1326 = vmatpush1.msra.mxu0 0.0
    %1327 = vmatprep.subr.mxu0 0.0
    %1328 = vmatpush1.msra.mxu0 0.0
    %1329 = vmatprep.subr.mxu0 0.0
    %1330 = vmatpush1.msra.mxu0 0.0
    %1331 = vmatprep.subr.mxu0 0.0
    %1332 = vmatpush1.msra.mxu0 0.0
    %1333 = vmatprep.subr.mxu0 0.0
    %1334 = vmatpush1.msra.mxu0 0.0
    %1335 = vmatprep.subr.mxu0 0.0
    %1336 = vmatpush1.msra.mxu0 0.0
    %1337 = vmatprep.subr.mxu0 0.0
    %1338 = vmatpush1.msra.mxu0 0.0
    %1339 = vmatprep.subr.mxu0 0.0
    %1340 = vmatpush1.msra.mxu0 0.0
    %1341 = vmatprep.subr.mxu0 0.0
    %1342 = vmatpush1.msra.mxu0 0.0
    %1343 = vmatprep.subr.mxu0 0.0
    %1344 = vmatpush1.msra.mxu0 0.0
    %1345 = vmatprep.subr.mxu0 0.0
    %1346 = vmatpush1.msra.mxu0 0.0
    %1347 = vmatprep.subr.mxu0 0.0
    %1348 = vmatpush1.msra.mxu0 0.0
    %1349 = vmatprep.subr.mxu0 0.0
    %1350 = vmatpush1.msra.mxu0 0.0
    %1351 = vmatprep.subr.mxu0 0.0
    %1352 = vmatpush1.msra.mxu0 0.0
    %1353 = vmatprep.subr.mxu0 0.0
    %1354 = vmatpush1.msra.mxu0 0.0
    %1355 = vmatprep.subr.mxu0 0.0
    %1356 = vmatpush1.msra.mxu0 0.0
    %1357 = vmatprep.subr.mxu0 0.0
    %1358 = vmatpush1.msra.mxu0 0.0
    %1359 = vmatprep.subr.mxu0 0.0
    %1360 = vmatpush1.msra.mxu0 0.0
    %1361 = vmatprep.subr.mxu0 0.0
    %1362 = vmatpush1.msra.mxu0 0.0
    %1363 = vmatprep.mubr.f32.mxu0 0.0
    %1364 = vmatmul.mubr.f32.gmra.mrb[0].mxu0 %v1297
    %v1365 = vpop.f32.mrb[0].mxu0
    %v1366 = vadd.f32 0.0, %v1365
    %v1367 = vpop.f32.mrb[0].mxu0
    %1368 = vdwg.mxu0
    %v1370 = vrot.slane %v1366, 2
    %v1372 = vadd.f32 %v1029, %v1370
    %v1373 = vxor.u32 %v1372, 2147483648
    %v1374 = vmul.f32 %v1373, 1.442695
    %v1375 = vpow.pop %v1374
    %v1376 = vadd.f32 %v1375, 1.0
    %v1377 = vrcp.pop %v1376
    %v1378 = vmul.f32 1.0, %v1377
    %v1379 = vadd.f32 %v1366, %v1149
    %v1381 = vrot.slane %v1379, 2
    %1382 = vrot.lane.b32.xlu0 %v1381, 64
    %v1383 = vpop.permute.xlu0 %1382
    %v1385 = vmul.f32 %v1378, %v1383
    %1387 = vrot.lane.b32.xlu0 %v1385, 64
    %v1388 = vpop.permute.xlu0 %1387
    %v1390 = vadd.f32 %v1029, %v1388
    %v1391 = vtanh.pop %v1390
    %v1392 = vsub.f32 1.0, %v1378
    %1394 = vrot.lane.b32.xlu0 %v1391, 96
    %v1395 = vpop.permute.xlu0 %1394
    %v1397 = vmul.f32 %v1392, %v1395
    %v1398 = vrot.slane %v1287, 6
    %v1400 = vmul.f32 %v1378, %v1398
    %v1401 = vadd.f32 %v1397, %v1400
    %1403 = vrot.lane.b32.xlu0 %v1401, 96
    %v1404 = vpop.permute.xlu0 %1403
    %vm1406 = vcmask 261126
    %1407 = vst.msk [vmem:[#allocation2] sm:$0xc0] %vm1406, %v1404
    %v1408 = vrot.slane %v1401, 6
    %1409 = vrot.lane.b32.xlu0 %v1408, 96
    %v1410 = vpop.permute.xlu0 %1409
    %v1411 = vsel %vm177, %v1410, 0
    %1413 = vmatprep.subr.mxu0 0.0
    %1414 = vmatpush1.msra.mxu0 %v946
    %1415 = vmatprep.subr.mxu0 0.0
    %1416 = vmatpush1.msra.mxu0 %v947
    %1417 = vmatprep.subr.mxu0 0.0
    %1418 = vmatpush1.msra.mxu0 %v948
    %1419 = vmatprep.subr.mxu0 0.0
    %1420 = vmatpush1.msra.mxu0 %v949
    %1421 = vmatprep.subr.mxu0 0.0
    %1422 = vmatpush1.msra.mxu0 0.0
    %1423 = vmatprep.subr.mxu0 0.0
    %1424 = vmatpush1.msra.mxu0 0.0
    %1425 = vmatprep.subr.mxu0 0.0
    %1426 = vmatpush1.msra.mxu0 0.0
    %1427 = vmatprep.subr.mxu0 0.0
    %1428 = vmatpush1.msra.mxu0 0.0
    %1429 = vmatprep.subr.mxu0 0.0
    %1430 = vmatpush1.msra.mxu0 0.0
    %1431 = vmatprep.subr.mxu0 0.0
    %1432 = vmatpush1.msra.mxu0 0.0
    %1433 = vmatprep.subr.mxu0 0.0
    %1434 = vmatpush1.msra.mxu0 0.0
    %1435 = vmatprep.subr.mxu0 0.0
    %1436 = vmatpush1.msra.mxu0 0.0
    %1437 = vmatprep.subr.mxu0 0.0
    %1438 = vmatpush1.msra.mxu0 0.0
    %1439 = vmatprep.subr.mxu0 0.0
    %1440 = vmatpush1.msra.mxu0 0.0
    %1441 = vmatprep.subr.mxu0 0.0
    %1442 = vmatpush1.msra.mxu0 0.0
    %1443 = vmatprep.subr.mxu0 0.0
    %1444 = vmatpush1.msra.mxu0 0.0
    %1445 = vmatprep.subr.mxu0 0.0
    %1446 = vmatpush1.msra.mxu0 0.0
    %1447 = vmatprep.subr.mxu0 0.0
    %1448 = vmatpush1.msra.mxu0 0.0
    %1449 = vmatprep.subr.mxu0 0.0
    %1450 = vmatpush1.msra.mxu0 0.0
    %1451 = vmatprep.subr.mxu0 0.0
    %1452 = vmatpush1.msra.mxu0 0.0
    %1453 = vmatprep.subr.mxu0 0.0
    %1454 = vmatpush1.msra.mxu0 0.0
    %1455 = vmatprep.subr.mxu0 0.0
    %1456 = vmatpush1.msra.mxu0 0.0
    %1457 = vmatprep.subr.mxu0 0.0
    %1458 = vmatpush1.msra.mxu0 0.0
    %1459 = vmatprep.subr.mxu0 0.0
    %1460 = vmatpush1.msra.mxu0 0.0
    %1461 = vmatprep.subr.mxu0 0.0
    %1462 = vmatpush1.msra.mxu0 0.0
    %1463 = vmatprep.subr.mxu0 0.0
    %1464 = vmatpush1.msra.mxu0 0.0
    %1465 = vmatprep.subr.mxu0 0.0
    %1466 = vmatpush1.msra.mxu0 0.0
    %1467 = vmatprep.subr.mxu0 0.0
    %1468 = vmatpush1.msra.mxu0 0.0
    %1469 = vmatprep.subr.mxu0 0.0
    %1470 = vmatpush1.msra.mxu0 0.0
    %1471 = vmatprep.subr.mxu0 0.0
    %1472 = vmatpush1.msra.mxu0 0.0
    %1473 = vmatprep.subr.mxu0 0.0
    %1474 = vmatpush1.msra.mxu0 0.0
    %1475 = vmatprep.subr.mxu0 0.0
    %1476 = vmatpush1.msra.mxu0 0.0
    %1477 = vmatprep.mubr.f32.mxu0 0.0
    %1478 = vmatmul.mubr.f32.gmra.mrb[0].mxu0 %v1411
    %v1479 = vpop.f32.mrb[0].mxu0
    %v1480 = vadd.f32 0.0, %v1479
    %v1481 = vpop.f32.mrb[0].mxu0
    %1482 = vdwg.mxu0
    %v1483 = vadd.f32 %v1034, %v1480
    %v1484 = vxor.u32 %v1483, 2147483648
    %v1485 = vmul.f32 %v1484, 1.442695
    %v1486 = vpow.pop %v1485
    %v1487 = vadd.f32 %v1486, 1.0
    %v1488 = vrcp.pop %v1487
    %v1489 = vmul.f32 1.0, %v1488
    %v1490 = vadd.f32 %v1480, %v1149
    %1492 = vrot.lane.b32.xlu0 %v1490, 64
    %v1493 = vpop.permute.xlu0 %1492
    %v1495 = vmul.f32 %v1489, %v1493
    %1497 = vrot.lane.b32.xlu0 %v1495, 64
    %v1498 = vpop.permute.xlu0 %1497
    %v1500 = vadd.f32 %v1034, %v1498
    %v1501 = vtanh.pop %v1500
    %v1502 = vsub.f32 1.0, %v1489
    %1504 = vrot.lane.b32.xlu0 %v1501, 96
    %v1505 = vpop.permute.xlu0 %1504
    %v1507 = vmul.f32 %v1502, %v1505
    %v1509 = vmul.f32 %v1489, %v1408
    %v1510 = vadd.f32 %v1507, %v1509
    %1512 = vrot.lane.b32.xlu0 %v1510, 96
    %v1513 = vpop.permute.xlu0 %1512
    %1515 = vst.msk [vmem:[#allocation2 + $0x8] sm:$0x3] %vm171, %v1513
    %v1516 = vsel %vm177, %v1513, 0
    %1518 = vmatprep.subr.mxu0 0.0
    %1519 = vmatpush1.msra.mxu0 %v946
    %1520 = vmatprep.subr.mxu0 0.0
    %1521 = vmatpush1.msra.mxu0 %v947
    %1522 = vmatprep.subr.mxu0 0.0
    %1523 = vmatpush1.msra.mxu0 %v948
    %1524 = vmatprep.subr.mxu0 0.0
    %1525 = vmatpush1.msra.mxu0 %v949
    %1526 = vmatprep.subr.mxu0 0.0
    %1527 = vmatpush1.msra.mxu0 0.0
    %1528 = vmatprep.subr.mxu0 0.0
    %1529 = vmatpush1.msra.mxu0 0.0
    %1530 = vmatprep.subr.mxu0 0.0
    %1531 = vmatpush1.msra.mxu0 0.0
    %1532 = vmatprep.subr.mxu0 0.0
    %1533 = vmatpush1.msra.mxu0 0.0
    %1534 = vmatprep.subr.mxu0 0.0
    %1535 = vmatpush1.msra.mxu0 0.0
    %1536 = vmatprep.subr.mxu0 0.0
    %1537 = vmatpush1.msra.mxu0 0.0
    %1538 = vmatprep.subr.mxu0 0.0
    %1539 = vmatpush1.msra.mxu0 0.0
    %1540 = vmatprep.subr.mxu0 0.0
    %1541 = vmatpush1.msra.mxu0 0.0
    %1542 = vmatprep.subr.mxu0 0.0
    %1543 = vmatpush1.msra.mxu0 0.0
    %1544 = vmatprep.subr.mxu0 0.0
    %1545 = vmatpush1.msra.mxu0 0.0
    %1546 = vmatprep.subr.mxu0 0.0
    %1547 = vmatpush1.msra.mxu0 0.0
    %1548 = vmatprep.subr.mxu0 0.0
    %1549 = vmatpush1.msra.mxu0 0.0
    %1550 = vmatprep.subr.mxu0 0.0
    %1551 = vmatpush1.msra.mxu0 0.0
    %1552 = vmatprep.subr.mxu0 0.0
    %1553 = vmatpush1.msra.mxu0 0.0
    %1554 = vmatprep.subr.mxu0 0.0
    %1555 = vmatpush1.msra.mxu0 0.0
    %1556 = vmatprep.subr.mxu0 0.0
    %1557 = vmatpush1.msra.mxu0 0.0
    %1558 = vmatprep.subr.mxu0 0.0
    %1559 = vmatpush1.msra.mxu0 0.0
    %1560 = vmatprep.subr.mxu0 0.0
    %1561 = vmatpush1.msra.mxu0 0.0
    %1562 = vmatprep.subr.mxu0 0.0
    %1563 = vmatpush1.msra.mxu0 0.0
    %1564 = vmatprep.subr.mxu0 0.0
    %1565 = vmatpush1.msra.mxu0 0.0
    %1566 = vmatprep.subr.mxu0 0.0
    %1567 = vmatpush1.msra.mxu0 0.0
    %1568 = vmatprep.subr.mxu0 0.0
    %1569 = vmatpush1.msra.mxu0 0.0
    %1570 = vmatprep.subr.mxu0 0.0
    %1571 = vmatpush1.msra.mxu0 0.0
    %1572 = vmatprep.subr.mxu0 0.0
    %1573 = vmatpush1.msra.mxu0 0.0
    %1574 = vmatprep.subr.mxu0 0.0
    %1575 = vmatpush1.msra.mxu0 0.0
    %1576 = vmatprep.subr.mxu0 0.0
    %1577 = vmatpush1.msra.mxu0 0.0
    %1578 = vmatprep.subr.mxu0 0.0
    %1579 = vmatpush1.msra.mxu0 0.0
    %1580 = vmatprep.subr.mxu0 0.0
    %1581 = vmatpush1.msra.mxu0 0.0
    %1582 = vmatprep.mubr.f32.mxu0 0.0
    %1583 = vmatmul.mubr.f32.gmra.mrb[0].mxu0 %v1516
    %v1584 = vpop.f32.mrb[0].mxu0
    %v1585 = vadd.f32 0.0, %v1584
    %v1586 = vpop.f32.mrb[0].mxu0
    %1587 = vdwg.mxu0
    %v1589 = vrot.slane %v1585, 6
    %v1591 = vadd.f32 %v1034, %v1589
    %v1592 = vxor.u32 %v1591, 2147483648
    %v1593 = vmul.f32 %v1592, 1.442695
    %v1594 = vpow.pop %v1593
    %v1595 = vadd.f32 %v1594, 1.0
    %v1596 = vrcp.pop %v1595
    %v1597 = vmul.f32 1.0, %v1596
    %v1598 = vadd.f32 %v1585, %v1149
    %v1600 = vrot.slane %v1598, 6
    %1601 = vrot.lane.b32.xlu0 %v1600, 64
    %v1602 = vpop.permute.xlu0 %1601
    %v1604 = vmul.f32 %v1597, %v1602
    %1606 = vrot.lane.b32.xlu0 %v1604, 64
    %v1607 = vpop.permute.xlu0 %1606
    %v1609 = vadd.f32 %v1034, %v1607
    %v1610 = vtanh.pop %v1609
    %v1611 = vsub.f32 1.0, %v1597
    %1613 = vrot.lane.b32.xlu0 %v1610, 96
    %v1614 = vpop.permute.xlu0 %1613
    %v1616 = vmul.f32 %v1611, %v1614
    %v1617 = vrot.slane %v1510, 6
    %v1619 = vmul.f32 %v1597, %v1617
    %v1620 = vadd.f32 %v1616, %v1619
    %1622 = vrot.lane.b32.xlu0 %v1620, 96
    %v1623 = vpop.permute.xlu0 %1622
    %1625 = vst.msk [vmem:[#allocation2 + $0x8] sm:$0xc] %vm1178, %v1623
    %v1626 = vrot.slane %v1620, 2
    %1627 = vrot.lane.b32.xlu0 %v1626, 96
    %v1628 = vpop.permute.xlu0 %1627
    %v1629 = vsel %vm177, %v1628, 0
    %1631 = vmatprep.subr.mxu0 0.0
    %1632 = vmatpush1.msra.mxu0 %v946
    %1633 = vmatprep.subr.mxu0 0.0
    %1634 = vmatpush1.msra.mxu0 %v947
    %1635 = vmatprep.subr.mxu0 0.0
    %1636 = vmatpush1.msra.mxu0 %v948
    %1637 = vmatprep.subr.mxu0 0.0
    %1638 = vmatpush1.msra.mxu0 %v949
    %1639 = vmatprep.subr.mxu0 0.0
    %1640 = vmatpush1.msra.mxu0 0.0
    %1641 = vmatprep.subr.mxu0 0.0
    %1642 = vmatpush1.msra.mxu0 0.0
    %1643 = vmatprep.subr.mxu0 0.0
    %1644 = vmatpush1.msra.mxu0 0.0
    %1645 = vmatprep.subr.mxu0 0.0
    %1646 = vmatpush1.msra.mxu0 0.0
    %1647 = vmatprep.subr.mxu0 0.0
    %1648 = vmatpush1.msra.mxu0 0.0
    %1649 = vmatprep.subr.mxu0 0.0
    %1650 = vmatpush1.msra.mxu0 0.0
    %1651 = vmatprep.subr.mxu0 0.0
    %1652 = vmatpush1.msra.mxu0 0.0
    %1653 = vmatprep.subr.mxu0 0.0
    %1654 = vmatpush1.msra.mxu0 0.0
    %1655 = vmatprep.subr.mxu0 0.0
    %1656 = vmatpush1.msra.mxu0 0.0
    %1657 = vmatprep.subr.mxu0 0.0
    %1658 = vmatpush1.msra.mxu0 0.0
    %1659 = vmatprep.subr.mxu0 0.0
    %1660 = vmatpush1.msra.mxu0 0.0
    %1661 = vmatprep.subr.mxu0 0.0
    %1662 = vmatpush1.msra.mxu0 0.0
    %1663 = vmatprep.subr.mxu0 0.0
    %1664 = vmatpush1.msra.mxu0 0.0
    %1665 = vmatprep.subr.mxu0 0.0
    %1666 = vmatpush1.msra.mxu0 0.0
    %1667 = vmatprep.subr.mxu0 0.0
    %1668 = vmatpush1.msra.mxu0 0.0
    %1669 = vmatprep.subr.mxu0 0.0
    %1670 = vmatpush1.msra.mxu0 0.0
    %1671 = vmatprep.subr.mxu0 0.0
    %1672 = vmatpush1.msra.mxu0 0.0
    %1673 = vmatprep.subr.mxu0 0.0
    %1674 = vmatpush1.msra.mxu0 0.0
    %1675 = vmatprep.subr.mxu0 0.0
    %1676 = vmatpush1.msra.mxu0 0.0
    %1677 = vmatprep.subr.mxu0 0.0
    %1678 = vmatpush1.msra.mxu0 0.0
    %1679 = vmatprep.subr.mxu0 0.0
    %1680 = vmatpush1.msra.mxu0 0.0
    %1681 = vmatprep.subr.mxu0 0.0
    %1682 = vmatpush1.msra.mxu0 0.0
    %1683 = vmatprep.subr.mxu0 0.0
    %1684 = vmatpush1.msra.mxu0 0.0
    %1685 = vmatprep.subr.mxu0 0.0
    %1686 = vmatpush1.msra.mxu0 0.0
    %1687 = vmatprep.subr.mxu0 0.0
    %1688 = vmatpush1.msra.mxu0 0.0
    %1689 = vmatprep.subr.mxu0 0.0
    %1690 = vmatpush1.msra.mxu0 0.0
    %1691 = vmatprep.subr.mxu0 0.0
    %1692 = vmatpush1.msra.mxu0 0.0
    %1693 = vmatprep.subr.mxu0 0.0
    %1694 = vmatpush1.msra.mxu0 0.0
    %1695 = vmatprep.mubr.f32.mxu0 0.0
    %1696 = vmatmul.mubr.f32.gmra.mrb[0].mxu0 %v1629
    %v1697 = vpop.f32.mrb[0].mxu0
    %v1698 = vadd.f32 0.0, %v1697
    %v1699 = vpop.f32.mrb[0].mxu0
    %1700 = vdwg.mxu0
    %v1702 = vrot.slane %v1698, 4
    %v1704 = vadd.f32 %v1034, %v1702
    %v1705 = vxor.u32 %v1704, 2147483648
    %v1706 = vmul.f32 %v1705, 1.442695
    %v1707 = vpow.pop %v1706
    %v1708 = vadd.f32 %v1707, 1.0
    %v1709 = vrcp.pop %v1708
    %v1710 = vmul.f32 1.0, %v1709
    %v1711 = vadd.f32 %v1698, %v1149
    %v1713 = vrot.slane %v1711, 4
    %1714 = vrot.lane.b32.xlu0 %v1713, 64
    %v1715 = vpop.permute.xlu0 %1714
    %v1717 = vmul.f32 %v1710, %v1715
    %1719 = vrot.lane.b32.xlu0 %v1717, 64
    %v1720 = vpop.permute.xlu0 %1719
    %v1722 = vadd.f32 %v1034, %v1720
    %v1723 = vtanh.pop %v1722
    %v1724 = vsub.f32 1.0, %v1710
    %1726 = vrot.lane.b32.xlu0 %v1723, 96
    %v1727 = vpop.permute.xlu0 %1726
    %v1729 = vmul.f32 %v1724, %v1727
    %v1730 = vrot.slane %v1620, 6
    %v1732 = vmul.f32 %v1710, %v1730
    %v1733 = vadd.f32 %v1729, %v1732
    %1735 = vrot.lane.b32.xlu0 %v1733, 96
    %v1736 = vpop.permute.xlu0 %1735
    %1738 = vst.msk [vmem:[#allocation2 + $0x8] sm:$0x30] %vm1292, %v1736
    %v1739 = vrot.slane %v1733, 4
    %1740 = vrot.lane.b32.xlu0 %v1739, 96
    %v1741 = vpop.permute.xlu0 %1740
    %v1742 = vsel %vm177, %v1741, 0
    %1744 = vmatprep.subr.mxu0 0.0
    %1745 = vmatpush1.msra.mxu0 %v946
    %1746 = vmatprep.subr.mxu0 0.0
    %1747 = vmatpush1.msra.mxu0 %v947
    %1748 = vmatprep.subr.mxu0 0.0
    %1749 = vmatpush1.msra.mxu0 %v948
    %1750 = vmatprep.subr.mxu0 0.0
    %1751 = vmatpush1.msra.mxu0 %v949
    %1752 = vmatprep.subr.mxu0 0.0
    %1753 = vmatpush1.msra.mxu0 0.0
    %1754 = vmatprep.subr.mxu0 0.0
    %1755 = vmatpush1.msra.mxu0 0.0
    %1756 = vmatprep.subr.mxu0 0.0
    %1757 = vmatpush1.msra.mxu0 0.0
    %1758 = vmatprep.subr.mxu0 0.0
    %1759 = vmatpush1.msra.mxu0 0.0
    %1760 = vmatprep.subr.mxu0 0.0
    %1761 = vmatpush1.msra.mxu0 0.0
    %1762 = vmatprep.subr.mxu0 0.0
    %1763 = vmatpush1.msra.mxu0 0.0
    %1764 = vmatprep.subr.mxu0 0.0
    %1765 = vmatpush1.msra.mxu0 0.0
    %1766 = vmatprep.subr.mxu0 0.0
    %1767 = vmatpush1.msra.mxu0 0.0
    %1768 = vmatprep.subr.mxu0 0.0
    %1769 = vmatpush1.msra.mxu0 0.0
    %1770 = vmatprep.subr.mxu0 0.0
    %1771 = vmatpush1.msra.mxu0 0.0
    %1772 = vmatprep.subr.mxu0 0.0
    %1773 = vmatpush1.msra.mxu0 0.0
    %1774 = vmatprep.subr.mxu0 0.0
    %1775 = vmatpush1.msra.mxu0 0.0
    %1776 = vmatprep.subr.mxu0 0.0
    %1777 = vmatpush1.msra.mxu0 0.0
    %1778 = vmatprep.subr.mxu0 0.0
    %1779 = vmatpush1.msra.mxu0 0.0
    %1780 = vmatprep.subr.mxu0 0.0
    %1781 = vmatpush1.msra.mxu0 0.0
    %1782 = vmatprep.subr.mxu0 0.0
    %1783 = vmatpush1.msra.mxu0 0.0
    %1784 = vmatprep.subr.mxu0 0.0
    %1785 = vmatpush1.msra.mxu0 0.0
    %1786 = vmatprep.subr.mxu0 0.0
    %1787 = vmatpush1.msra.mxu0 0.0
    %1788 = vmatprep.subr.mxu0 0.0
    %1789 = vmatpush1.msra.mxu0 0.0
    %1790 = vmatprep.subr.mxu0 0.0
    %1791 = vmatpush1.msra.mxu0 0.0
    %1792 = vmatprep.subr.mxu0 0.0
    %1793 = vmatpush1.msra.mxu0 0.0
    %1794 = vmatprep.subr.mxu0 0.0
    %1795 = vmatpush1.msra.mxu0 0.0
    %1796 = vmatprep.subr.mxu0 0.0
    %1797 = vmatpush1.msra.mxu0 0.0
    %1798 = vmatprep.subr.mxu0 0.0
    %1799 = vmatpush1.msra.mxu0 0.0
    %1800 = vmatprep.subr.mxu0 0.0
    %1801 = vmatpush1.msra.mxu0 0.0
    %1802 = vmatprep.subr.mxu0 0.0
    %1803 = vmatpush1.msra.mxu0 0.0
    %1804 = vmatprep.subr.mxu0 0.0
    %1805 = vmatpush1.msra.mxu0 0.0
    %1806 = vmatprep.subr.mxu0 0.0
    %1807 = vmatpush1.msra.mxu0 0.0
    %1808 = vmatprep.mubr.f32.mxu0 0.0
    %1809 = vmatmul.mubr.f32.gmra.mrb[0].mxu0 %v1742
    %v1810 = vpop.f32.mrb[0].mxu0
    %v1811 = vadd.f32 0.0, %v1810
    %v1812 = vpop.f32.mrb[0].mxu0
    %1813 = vdwg.mxu0
    %v1815 = vrot.slane %v1811, 2
    %v1817 = vadd.f32 %v1034, %v1815
    %v1818 = vxor.u32 %v1817, 2147483648
    %v1819 = vmul.f32 %v1818, 1.442695
    %v1820 = vpow.pop %v1819
    %v1821 = vadd.f32 %v1820, 1.0
    %v1822 = vrcp.pop %v1821
    %v1823 = vmul.f32 1.0, %v1822
    %v1824 = vadd.f32 %v1811, %v1149
    %v1826 = vrot.slane %v1824, 2
    %1827 = vrot.lane.b32.xlu0 %v1826, 64
    %v1828 = vpop.permute.xlu0 %1827
    %v1830 = vmul.f32 %v1823, %v1828
    %1832 = vrot.lane.b32.xlu0 %v1830, 64
    %v1833 = vpop.permute.xlu0 %1832
    %v1835 = vadd.f32 %v1034, %v1833
    %v1836 = vtanh.pop %v1835
    %v1837 = vsub.f32 1.0, %v1823
    %1839 = vrot.lane.b32.xlu0 %v1836, 96
    %v1840 = vpop.permute.xlu0 %1839
    %v1842 = vmul.f32 %v1837, %v1840
    %v1843 = vrot.slane %v1733, 6
    %v1845 = vmul.f32 %v1823, %v1843
    %v1846 = vadd.f32 %v1842, %v1845
    %1848 = vrot.lane.b32.xlu0 %v1846, 96
    %v1849 = vpop.permute.xlu0 %1848
    %1851 = vst.msk [vmem:[#allocation2 + $0x8] sm:$0xc0] %vm1406, %v1849
    %v1852 = vld [vmem:[#allocation2] sm:$0xff]
    %v1853 = vld [vmem:[#allocation2 + $0x8] sm:$0xff]
    %v1854 = vld [vmem:[#allocation3 + $0x78] sm:$0xff]
    %v1855 = vld [vmem:[#allocation3 + $0x80] sm:$0xff]
    %v1856 = vld [vmem:[#allocation3 + $0x88] sm:$0xff]
    %v1857 = vld [vmem:[#allocation3 + $0x90] sm:$0xff]
    %v1858 = vld [vmem:[#allocation3 + $0x98] sm:$0x1]
    %v1859 = vld [vmem:[#allocation3 + $0x99] sm:$0x1]
    %v1860 = vld [vmem:[#allocation3 + $0x9a] sm:$0x1]
    %v1861 = vld [vmem:[#allocation3 + $0xa0] sm:$0xff]
    %v1862 = vld [vmem:[#allocation3 + $0xa8] sm:$0xff]
    %v1863 = vld [vmem:[#allocation3 + $0xb0] sm:$0xff]
    %v1864 = vld [vmem:[#allocation3 + $0xb8] sm:$0xff]
    %v1865 = vld [vmem:[#allocation3 + $0xc0] sm:$0xff]
    %v1866 = vld [vmem:[#allocation3 + $0xc8] sm:$0xff]
    %v1867 = vld [vmem:[#allocation3 + $0xd0] sm:$0xff]
    %v1868 = vld [vmem:[#allocation3 + $0xd8] sm:$0xff]
    %v1869 = vld [vmem:[#allocation3 + $0xe0] sm:$0x1]
    %v1870 = vlaneseq
    %v1871 = vshrl.u32 %v1870, 7
    %v1872 = vsub.s32 0, %v1871
    %v1873 = vrot.slane %v1858, %v1872
    %v1875 = vsel %vm177, %v1852, 0
    %v1878 = vsel %vm177, %v1853, 0
    %1880 = vmatprep.subr.mxu0 0.0
    %1881 = vmatpush1.msra.mxu0 %v1854
    %1882 = vmatprep.subr.mxu0 0.0
    %1883 = vmatpush1.msra.mxu0 %v1855
    %1884 = vmatprep.subr.mxu0 0.0
    %1885 = vmatpush1.msra.mxu0 %v1856
    %1886 = vmatprep.subr.mxu0 0.0
    %1887 = vmatpush1.msra.mxu0 %v1857
    %1888 = vmatprep.subr.mxu0 0.0
    %1889 = vmatpush1.msra.mxu0 0.0
    %1890 = vmatprep.subr.mxu0 0.0
    %1891 = vmatpush1.msra.mxu0 0.0
    %1892 = vmatprep.subr.mxu0 0.0
    %1893 = vmatpush1.msra.mxu0 0.0
    %1894 = vmatprep.subr.mxu0 0.0
    %1895 = vmatpush1.msra.mxu0 0.0
    %1896 = vmatprep.subr.mxu0 0.0
    %1897 = vmatpush1.msra.mxu0 0.0
    %1898 = vmatprep.subr.mxu0 0.0
    %1899 = vmatpush1.msra.mxu0 0.0
    %1900 = vmatprep.subr.mxu0 0.0
    %1901 = vmatpush1.msra.mxu0 0.0
    %1902 = vmatprep.subr.mxu0 0.0
    %1903 = vmatpush1.msra.mxu0 0.0
    %1904 = vmatprep.subr.mxu0 0.0
    %1905 = vmatpush1.msra.mxu0 0.0
    %1906 = vmatprep.subr.mxu0 0.0
    %1907 = vmatpush1.msra.mxu0 0.0
    %1908 = vmatprep.subr.mxu0 0.0
    %1909 = vmatpush1.msra.mxu0 0.0
    %1910 = vmatprep.subr.mxu0 0.0
    %1911 = vmatpush1.msra.mxu0 0.0
    %1912 = vmatprep.subr.mxu0 0.0
    %1913 = vmatpush1.msra.mxu0 0.0
    %1914 = vmatprep.subr.mxu0 0.0
    %1915 = vmatpush1.msra.mxu0 0.0
    %1916 = vmatprep.subr.mxu0 0.0
    %1917 = vmatpush1.msra.mxu0 0.0
    %1918 = vmatprep.subr.mxu0 0.0
    %1919 = vmatpush1.msra.mxu0 0.0
    %1920 = vmatprep.subr.mxu0 0.0
    %1921 = vmatpush1.msra.mxu0 0.0
    %1922 = vmatprep.subr.mxu0 0.0
    %1923 = vmatpush1.msra.mxu0 0.0
    %1924 = vmatprep.subr.mxu0 0.0
    %1925 = vmatpush1.msra.mxu0 0.0
    %1926 = vmatprep.subr.mxu0 0.0
    %1927 = vmatpush1.msra.mxu0 0.0
    %1928 = vmatprep.subr.mxu0 0.0
    %1929 = vmatpush1.msra.mxu0 0.0
    %1930 = vmatprep.subr.mxu0 0.0
    %1931 = vmatpush1.msra.mxu0 0.0
    %1932 = vmatprep.subr.mxu0 0.0
    %1933 = vmatpush1.msra.mxu0 0.0
    %1934 = vmatprep.subr.mxu0 0.0
    %1935 = vmatpush1.msra.mxu0 0.0
    %1936 = vmatprep.subr.mxu0 0.0
    %1937 = vmatpush1.msra.mxu0 0.0
    %1938 = vmatprep.subr.mxu0 0.0
    %1939 = vmatpush1.msra.mxu0 0.0
    %1940 = vmatprep.subr.mxu0 0.0
    %1941 = vmatpush1.msra.mxu0 0.0
    %1942 = vmatprep.subr.mxu0 0.0
    %1943 = vmatpush1.msra.mxu0 0.0
    %1944 = vmatprep.mubr.f32.mxu0 0.0
    %1945 = vmatmul.mubr.f32.gmra.mrb[0].mxu0 %v1875
    %v1946 = vpop.f32.mrb[0].mxu0
    %v1947 = vadd.f32 %v1873, %v1946
    %v1948 = vpop.f32.mrb[0].mxu0
    %1949 = vmatprep.mubr.f32.mxu0 0.0
    %1950 = vmatmul.mubr.f32.gmra.mrb[0].mxu0 %v1878
    %v1951 = vpop.f32.mrb[0].mxu0
    %v1952 = vadd.f32 %v1873, %v1951
    %v1953 = vpop.f32.mrb[0].mxu0
    %1954 = vdwg.mxu0
    %vm1955 = vcmask 523264
    %v1956 = vsel %vm1955, %v1947, 0.0
    %1957 = vadd.xlane.f32.xlu0 %v1956
    %v1958 = vpop.xlane.xlu0 %1957
    %v1959 = vsel %vm1955, %v1952, 0.0
    %1960 = vadd.xlane.f32.xlu0 %v1959
    %v1961 = vpop.xlane.xlu0 %1960
    %v1962 = vrcp.pop 64.0
    %v1963 = vmul.f32 %v1958, %v1962
    %v1964 = vmul.f32 %v1961, %v1962
    %v1965 = vsub.f32 %v1947, %v1963
    %v1966 = vsub.f32 %v1952, %v1964
    %v1967 = vmul.f32 %v1965, %v1965
    %v1968 = vmul.f32 %v1966, %v1966
    %v1969 = vsel %vm1955, %v1967, 0.0
    %1970 = vadd.xlane.f32.xlu0 %v1969
    %v1971 = vpop.xlane.xlu0 %1970
    %v1972 = vsel %vm1955, %v1968, 0.0
    %1973 = vadd.xlane.f32.xlu0 %v1972
    %v1974 = vpop.xlane.xlu0 %1973
    %v1975 = vmul.f32 %v1971, %v1962
    %v1976 = vmul.f32 %v1974, %v1962
    %v1977 = vadd.f32 %v1975, 1e-05
    %v1978 = vadd.f32 %v1976, 1e-05
    %v1979 = vrsqrt.pop %v1977
    %v1980 = vrsqrt.pop %v1978
    %v1981 = vmul.f32 %v1965, %v1979
    %v1982 = vmul.f32 %v1966, %v1980
    %v1983 = vlaneseq
    %v1984 = vshrl.u32 %v1983, 7
    %v1985 = vsub.s32 0, %v1984
    %v1986 = vrot.slane %v1859, %v1985
    %v1987 = vmul.f32 %v1981, %v1986
    %v1988 = vmul.f32 %v1982, %v1986
    %v1989 = vlaneseq
    %v1990 = vshrl.u32 %v1989, 7
    %v1991 = vsub.s32 0, %v1990
    %v1992 = vrot.slane %v1860, %v1991
    %v1993 = vadd.f32 %v1987, %v1992
    %v1994 = vadd.f32 %v1988, %v1992
    %v1995 = vmax.f32 %v1993, 0.0
    %v1996 = vmax.f32 %v1994, 0.0
    %v1997 = vlaneseq
    %v1998 = vshrl.u32 %v1997, 7
    %v1999 = vsub.s32 0, %v1998
    %v2000 = vrot.slane %v1869, %v1999
    %v2002 = vsel %vm1955, %v1995, 0
    %v2005 = vsel %vm1955, %v1996, 0
    %2007 = vmatprep.subr.mxu0 0.0
    %2008 = vmatpush1.msra.mxu0 %v1861
    %2009 = vmatprep.subr.mxu0 0.0
    %2010 = vmatpush1.msra.mxu0 %v1862
    %2011 = vmatprep.subr.mxu0 0.0
    %2012 = vmatpush1.msra.mxu0 %v1863
    %2013 = vmatprep.subr.mxu0 0.0
    %2014 = vmatpush1.msra.mxu0 %v1864
    %2015 = vmatprep.subr.mxu0 0.0
    %2016 = vmatpush1.msra.mxu0 %v1865
    %2017 = vmatprep.subr.mxu0 0.0
    %2018 = vmatpush1.msra.mxu0 %v1866
    %2019 = vmatprep.subr.mxu0 0.0
    %2020 = vmatpush1.msra.mxu0 %v1867
    %2021 = vmatprep.subr.mxu0 0.0
    %2022 = vmatpush1.msra.mxu0 %v1868
    %2023 = vmatprep.subr.mxu0 0.0
    %2024 = vmatpush1.msra.mxu0 0.0
    %2025 = vmatprep.subr.mxu0 0.0
    %2026 = vmatpush1.msra.mxu0 0.0
    %2027 = vmatprep.subr.mxu0 0.0
    %2028 = vmatpush1.msra.mxu0 0.0
    %2029 = vmatprep.subr.mxu0 0.0
    %2030 = vmatpush1.msra.mxu0 0.0
    %2031 = vmatprep.subr.mxu0 0.0
    %2032 = vmatpush1.msra.mxu0 0.0
    %2033 = vmatprep.subr.mxu0 0.0
    %2034 = vmatpush1.msra.mxu0 0.0
    %2035 = vmatprep.subr.mxu0 0.0
    %2036 = vmatpush1.msra.mxu0 0.0
    %2037 = vmatprep.subr.mxu0 0.0
    %2038 = vmatpush1.msra.mxu0 0.0
    %2039 = vmatprep.subr.mxu0 0.0
    %2040 = vmatpush1.msra.mxu0 0.0
    %2041 = vmatprep.subr.mxu0 0.0
    %2042 = vmatpush1.msra.mxu0 0.0
    %2043 = vmatprep.subr.mxu0 0.0
    %2044 = vmatpush1.msra.mxu0 0.0
    %2045 = vmatprep.subr.mxu0 0.0
    %2046 = vmatpush1.msra.mxu0 0.0
    %2047 = vmatprep.subr.mxu0 0.0
    %2048 = vmatpush1.msra.mxu0 0.0
    %2049 = vmatprep.subr.mxu0 0.0
    %2050 = vmatpush1.msra.mxu0 0.0
    %2051 = vmatprep.subr.mxu0 0.0
    %2052 = vmatpush1.msra.mxu0 0.0
    %2053 = vmatprep.subr.mxu0 0.0
    %2054 = vmatpush1.msra.mxu0 0.0
    %2055 = vmatprep.subr.mxu0 0.0
    %2056 = vmatpush1.msra.mxu0 0.0
    %2057 = vmatprep.subr.mxu0 0.0
    %2058 = vmatpush1.msra.mxu0 0.0
    %2059 = vmatprep.subr.mxu0 0.0
    %2060 = vmatpush1.msra.mxu0 0.0
    %2061 = vmatprep.subr.mxu0 0.0
    %2062 = vmatpush1.msra.mxu0 0.0
    %2063 = vmatprep.subr.mxu0 0.0
    %2064 = vmatpush1.msra.mxu0 0.0
    %2065 = vmatprep.subr.mxu0 0.0
    %2066 = vmatpush1.msra.mxu0 0.0
    %2067 = vmatprep.subr.mxu0 0.0
    %2068 = vmatpush1.msra.mxu0 0.0
    %2069 = vmatprep.subr.mxu0 0.0
    %2070 = vmatpush1.msra.mxu0 0.0
    %2071 = vmatprep.mubr.f32.mxu0 0.0
    %2072 = vmatmul.mubr.f32.gmra.mrb[0].mxu0 %v2002
    %v2073 = vpop.f32.mrb[0].mxu0
    %v2074 = vadd.f32 %v2000, %v2073
    %v2075 = vpop.f32.mrb[0].mxu0
    %2076 = vmatprep.mubr.f32.mxu0 0.0
    %2077 = vmatmul.mubr.f32.gmra.mrb[0].mxu0 %v2005
    %v2078 = vpop.f32.mrb[0].mxu0
    %v2079 = vadd.f32 %v2000, %v2078
    %v2080 = vpop.f32.mrb[0].mxu0
    %2081 = vdwg.mxu0
    %v2082 = vtanh.pop %v2074
    %v2083 = vtanh.pop %v2079
    %v2085 = vrot.slane %v2082, 1
    %v2087 = vrot.slane %v2082, 2
    %v2089 = vrot.slane %v2082, 3
    %v2092 = vrot.slane %v2083, 4
    %v2094 = vrot.slane %v2083, 5
    %v2096 = vrot.slane %v2083, 6
    %v2098 = vrot.slane %v2083, 7
    %v2100 = vsel %vm142, %v2082, %v2085
    %vm2101 = vcmask 1041408
    %v2102 = vsel %vm2101, %v2100, %v2087
    %vm2103 = vcmask 1042432
    %v2104 = vsel %vm2103, %v2102, %v2089
    %vm2105 = vcmask 1043456
    %v2106 = vsel %vm2105, %v2104, %v2092
    %vm2107 = vcmask 1044480
    %v2108 = vsel %vm2107, %v2106, %v2094
    %vm2109 = vcmask 1045504
    %v2110 = vsel %vm2109, %v2108, %v2096
    %vm2111 = vcmask 1046528
    %v2112 = vsel %vm2111, %v2110, %v2098
    %vm2113 = vcmask 23552
    %2114 = vst.msk [vmem:[%s3] sm:$0xff] %vm2113, %v2112
    %v2115 = vrot.slane %v2082, 4
    %v2117 = vsel %vm142, %v2085, %v2087
    %v2118 = vsel %vm2101, %v2117, %v2089
    %v2119 = vsel %vm2103, %v2118, %v2115
    %v2120 = vsel %vm2105, %v2119, %v2094
    %v2121 = vsel %vm2107, %v2120, %v2096
    %v2122 = vsel %vm2109, %v2121, %v2098
    %v2123 = vsel %vm2111, %v2122, %v2083
    %s2124 = scalar_lea.vmem %s3, 8
    %2125 = vst.msk [vmem:[%s2124] sm:$0xff] %vm2113, %v2123
    // Predicated region
    $region18: #{tpu_custom_call.1} parent=1 // pred_check
      _
    $region19: #{tpu_custom_call.1} parent=1 // pred_check_branch
      %2127 = sbr.rel (0) target = $region21
    $region20: #{tpu_custom_call.1} parent=1 // pred_region
      _
    $region21: #{tpu_custom_call.1} parent=1 // pred_fallthru
      _
    // Predicated region
    $region22: #{tpu_custom_call.1} parent=1 // pred_check
      _
    $region23: #{tpu_custom_call.1} parent=1 // pred_check_branch
      %2129 = sbr.rel (0) target = $region25
    $region24: #{tpu_custom_call.1} parent=1 // pred_region
      _
    $region25: #{tpu_custom_call.1} parent=1 // pred_fallthru
      _
    %2130 = vsyncpa [#allocation4], 1

</llo_original>
